<compile_context>
chip_gen: v7x
topology: tpu7x:2x2x1
jax: 0.10.0
libtpu: 0.0.40
codegen_flags: <defaults>
</compile_context>

<pallas_src>
import functools

import jax
import jax.numpy as jnp
from jax.experimental import pallas as pl
from jax.experimental.pallas import tpu as pltpu

# ----- hyperparameters implied by CBViT.__init__ -----
IMAGE_SIZE = 28
PATCH = 4
CHANNELS = 2
DIM = 64
DEPTH = 6
HEADS = 8
DIM_HEAD = 64                       # lucidrains ViT default
INNER = HEADS * DIM_HEAD            # 512
MLP_DIM = 128
NUM_PATCHES = (IMAGE_SIZE // PATCH) ** 2   # 49
SEQ = NUM_PATCHES + 1                      # 50 (cls token prepended)
SEQ_P = 64                                 # sequence padded to a bf16-friendly sublane multiple
PAIR_LANES = 2 * DIM_HEAD                  # 128: two heads' key axes packed into one lane-dense slab
PATCH_DIM = CHANNELS * PATCH * PATCH       # 32
SCALE = DIM_HEAD ** -0.5
LN_EPS = 1e-5
FC_HID = 16


def _layernorm(x, g, b):
    mu = jnp.mean(x, axis=-1, keepdims=True)
    var = jnp.mean((x - mu) ** 2, axis=-1, keepdims=True)
    return (x - mu) * jax.lax.rsqrt(var + LN_EPS) * g + b


def _gelu(x):
    # TODO(synk): PyTorch nn.GELU defaults to the exact erf GELU; tanh approximation used here.
    c = 0.7978845608028654  # sqrt(2/pi)
    return 0.5 * x * (1.0 + jnp.tanh(c * (x + 0.044715 * x * x * x)))


def _mmf32(a, b):
    return jnp.dot(a, b, preferred_element_type=jnp.float32)


def cbvit_kernel(bt,
                 patches_ref, pe_w_ref, emb_ref,
                 ln1_g_ref, ln1_b_ref, wq_ref, wk_ref, wv_ref, wo_ref, ob_ref,
                 ln2_g_ref, ln2_b_ref, ff1_w_ref, ff1_b_ref, ff2_w_ref, ff2_b_ref,
                 fc1_w_ref, fc1_b_ref, fc2_w_ref, fc2_b_ref,
                 score_ref, attn_ref,
                 x_scr):
    l = pl.program_id(1)          # layer index (inner, "arbitrary" grid axis)
    m = bt * SEQ_P                # batch folded into the matmul M dimension

    # masks for the padded sequence rows/keys (rows/keys >= SEQ are padding)
    key_ids = jax.lax.broadcasted_iota(jnp.int32, (1, 1, SEQ_P), 2)
    key_mask = jnp.where(key_ids < SEQ, 0.0, -1e9).astype(jnp.float32)   # (1, 1, SEQ_P)
    row_ids = jax.lax.broadcasted_iota(jnp.int32, (1, SEQ_P, 1), 1)
    row_mask = (row_ids < SEQ).astype(jnp.float32)                       # (1, SEQ_P, 1)

    # ---- l == 0: patch embedding into the persistent residual-stream scratch ----
    # (cls token + positional embedding + patch bias are folded into the emb table)
    @pl.when(l == 0)
    def _():
        p2 = patches_ref[...].reshape(m, PATCH_DIM)                      # bf16 (row 0 / pad rows = 0)
        tok = _mmf32(p2, pe_w_ref[...]).reshape(bt, SEQ_P, DIM)          # f32
        x_scr[...] = (tok + emb_ref[...]).reshape(m, DIM)                # (m, 64) f32 residual stream

    x = x_scr[...]

    # ---- multi-head self-attention (pre-norm), fused QKV / out projections ----
    h = _layernorm(x, ln1_g_ref[0], ln1_b_ref[0]).astype(jnp.bfloat16)
    # one (m,64)@(64,512) matmul per projection (softmax scale folded into Wq)
    q = _mmf32(h, wq_ref[0]).astype(jnp.bfloat16).reshape(bt, SEQ_P, INNER)
    k = _mmf32(h, wk_ref[0]).astype(jnp.bfloat16).reshape(bt, SEQ_P, INNER)
    v = _mmf32(h, wv_ref[0]).astype(jnp.bfloat16).reshape(bt, SEQ_P, INNER)

    o_heads = []
    for p in range(HEADS // 2):
        pair_maps = []
        for hh in (2 * p, 2 * p + 1):
            lo = hh * DIM_HEAD
            qh = q[:, :, lo:lo + DIM_HEAD]
            kh = k[:, :, lo:lo + DIM_HEAD]
            vh = v[:, :, lo:lo + DIM_HEAD]
            s = jnp.einsum('bqd,bkd->bqk', qh, kh,
                           preferred_element_type=jnp.float32) + key_mask          # (bt, S, S)
            s = s - jnp.max(s, axis=-1, keepdims=True)
            e = jnp.exp(s)
            attn_bf = (e * pl.reciprocal(jnp.sum(e, axis=-1, keepdims=True),
                                         approx=True)).astype(jnp.bfloat16)
            pair_maps.append(attn_bf)
            o_heads.append(jnp.einsum('bqk,bkd->bqd', attn_bf, vh,
                                      preferred_element_type=jnp.float32)
                           .astype(jnp.bfloat16))
        # two heads packed per 128-lane slab -> full-lane, deterministic bf16 store
        attn_ref[:, 0, p, :, :] = jnp.concatenate(pair_maps, axis=-1)

    # single fused out-projection: (m, 512) @ (512, 64)
    o = jnp.concatenate(o_heads, axis=-1).reshape(m, INNER)
    x = x + _mmf32(o, wo_ref[0]) + ob_ref[0]

    # ---- feed-forward (pre-norm) ----
    h2 = _layernorm(x, ln2_g_ref[0], ln2_b_ref[0])
    f1 = _mmf32(h2.astype(jnp.bfloat16), ff1_w_ref[0]) + ff1_b_ref[0]
    x = x + _mmf32(_gelu(f1).astype(jnp.bfloat16), ff2_w_ref[0]) + ff2_b_ref[0]
    x_scr[...] = x

    # ---- last layer: pool='mean' over the SEQ real tokens, mlp_head=Identity, fc + sigmoid ----
    @pl.when(l == DEPTH - 1)
    def _():
        x3 = x.reshape(bt, SEQ_P, DIM)
        pooled = jnp.sum(x3 * row_mask, axis=1) * (1.0 / SEQ)            # (bt, 64)
        f = jnp.maximum(_mmf32(pooled, fc1_w_ref[...]) + fc1_b_ref[...], 0.0)
        logit = _mmf32(f, fc2_w_ref[...]) + fc2_b_ref[...]               # (bt, 1)
        score_ref[...] = jax.nn.sigmoid(logit).reshape(bt, 1, 1)


def init_params(key):
    ks = jax.random.split(key, 10)
    s = 0.02
    nrm = lambda k, shape: jax.random.normal(k, shape, jnp.float32) * s
    zeros = lambda shape: jnp.zeros(shape, jnp.float32)
    ones = lambda shape: jnp.ones(shape, jnp.float32)
    return {
        "patch_w": nrm(ks[0], (PATCH_DIM, DIM)),
        "patch_b": zeros((1, DIM)),
        "cls":     nrm(ks[1], (1, DIM)),
        "pos":     nrm(ks[2], (SEQ, DIM)),
        "ln1_g":   ones((DEPTH, 1, DIM)),
        "ln1_b":   zeros((DEPTH, 1, DIM)),
        "qkv_w":   nrm(ks[3], (DEPTH, DIM, 3 * INNER)),
        "out_w":   nrm(ks[4], (DEPTH, INNER, DIM)),
        "out_b":   zeros((DEPTH, 1, DIM)),
        "ln2_g":   ones((DEPTH, 1, DIM)),
        "ln2_b":   zeros((DEPTH, 1, DIM)),
        "ff1_w":   nrm(ks[5], (DEPTH, DIM, MLP_DIM)),
        "ff1_b":   zeros((DEPTH, 1, MLP_DIM)),
        "ff2_w":   nrm(ks[6], (DEPTH, MLP_DIM, DIM)),
        "ff2_b":   zeros((DEPTH, 1, DIM)),
        "fc1_w":   nrm(ks[7], (DIM, FC_HID)),
        "fc1_b":   zeros((1, FC_HID)),
        "fc2_w":   nrm(ks[8], (FC_HID, 1)),
        "fc2_b":   zeros((1, 1)),
    }


def _prep_weights(params):
    """Wrapper-side weight reorganization: fused-projection layouts + bf16 matmul operands.

    bf16 operands / bf16 attention maps / the tanh GELU introduce ~1e-2-level deviations vs an
    f32 PyTorch reference; accumulation, residual stream and outputs stay f32.
    """
    bf = jnp.bfloat16
    qkv = params["qkv_w"]                                     # (DEPTH, DIM, 3*INNER), inner = (h, d)
    wq = (qkv[:, :, 0 * INNER:1 * INNER] * SCALE).astype(bf)  # softmax scale folded into Wq
    wk = qkv[:, :, 1 * INNER:2 * INNER].astype(bf)
    wv = qkv[:, :, 2 * INNER:3 * INNER].astype(bf)
    wo = params["out_w"].astype(bf)                           # (DEPTH, INNER, DIM), inner = (h, d)

    # cls token, positional embedding and patch-embed bias folded into one additive table;
    # row 0 = cls slot, rows >= SEQ (padding) stay zero.
    emb = jnp.zeros((SEQ_P, DIM), jnp.float32)
    emb = emb.at[0].set(params["cls"][0] + params["pos"][0])
    emb = emb.at[1:SEQ].set(params["pos"][1:SEQ] + params["patch_b"][0])

    weights = [
        params["patch_w"].astype(bf), emb,
        params["ln1_g"], params["ln1_b"], wq, wk, wv, wo, params["out_b"],
        params["ln2_g"], params["ln2_b"],
        params["ff1_w"].astype(bf), params["ff1_b"],
        params["ff2_w"].astype(bf), params["ff2_b"],
        params["fc1_w"], params["fc1_b"], params["fc2_w"], params["fc2_b"],
    ]
    # which entries carry a leading DEPTH axis (blocked on the l grid axis)
    is_layer = [False, False,
                True, True, True, True, True, True, True,
                True, True,
                True, True,
                True, True,
                False, False, False, False]
    return weights, is_layer


def _pick_bt(B):
    # keep >= 2 steps on the "parallel" batch axis when possible (both v7x TensorCores get work),
    # cap the tile at 8 images so the per-step working set stays a few MiB (v7x: 64 MiB VMEM).
    for d in (8, 4, 2, 1):
        if B % d == 0 and B // d >= 2:
            return d
    return 1


def cbvit_forward(x, params):
    B = x.shape[0]
    # NCHW image -> patch tokens: 'b c (h p1) (w p2) -> b (h w) (p1 p2 c)'
    xb = x.reshape(B, CHANNELS, IMAGE_SIZE // PATCH, PATCH, IMAGE_SIZE // PATCH, PATCH)
    xb = xb.transpose(0, 2, 4, 3, 5, 1)
    patches = xb.reshape(B, NUM_PATCHES, PATCH_DIM).astype(jnp.float32)

    # pad the token axis: row 0 = cls slot (zero patch -> emb table supplies cls+pos),
    # rows >= SEQ are sequence padding (masked inside the kernel).
    patches_p = jnp.zeros((B, SEQ_P, PATCH_DIM), jnp.float32)
    patches_p = patches_p.at[:, 1:SEQ, :].set(patches).astype(jnp.bfloat16)

    weights, is_layer = _prep_weights(params)

    bt = _pick_bt(B)
    grid = (B // bt, DEPTH)     # (parallel batch tiles, arbitrary depth)

    def layer_spec(arr):
        nd = arr.ndim
        return pl.BlockSpec((1,) + arr.shape[1:],
                            lambda b, l, _nd=nd: (l,) + (0,) * (_nd - 1))

    def const_spec(arr):
        nd = arr.ndim
        return pl.BlockSpec(arr.shape, lambda b, l, _nd=nd: (0,) * _nd)

    in_specs = [pl.BlockSpec((bt, SEQ_P, PATCH_DIM), lambda b, l: (b, 0, 0))]
    in_specs += [layer_spec(w) if flag else const_spec(w)
                 for w, flag in zip(weights, is_layer)]

    out_shape = (
        jax.ShapeDtypeStruct((B, 1, 1), jnp.float32),
        # bf16, lane-dense, two heads packed per 128-lane slab; unpacked below
        jax.ShapeDtypeStruct((B, DEPTH, HEADS // 2, SEQ_P, PAIR_LANES), jnp.bfloat16),
    )
    out_specs = (
        pl.BlockSpec((bt, 1, 1), lambda b, l: (b, 0, 0)),
        pl.BlockSpec((bt, 1, HEADS // 2, SEQ_P, PAIR_LANES), lambda b, l: (b, l, 0, 0, 0)),
    )

    y, attn_pairs = pl.pallas_call(
        functools.partial(cbvit_kernel, bt),
        out_shape=out_shape,
        grid_spec=pltpu.PrefetchScalarGridSpec(
            num_scalar_prefetch=0,
            grid=grid,
            in_specs=in_specs,
            out_specs=out_specs,
            scratch_shapes=[pltpu.VMEM((bt * SEQ_P, DIM), jnp.float32)],  # persistent residual stream
        ),
        compiler_params=pltpu.CompilerParams(
            dimension_semantics=("parallel", "arbitrary"),
            vmem_limit_bytes=32 << 20,   # per-step working set is a few MiB; safe on v7x's 64 MiB VMEM
        ),
    )(patches_p, *weights)

    # unpack (B, DEPTH, H/2, S, 2*Dh) -> (B, DEPTH, H, S, S_keys), strip padding, back to f32
    a = attn_pairs.reshape(B, DEPTH, HEADS // 2, SEQ_P, 2, DIM_HEAD)
    a = a.transpose(0, 1, 2, 4, 3, 5).reshape(B, DEPTH, HEADS, SEQ_P, DIM_HEAD)
    attns = a[:, :, :, :SEQ, :SEQ].astype(jnp.float32)
    return y.reshape(B, 1), attns           # (B, 1) sigmoid output, (B, DEPTH, HEADS, SEQ, SEQ)


if __name__ == "__main__":
    key = jax.random.PRNGKey(0)
    pkey, xkey = jax.random.split(key)
    params = init_params(pkey)
    # image_size=28, channels=2 as implied by the module; batch=2
    x = jax.random.normal(xkey, (2, CHANNELS, IMAGE_SIZE, IMAGE_SIZE), jnp.float32)

    fwd = jax.jit(cbvit_forward)
    y, attns = fwd(x, params)
    jax.block_until_ready((y, attns))

    assert y.shape == (2, 1)
    assert attns.shape == (2, DEPTH, HEADS, SEQ, SEQ)
    assert bool(jnp.all((y > 0.0) & (y < 1.0)))
    # attention rows (over the 50 real keys) must sum to ~1 (padding keys are masked to 0)
    assert bool(jnp.all(jnp.abs(jnp.sum(attns, axis=-1) - 1.0) < 0.05))
    print("KERNEL_OK")
</pallas_src>

<mosaic_0001>
module attributes {stable_mosaic.version = 11 : i64} {
  func.func @cbvit_kernel(%arg0: i32, %arg1: i32, %arg2: memref<1x64x32xbf16, #tpu.memory_space<vmem>>, %arg3: memref<32x64xbf16, #tpu.memory_space<vmem>>, %arg4: memref<64x64xf32, #tpu.memory_space<vmem>>, %arg5: memref<1x1x64xf32, #tpu.memory_space<vmem>>, %arg6: memref<1x1x64xf32, #tpu.memory_space<vmem>>, %arg7: memref<1x64x512xbf16, #tpu.memory_space<vmem>>, %arg8: memref<1x64x512xbf16, #tpu.memory_space<vmem>>, %arg9: memref<1x64x512xbf16, #tpu.memory_space<vmem>>, %arg10: memref<1x512x64xbf16, #tpu.memory_space<vmem>>, %arg11: memref<1x1x64xf32, #tpu.memory_space<vmem>>, %arg12: memref<1x1x64xf32, #tpu.memory_space<vmem>>, %arg13: memref<1x1x64xf32, #tpu.memory_space<vmem>>, %arg14: memref<1x64x128xbf16, #tpu.memory_space<vmem>>, %arg15: memref<1x1x128xf32, #tpu.memory_space<vmem>>, %arg16: memref<1x128x64xbf16, #tpu.memory_space<vmem>>, %arg17: memref<1x1x64xf32, #tpu.memory_space<vmem>>, %arg18: memref<64x16xf32, #tpu.memory_space<vmem>>, %arg19: memref<1x16xf32, #tpu.memory_space<vmem>>, %arg20: memref<16x1xf32, #tpu.memory_space<vmem>>, %arg21: memref<1x1xf32, #tpu.memory_space<vmem>>, %arg22: memref<1x1x1xf32, #tpu.memory_space<vmem>>, %arg23: memref<1x1x4x64x128xbf16, #tpu.memory_space<vmem>>, %arg24: memref<64x64xf32, #tpu.memory_space<vmem>>) attributes {dimension_semantics = [#tpu.dimension_semantics<parallel>, #tpu.dimension_semantics<arbitrary>], iteration_bounds = array<i64: 2, 6>, scalar_prefetch = 0 : i64, scratch_operands = 1 : i64, tpu.core_type = #tpu.core_type<tc>, window_params = [{transform_indices = @transform_0, window_bounds = array<i64: 1, 64, 32>}, {pipeline_mode = #tpu.pipeline_mode<synchronous>, transform_indices = @transform_1, window_bounds = array<i64: 32, 64>}, {pipeline_mode = #tpu.pipeline_mode<synchronous>, transform_indices = @transform_2, window_bounds = array<i64: 64, 64>}, {transform_indices = @transform_3, window_bounds = array<i64: 1, 1, 64>}, {transform_indices = @transform_4, window_bounds = array<i64: 1, 1, 64>}, {transform_indices = @transform_5, window_bounds = array<i64: 1, 64, 512>}, {transform_indices = @transform_6, window_bounds = array<i64: 1, 64, 512>}, {transform_indices = @transform_7, window_bounds = array<i64: 1, 64, 512>}, {transform_indices = @transform_8, window_bounds = array<i64: 1, 512, 64>}, {transform_indices = @transform_9, window_bounds = array<i64: 1, 1, 64>}, {transform_indices = @transform_10, window_bounds = array<i64: 1, 1, 64>}, {transform_indices = @transform_11, window_bounds = array<i64: 1, 1, 64>}, {transform_indices = @transform_12, window_bounds = array<i64: 1, 64, 128>}, {transform_indices = @transform_13, window_bounds = array<i64: 1, 1, 128>}, {transform_indices = @transform_14, window_bounds = array<i64: 1, 128, 64>}, {transform_indices = @transform_15, window_bounds = array<i64: 1, 1, 64>}, {pipeline_mode = #tpu.pipeline_mode<synchronous>, transform_indices = @transform_16, window_bounds = array<i64: 64, 16>}, {pipeline_mode = #tpu.pipeline_mode<synchronous>, transform_indices = @transform_17, window_bounds = array<i64: 1, 16>}, {pipeline_mode = #tpu.pipeline_mode<synchronous>, transform_indices = @transform_18, window_bounds = array<i64: 16, 1>}, {pipeline_mode = #tpu.pipeline_mode<synchronous>, transform_indices = @transform_19, window_bounds = array<i64: 1, 1>}, {transform_indices = @transform_20, window_bounds = array<i64: 1, 1, 1>}, {transform_indices = @transform_21, window_bounds = array<i64: 1, 1, 4, 64, 128>}]} {
    %0 = tpu.iota {dimensions = array<i32: 2>} : vector<1x1x64xi32>
    %c50_i32 = arith.constant 50 : i32
    %1 = vector.broadcast %c50_i32 : i32 to vector<1x1x64xi32>
    %2 = arith.cmpi slt, %0, %1 : vector<1x1x64xi32>
    %cst = arith.constant 0.000000e+00 : f32
    %cst_0 = arith.constant -1.000000e+09 : f32
    %3 = vector.broadcast %cst : f32 to vector<1x1x64xf32>
    %4 = vector.broadcast %cst_0 : f32 to vector<1x1x64xf32>
    %5 = arith.select %2, %3, %4 : vector<1x1x64xi1>, vector<1x1x64xf32>
    %6 = tpu.iota {dimensions = array<i32: 1>} : vector<1x64x1xi32>
    %c50_i32_1 = arith.constant 50 : i32
    %7 = vector.broadcast %c50_i32_1 : i32 to vector<1x64x1xi32>
    %8 = arith.cmpi slt, %6, %7 : vector<1x64x1xi32>
    %9 = arith.extui %8 : vector<1x64x1xi1> to vector<1x64x1xi32>
    %10 = arith.sitofp %9 : vector<1x64x1xi32> to vector<1x64x1xf32>
    %c0_i32 = arith.constant 0 : i32
    %11 = arith.cmpi eq, %arg1, %c0_i32 : i32
    %12 = arith.extui %11 : i1 to i32
    %c0_i32_2 = arith.constant 0 : i32
    %13 = arith.cmpi ne, %12, %c0_i32_2 : i32
    scf.if %13 {
      %c0_115 = arith.constant 0 : index
      %c0_116 = arith.constant 0 : index
      %c0_117 = arith.constant 0 : index
      %295 = vector.load %arg2[%c0_115, %c0_116, %c0_117] : memref<1x64x32xbf16, #tpu.memory_space<vmem>>, vector<1x64x32xbf16>
      %296 = vector.shape_cast %295 : vector<1x64x32xbf16> to vector<64x32xbf16>
      %c0_118 = arith.constant 0 : index
      %c0_119 = arith.constant 0 : index
      %297 = vector.load %arg3[%c0_118, %c0_119] : memref<32x64xbf16, #tpu.memory_space<vmem>>, vector<32x64xbf16>
      %cst_120 = arith.constant dense<0.000000e+00> : vector<64x64xf32>
      %298 = tpu.matmul %296, %297, %cst_120 {dimension_numbers = #tpu.dot_dimension_numbers<[1], [0], [0], [1], [0, 0, 1, 1], [], []>} : vector<64x32xbf16>, vector<32x64xbf16>, vector<64x64xf32> -> vector<64x64xf32>
      %299 = vector.shape_cast %298 : vector<64x64xf32> to vector<1x64x64xf32>
      %c0_121 = arith.constant 0 : index
      %c0_122 = arith.constant 0 : index
      %300 = vector.load %arg4[%c0_121, %c0_122] : memref<64x64xf32, #tpu.memory_space<vmem>>, vector<64x64xf32>
      %301 = vector.shape_cast %300 : vector<64x64xf32> to vector<1x64x64xf32>
      %302 = arith.addf %299, %301 : vector<1x64x64xf32>
      %303 = vector.shape_cast %302 : vector<1x64x64xf32> to vector<64x64xf32>
      %c0_123 = arith.constant 0 : index
      %c0_124 = arith.constant 0 : index
      %304 = vector.load %arg24[%c0_123, %c0_124] : memref<64x64xf32, #tpu.memory_space<vmem>>, vector<64x64xf32>
      tpu.vector_store %arg24[%c0_123, %c0_124], %303 {strides = array<i32>} : memref<64x64xf32, #tpu.memory_space<vmem>>, vector<64x64xf32>,
    } else {
    }
    %c0 = arith.constant 0 : index
    %c0_3 = arith.constant 0 : index
    %14 = vector.load %arg24[%c0, %c0_3] : memref<64x64xf32, #tpu.memory_space<vmem>>, vector<64x64xf32>
    %c0_4 = arith.constant 0 : index
    %c0_5 = arith.constant 0 : index
    %c0_6 = arith.constant 0 : index
    %15 = vector.load %arg5[%c0_4, %c0_5, %c0_6] : memref<1x1x64xf32, #tpu.memory_space<vmem>>, vector<1x1x64xf32>
    %16 = vector.shape_cast %15 : vector<1x1x64xf32> to vector<1x64xf32>
    %c0_7 = arith.constant 0 : index
    %c0_8 = arith.constant 0 : index
    %c0_9 = arith.constant 0 : index
    %17 = vector.load %arg6[%c0_7, %c0_8, %c0_9] : memref<1x1x64xf32, #tpu.memory_space<vmem>>, vector<1x1x64xf32>
    %18 = vector.shape_cast %17 : vector<1x1x64xf32> to vector<1x64xf32>
    %cst_10 = arith.constant dense<0.000000e+00> : vector<64xf32>
    %19 = vector.multi_reduction <add>, %14, %cst_10 [1] : vector<64x64xf32> to vector<64xf32>
    %20 = vector.shape_cast %19 : vector<64xf32> to vector<64x1xf32>
    %cst_11 = arith.constant 6.400000e+01 : f32
    %21 = vector.broadcast %cst_11 : f32 to vector<64x1xf32>
    %22 = arith.divf %20, %21 : vector<64x1xf32>
    %23 = vector.broadcast %22 : vector<64x1xf32> to vector<64x64xf32>
    %24 = arith.subf %14, %23 : vector<64x64xf32>
    %25 = arith.mulf %24, %24 : vector<64x64xf32>
    %cst_12 = arith.constant dense<0.000000e+00> : vector<64xf32>
    %26 = vector.multi_reduction <add>, %25, %cst_12 [1] : vector<64x64xf32> to vector<64xf32>
    %27 = vector.shape_cast %26 : vector<64xf32> to vector<64x1xf32>
    %cst_13 = arith.constant 6.400000e+01 : f32
    %28 = vector.broadcast %cst_13 : f32 to vector<64x1xf32>
    %29 = arith.divf %27, %28 : vector<64x1xf32>
    %30 = vector.broadcast %22 : vector<64x1xf32> to vector<64x64xf32>
    %31 = arith.subf %14, %30 : vector<64x64xf32>
    %cst_14 = arith.constant 9.99999974E-6 : f32
    %32 = vector.broadcast %cst_14 : f32 to vector<64x1xf32>
    %33 = arith.addf %29, %32 : vector<64x1xf32>
    %34 = math.rsqrt %33 : vector<64x1xf32>
    %35 = vector.broadcast %34 : vector<64x1xf32> to vector<64x64xf32>
    %36 = arith.mulf %31, %35 : vector<64x64xf32>
    %37 = vector.broadcast %16 : vector<1x64xf32> to vector<64x64xf32>
    %38 = arith.mulf %36, %37 : vector<64x64xf32>
    %39 = vector.broadcast %18 : vector<1x64xf32> to vector<64x64xf32>
    %40 = arith.addf %38, %39 : vector<64x64xf32>
    %41 = arith.truncf %40 : vector<64x64xf32> to vector<64x64xbf16>
    %c0_15 = arith.constant 0 : index
    %c0_16 = arith.constant 0 : index
    %c0_17 = arith.constant 0 : index
    %42 = vector.load %arg7[%c0_15, %c0_16, %c0_17] : memref<1x64x512xbf16, #tpu.memory_space<vmem>>, vector<1x64x512xbf16>
    %43 = vector.shape_cast %42 : vector<1x64x512xbf16> to vector<64x512xbf16>
    %cst_18 = arith.constant dense<0.000000e+00> : vector<64x512xf32>
    %44 = tpu.matmul %41, %43, %cst_18 {dimension_numbers = #tpu.dot_dimension_numbers<[1], [0], [0], [1], [0, 0, 1, 1], [], []>} : vector<64x64xbf16>, vector<64x512xbf16>, vector<64x512xf32> -> vector<64x512xf32>
    %45 = arith.truncf %44 : vector<64x512xf32> to vector<64x512xbf16>
    %46 = vector.shape_cast %45 : vector<64x512xbf16> to vector<1x64x512xbf16>
    %c0_19 = arith.constant 0 : index
    %c0_20 = arith.constant 0 : index
    %c0_21 = arith.constant 0 : index
    %47 = vector.load %arg8[%c0_19, %c0_20, %c0_21] : memref<1x64x512xbf16, #tpu.memory_space<vmem>>, vector<1x64x512xbf16>
    %48 = vector.shape_cast %47 : vector<1x64x512xbf16> to vector<64x512xbf16>
    %cst_22 = arith.constant dense<0.000000e+00> : vector<64x512xf32>
    %49 = tpu.matmul %41, %48, %cst_22 {dimension_numbers = #tpu.dot_dimension_numbers<[1], [0], [0], [1], [0, 0, 1, 1], [], []>} : vector<64x64xbf16>, vector<64x512xbf16>, vector<64x512xf32> -> vector<64x512xf32>
    %50 = arith.truncf %49 : vector<64x512xf32> to vector<64x512xbf16>
    %51 = vector.shape_cast %50 : vector<64x512xbf16> to vector<1x64x512xbf16>
    %c0_23 = arith.constant 0 : index
    %c0_24 = arith.constant 0 : index
    %c0_25 = arith.constant 0 : index
    %52 = vector.load %arg9[%c0_23, %c0_24, %c0_25] : memref<1x64x512xbf16, #tpu.memory_space<vmem>>, vector<1x64x512xbf16>
    %53 = vector.shape_cast %52 : vector<1x64x512xbf16> to vector<64x512xbf16>
    %cst_26 = arith.constant dense<0.000000e+00> : vector<64x512xf32>
    %54 = tpu.matmul %41, %53, %cst_26 {dimension_numbers = #tpu.dot_dimension_numbers<[1], [0], [0], [1], [0, 0, 1, 1], [], []>} : vector<64x64xbf16>, vector<64x512xbf16>, vector<64x512xf32> -> vector<64x512xf32>
    %55 = arith.truncf %54 : vector<64x512xf32> to vector<64x512xbf16>
    %56 = vector.shape_cast %55 : vector<64x512xbf16> to vector<1x64x512xbf16>
    %57 = vector.extract_strided_slice %46 {offsets = [0, 0, 0], sizes = [1, 64, 64], strides = [1, 1, 1]} : vector<1x64x512xbf16> to vector<1x64x64xbf16>
    %58 = vector.extract_strided_slice %51 {offsets = [0, 0, 0], sizes = [1, 64, 64], strides = [1, 1, 1]} : vector<1x64x512xbf16> to vector<1x64x64xbf16>
    %59 = vector.extract_strided_slice %56 {offsets = [0, 0, 0], sizes = [1, 64, 64], strides = [1, 1, 1]} : vector<1x64x512xbf16> to vector<1x64x64xbf16>
    "tpu.trace_start"() <{level = 10 : i32, message = "bqd,bkd->bqk"}> : () -> ()
    %cst_27 = arith.constant dense<0.000000e+00> : vector<1x64x64xf32>
    %60 = tpu.matmul %57, %58, %cst_27 {dimension_numbers = #tpu.dot_dimension_numbers<[2], [2], [1], [1], [0, 0, 0, 1, 1, 1], [0], [0]>} : vector<1x64x64xbf16>, vector<1x64x64xbf16>, vector<1x64x64xf32> -> vector<1x64x64xf32>
    "tpu.trace_stop"() : () -> ()
    %61 = vector.broadcast %5 : vector<1x1x64xf32> to vector<1x64x64xf32>
    %62 = arith.addf %60, %61 : vector<1x64x64xf32>
    %cst_28 = arith.constant dense<0xFF800000> : vector<1x64xf32>
    %63 = vector.multi_reduction <maximumf>, %62, %cst_28 [2] : vector<1x64x64xf32> to vector<1x64xf32>
    %64 = vector.shape_cast %63 : vector<1x64xf32> to vector<1x64x1xf32>
    %65 = vector.broadcast %64 : vector<1x64x1xf32> to vector<1x64x64xf32>
    %66 = arith.subf %62, %65 : vector<1x64x64xf32>
    %67 = math.exp %66 : vector<1x64x64xf32>
    %cst_29 = arith.constant dense<0.000000e+00> : vector<1x64xf32>
    %68 = vector.multi_reduction <add>, %67, %cst_29 [2] : vector<1x64x64xf32> to vector<1x64xf32>
    %69 = vector.shape_cast %68 : vector<1x64xf32> to vector<1x64x1xf32>
    %70 = tpu.reciprocal %69 {approx = true} : vector<1x64x1xf32> -> vector<1x64x1xf32>
    %71 = vector.broadcast %70 : vector<1x64x1xf32> to vector<1x64x64xf32>
    %72 = arith.mulf %67, %71 : vector<1x64x64xf32>
    %73 = arith.truncf %72 : vector<1x64x64xf32> to vector<1x64x64xbf16>
    "tpu.trace_start"() <{level = 10 : i32, message = "bqk,bkd->bqd"}> : () -> ()
    %cst_30 = arith.constant dense<0.000000e+00> : vector<1x64x64xf32>
    %74 = tpu.matmul %73, %59, %cst_30 {dimension_numbers = #tpu.dot_dimension_numbers<[2], [1], [1], [2], [0, 0, 0, 1, 1, 2], [0], [0]>} : vector<1x64x64xbf16>, vector<1x64x64xbf16>, vector<1x64x64xf32> -> vector<1x64x64xf32>
    "tpu.trace_stop"() : () -> ()
    %75 = arith.truncf %74 : vector<1x64x64xf32> to vector<1x64x64xbf16>
    %76 = vector.extract_strided_slice %46 {offsets = [0, 0, 64], sizes = [1, 64, 64], strides = [1, 1, 1]} : vector<1x64x512xbf16> to vector<1x64x64xbf16>
    %77 = vector.extract_strided_slice %51 {offsets = [0, 0, 64], sizes = [1, 64, 64], strides = [1, 1, 1]} : vector<1x64x512xbf16> to vector<1x64x64xbf16>
    %78 = vector.extract_strided_slice %56 {offsets = [0, 0, 64], sizes = [1, 64, 64], strides = [1, 1, 1]} : vector<1x64x512xbf16> to vector<1x64x64xbf16>
    "tpu.trace_start"() <{level = 10 : i32, message = "bqd,bkd->bqk"}> : () -> ()
    %cst_31 = arith.constant dense<0.000000e+00> : vector<1x64x64xf32>
    %79 = tpu.matmul %76, %77, %cst_31 {dimension_numbers = #tpu.dot_dimension_numbers<[2], [2], [1], [1], [0, 0, 0, 1, 1, 1], [0], [0]>} : vector<1x64x64xbf16>, vector<1x64x64xbf16>, vector<1x64x64xf32> -> vector<1x64x64xf32>
    "tpu.trace_stop"() : () -> ()
    %80 = vector.broadcast %5 : vector<1x1x64xf32> to vector<1x64x64xf32>
    %81 = arith.addf %79, %80 : vector<1x64x64xf32>
    %cst_32 = arith.constant dense<0xFF800000> : vector<1x64xf32>
    %82 = vector.multi_reduction <maximumf>, %81, %cst_32 [2] : vector<1x64x64xf32> to vector<1x64xf32>
    %83 = vector.shape_cast %82 : vector<1x64xf32> to vector<1x64x1xf32>
    %84 = vector.broadcast %83 : vector<1x64x1xf32> to vector<1x64x64xf32>
    %85 = arith.subf %81, %84 : vector<1x64x64xf32>
    %86 = math.exp %85 : vector<1x64x64xf32>
    %cst_33 = arith.constant dense<0.000000e+00> : vector<1x64xf32>
    %87 = vector.multi_reduction <add>, %86, %cst_33 [2] : vector<1x64x64xf32> to vector<1x64xf32>
    %88 = vector.shape_cast %87 : vector<1x64xf32> to vector<1x64x1xf32>
    %89 = tpu.reciprocal %88 {approx = true} : vector<1x64x1xf32> -> vector<1x64x1xf32>
    %90 = vector.broadcast %89 : vector<1x64x1xf32> to vector<1x64x64xf32>
    %91 = arith.mulf %86, %90 : vector<1x64x64xf32>
    %92 = arith.truncf %91 : vector<1x64x64xf32> to vector<1x64x64xbf16>
    "tpu.trace_start"() <{level = 10 : i32, message = "bqk,bkd->bqd"}> : () -> ()
    %cst_34 = arith.constant dense<0.000000e+00> : vector<1x64x64xf32>
    %93 = tpu.matmul %92, %78, %cst_34 {dimension_numbers = #tpu.dot_dimension_numbers<[2], [1], [1], [2], [0, 0, 0, 1, 1, 2], [0], [0]>} : vector<1x64x64xbf16>, vector<1x64x64xbf16>, vector<1x64x64xf32> -> vector<1x64x64xf32>
    "tpu.trace_stop"() : () -> ()
    %94 = arith.truncf %93 : vector<1x64x64xf32> to vector<1x64x64xbf16>
    %95 = tpu.concatenate %73, %92 in 2 : vector<1x64x64xbf16>, vector<1x64x64xbf16> -> vector<1x64x128xbf16>
    %c0_35 = arith.constant 0 : index
    %c0_36 = arith.constant 0 : index
    %c0_37 = arith.constant 0 : index
    %c0_38 = arith.constant 0 : index
    %c0_39 = arith.constant 0 : index
    %96 = vector.load %arg23[%c0_35, %c0_36, %c0_37, %c0_38, %c0_39] : memref<1x1x4x64x128xbf16, #tpu.memory_space<vmem>>, vector<1x1x1x64x128xbf16>
    %97 = vector.shape_cast %96 : vector<1x1x1x64x128xbf16> to vector<1x64x128xbf16>
    %98 = vector.shape_cast %95 : vector<1x64x128xbf16> to vector<1x1x1x64x128xbf16>
    tpu.vector_store %arg23[%c0_35, %c0_36, %c0_37, %c0_38, %c0_39], %98 {strides = array<i32>} : memref<1x1x4x64x128xbf16, #tpu.memory_space<vmem>>, vector<1x1x1x64x128xbf16>,
    %99 = vector.extract_strided_slice %46 {offsets = [0, 0, 128], sizes = [1, 64, 64], strides = [1, 1, 1]} : vector<1x64x512xbf16> to vector<1x64x64xbf16>
    %100 = vector.extract_strided_slice %51 {offsets = [0, 0, 128], sizes = [1, 64, 64], strides = [1, 1, 1]} : vector<1x64x512xbf16> to vector<1x64x64xbf16>
    %101 = vector.extract_strided_slice %56 {offsets = [0, 0, 128], sizes = [1, 64, 64], strides = [1, 1, 1]} : vector<1x64x512xbf16> to vector<1x64x64xbf16>
    "tpu.trace_start"() <{level = 10 : i32, message = "bqd,bkd->bqk"}> : () -> ()
    %cst_40 = arith.constant dense<0.000000e+00> : vector<1x64x64xf32>
    %102 = tpu.matmul %99, %100, %cst_40 {dimension_numbers = #tpu.dot_dimension_numbers<[2], [2], [1], [1], [0, 0, 0, 1, 1, 1], [0], [0]>} : vector<1x64x64xbf16>, vector<1x64x64xbf16>, vector<1x64x64xf32> -> vector<1x64x64xf32>
    "tpu.trace_stop"() : () -> ()
    %103 = vector.broadcast %5 : vector<1x1x64xf32> to vector<1x64x64xf32>
    %104 = arith.addf %102, %103 : vector<1x64x64xf32>
    %cst_41 = arith.constant dense<0xFF800000> : vector<1x64xf32>
    %105 = vector.multi_reduction <maximumf>, %104, %cst_41 [2] : vector<1x64x64xf32> to vector<1x64xf32>
    %106 = vector.shape_cast %105 : vector<1x64xf32> to vector<1x64x1xf32>
    %107 = vector.broadcast %106 : vector<1x64x1xf32> to vector<1x64x64xf32>
    %108 = arith.subf %104, %107 : vector<1x64x64xf32>
    %109 = math.exp %108 : vector<1x64x64xf32>
    %cst_42 = arith.constant dense<0.000000e+00> : vector<1x64xf32>
    %110 = vector.multi_reduction <add>, %109, %cst_42 [2] : vector<1x64x64xf32> to vector<1x64xf32>
    %111 = vector.shape_cast %110 : vector<1x64xf32> to vector<1x64x1xf32>
    %112 = tpu.reciprocal %111 {approx = true} : vector<1x64x1xf32> -> vector<1x64x1xf32>
    %113 = vector.broadcast %112 : vector<1x64x1xf32> to vector<1x64x64xf32>
    %114 = arith.mulf %109, %113 : vector<1x64x64xf32>
    %115 = arith.truncf %114 : vector<1x64x64xf32> to vector<1x64x64xbf16>
    "tpu.trace_start"() <{level = 10 : i32, message = "bqk,bkd->bqd"}> : () -> ()
    %cst_43 = arith.constant dense<0.000000e+00> : vector<1x64x64xf32>
    %116 = tpu.matmul %115, %101, %cst_43 {dimension_numbers = #tpu.dot_dimension_numbers<[2], [1], [1], [2], [0, 0, 0, 1, 1, 2], [0], [0]>} : vector<1x64x64xbf16>, vector<1x64x64xbf16>, vector<1x64x64xf32> -> vector<1x64x64xf32>
    "tpu.trace_stop"() : () -> ()
    %117 = arith.truncf %116 : vector<1x64x64xf32> to vector<1x64x64xbf16>
    %118 = vector.extract_strided_slice %46 {offsets = [0, 0, 192], sizes = [1, 64, 64], strides = [1, 1, 1]} : vector<1x64x512xbf16> to vector<1x64x64xbf16>
    %119 = vector.extract_strided_slice %51 {offsets = [0, 0, 192], sizes = [1, 64, 64], strides = [1, 1, 1]} : vector<1x64x512xbf16> to vector<1x64x64xbf16>
    %120 = vector.extract_strided_slice %56 {offsets = [0, 0, 192], sizes = [1, 64, 64], strides = [1, 1, 1]} : vector<1x64x512xbf16> to vector<1x64x64xbf16>
    "tpu.trace_start"() <{level = 10 : i32, message = "bqd,bkd->bqk"}> : () -> ()
    %cst_44 = arith.constant dense<0.000000e+00> : vector<1x64x64xf32>
    %121 = tpu.matmul %118, %119, %cst_44 {dimension_numbers = #tpu.dot_dimension_numbers<[2], [2], [1], [1], [0, 0, 0, 1, 1, 1], [0], [0]>} : vector<1x64x64xbf16>, vector<1x64x64xbf16>, vector<1x64x64xf32> -> vector<1x64x64xf32>
    "tpu.trace_stop"() : () -> ()
    %122 = vector.broadcast %5 : vector<1x1x64xf32> to vector<1x64x64xf32>
    %123 = arith.addf %121, %122 : vector<1x64x64xf32>
    %cst_45 = arith.constant dense<0xFF800000> : vector<1x64xf32>
    %124 = vector.multi_reduction <maximumf>, %123, %cst_45 [2] : vector<1x64x64xf32> to vector<1x64xf32>
    %125 = vector.shape_cast %124 : vector<1x64xf32> to vector<1x64x1xf32>
    %126 = vector.broadcast %125 : vector<1x64x1xf32> to vector<1x64x64xf32>
    %127 = arith.subf %123, %126 : vector<1x64x64xf32>
    %128 = math.exp %127 : vector<1x64x64xf32>
    %cst_46 = arith.constant dense<0.000000e+00> : vector<1x64xf32>
    %129 = vector.multi_reduction <add>, %128, %cst_46 [2] : vector<1x64x64xf32> to vector<1x64xf32>
    %130 = vector.shape_cast %129 : vector<1x64xf32> to vector<1x64x1xf32>
    %131 = tpu.reciprocal %130 {approx = true} : vector<1x64x1xf32> -> vector<1x64x1xf32>
    %132 = vector.broadcast %131 : vector<1x64x1xf32> to vector<1x64x64xf32>
    %133 = arith.mulf %128, %132 : vector<1x64x64xf32>
    %134 = arith.truncf %133 : vector<1x64x64xf32> to vector<1x64x64xbf16>
    "tpu.trace_start"() <{level = 10 : i32, message = "bqk,bkd->bqd"}> : () -> ()
    %cst_47 = arith.constant dense<0.000000e+00> : vector<1x64x64xf32>
    %135 = tpu.matmul %134, %120, %cst_47 {dimension_numbers = #tpu.dot_dimension_numbers<[2], [1], [1], [2], [0, 0, 0, 1, 1, 2], [0], [0]>} : vector<1x64x64xbf16>, vector<1x64x64xbf16>, vector<1x64x64xf32> -> vector<1x64x64xf32>
    "tpu.trace_stop"() : () -> ()
    %136 = arith.truncf %135 : vector<1x64x64xf32> to vector<1x64x64xbf16>
    %137 = tpu.concatenate %115, %134 in 2 : vector<1x64x64xbf16>, vector<1x64x64xbf16> -> vector<1x64x128xbf16>
    %c0_48 = arith.constant 0 : index
    %c0_49 = arith.constant 0 : index
    %c1 = arith.constant 1 : index
    %c0_50 = arith.constant 0 : index
    %c0_51 = arith.constant 0 : index
    %138 = vector.load %arg23[%c0_48, %c0_49, %c1, %c0_50, %c0_51] : memref<1x1x4x64x128xbf16, #tpu.memory_space<vmem>>, vector<1x1x1x64x128xbf16>
    %139 = vector.shape_cast %138 : vector<1x1x1x64x128xbf16> to vector<1x64x128xbf16>
    %140 = vector.shape_cast %137 : vector<1x64x128xbf16> to vector<1x1x1x64x128xbf16>
    tpu.vector_store %arg23[%c0_48, %c0_49, %c1, %c0_50, %c0_51], %140 {strides = array<i32>} : memref<1x1x4x64x128xbf16, #tpu.memory_space<vmem>>, vector<1x1x1x64x128xbf16>,
    %141 = vector.extract_strided_slice %46 {offsets = [0, 0, 256], sizes = [1, 64, 64], strides = [1, 1, 1]} : vector<1x64x512xbf16> to vector<1x64x64xbf16>
    %142 = vector.extract_strided_slice %51 {offsets = [0, 0, 256], sizes = [1, 64, 64], strides = [1, 1, 1]} : vector<1x64x512xbf16> to vector<1x64x64xbf16>
    %143 = vector.extract_strided_slice %56 {offsets = [0, 0, 256], sizes = [1, 64, 64], strides = [1, 1, 1]} : vector<1x64x512xbf16> to vector<1x64x64xbf16>
    "tpu.trace_start"() <{level = 10 : i32, message = "bqd,bkd->bqk"}> : () -> ()
    %cst_52 = arith.constant dense<0.000000e+00> : vector<1x64x64xf32>
    %144 = tpu.matmul %141, %142, %cst_52 {dimension_numbers = #tpu.dot_dimension_numbers<[2], [2], [1], [1], [0, 0, 0, 1, 1, 1], [0], [0]>} : vector<1x64x64xbf16>, vector<1x64x64xbf16>, vector<1x64x64xf32> -> vector<1x64x64xf32>
    "tpu.trace_stop"() : () -> ()
    %145 = vector.broadcast %5 : vector<1x1x64xf32> to vector<1x64x64xf32>
    %146 = arith.addf %144, %145 : vector<1x64x64xf32>
    %cst_53 = arith.constant dense<0xFF800000> : vector<1x64xf32>
    %147 = vector.multi_reduction <maximumf>, %146, %cst_53 [2] : vector<1x64x64xf32> to vector<1x64xf32>
    %148 = vector.shape_cast %147 : vector<1x64xf32> to vector<1x64x1xf32>
    %149 = vector.broadcast %148 : vector<1x64x1xf32> to vector<1x64x64xf32>
    %150 = arith.subf %146, %149 : vector<1x64x64xf32>
    %151 = math.exp %150 : vector<1x64x64xf32>
    %cst_54 = arith.constant dense<0.000000e+00> : vector<1x64xf32>
    %152 = vector.multi_reduction <add>, %151, %cst_54 [2] : vector<1x64x64xf32> to vector<1x64xf32>
    %153 = vector.shape_cast %152 : vector<1x64xf32> to vector<1x64x1xf32>
    %154 = tpu.reciprocal %153 {approx = true} : vector<1x64x1xf32> -> vector<1x64x1xf32>
    %155 = vector.broadcast %154 : vector<1x64x1xf32> to vector<1x64x64xf32>
    %156 = arith.mulf %151, %155 : vector<1x64x64xf32>
    %157 = arith.truncf %156 : vector<1x64x64xf32> to vector<1x64x64xbf16>
    "tpu.trace_start"() <{level = 10 : i32, message = "bqk,bkd->bqd"}> : () -> ()
    %cst_55 = arith.constant dense<0.000000e+00> : vector<1x64x64xf32>
    %158 = tpu.matmul %157, %143, %cst_55 {dimension_numbers = #tpu.dot_dimension_numbers<[2], [1], [1], [2], [0, 0, 0, 1, 1, 2], [0], [0]>} : vector<1x64x64xbf16>, vector<1x64x64xbf16>, vector<1x64x64xf32> -> vector<1x64x64xf32>
    "tpu.trace_stop"() : () -> ()
    %159 = arith.truncf %158 : vector<1x64x64xf32> to vector<1x64x64xbf16>
    %160 = vector.extract_strided_slice %46 {offsets = [0, 0, 320], sizes = [1, 64, 64], strides = [1, 1, 1]} : vector<1x64x512xbf16> to vector<1x64x64xbf16>
    %161 = vector.extract_strided_slice %51 {offsets = [0, 0, 320], sizes = [1, 64, 64], strides = [1, 1, 1]} : vector<1x64x512xbf16> to vector<1x64x64xbf16>
    %162 = vector.extract_strided_slice %56 {offsets = [0, 0, 320], sizes = [1, 64, 64], strides = [1, 1, 1]} : vector<1x64x512xbf16> to vector<1x64x64xbf16>
    "tpu.trace_start"() <{level = 10 : i32, message = "bqd,bkd->bqk"}> : () -> ()
    %cst_56 = arith.constant dense<0.000000e+00> : vector<1x64x64xf32>
    %163 = tpu.matmul %160, %161, %cst_56 {dimension_numbers = #tpu.dot_dimension_numbers<[2], [2], [1], [1], [0, 0, 0, 1, 1, 1], [0], [0]>} : vector<1x64x64xbf16>, vector<1x64x64xbf16>, vector<1x64x64xf32> -> vector<1x64x64xf32>
    "tpu.trace_stop"() : () -> ()
    %164 = vector.broadcast %5 : vector<1x1x64xf32> to vector<1x64x64xf32>
    %165 = arith.addf %163, %164 : vector<1x64x64xf32>
    %cst_57 = arith.constant dense<0xFF800000> : vector<1x64xf32>
    %166 = vector.multi_reduction <maximumf>, %165, %cst_57 [2] : vector<1x64x64xf32> to vector<1x64xf32>
    %167 = vector.shape_cast %166 : vector<1x64xf32> to vector<1x64x1xf32>
    %168 = vector.broadcast %167 : vector<1x64x1xf32> to vector<1x64x64xf32>
    %169 = arith.subf %165, %168 : vector<1x64x64xf32>
    %170 = math.exp %169 : vector<1x64x64xf32>
    %cst_58 = arith.constant dense<0.000000e+00> : vector<1x64xf32>
    %171 = vector.multi_reduction <add>, %170, %cst_58 [2] : vector<1x64x64xf32> to vector<1x64xf32>
    %172 = vector.shape_cast %171 : vector<1x64xf32> to vector<1x64x1xf32>
    %173 = tpu.reciprocal %172 {approx = true} : vector<1x64x1xf32> -> vector<1x64x1xf32>
    %174 = vector.broadcast %173 : vector<1x64x1xf32> to vector<1x64x64xf32>
    %175 = arith.mulf %170, %174 : vector<1x64x64xf32>
    %176 = arith.truncf %175 : vector<1x64x64xf32> to vector<1x64x64xbf16>
    "tpu.trace_start"() <{level = 10 : i32, message = "bqk,bkd->bqd"}> : () -> ()
    %cst_59 = arith.constant dense<0.000000e+00> : vector<1x64x64xf32>
    %177 = tpu.matmul %176, %162, %cst_59 {dimension_numbers = #tpu.dot_dimension_numbers<[2], [1], [1], [2], [0, 0, 0, 1, 1, 2], [0], [0]>} : vector<1x64x64xbf16>, vector<1x64x64xbf16>, vector<1x64x64xf32> -> vector<1x64x64xf32>
    "tpu.trace_stop"() : () -> ()
    %178 = arith.truncf %177 : vector<1x64x64xf32> to vector<1x64x64xbf16>
    %179 = tpu.concatenate %157, %176 in 2 : vector<1x64x64xbf16>, vector<1x64x64xbf16> -> vector<1x64x128xbf16>
    %c0_60 = arith.constant 0 : index
    %c0_61 = arith.constant 0 : index
    %c2 = arith.constant 2 : index
    %c0_62 = arith.constant 0 : index
    %c0_63 = arith.constant 0 : index
    %180 = vector.load %arg23[%c0_60, %c0_61, %c2, %c0_62, %c0_63] : memref<1x1x4x64x128xbf16, #tpu.memory_space<vmem>>, vector<1x1x1x64x128xbf16>
    %181 = vector.shape_cast %180 : vector<1x1x1x64x128xbf16> to vector<1x64x128xbf16>
    %182 = vector.shape_cast %179 : vector<1x64x128xbf16> to vector<1x1x1x64x128xbf16>
    tpu.vector_store %arg23[%c0_60, %c0_61, %c2, %c0_62, %c0_63], %182 {strides = array<i32>} : memref<1x1x4x64x128xbf16, #tpu.memory_space<vmem>>, vector<1x1x1x64x128xbf16>,
    %183 = vector.extract_strided_slice %46 {offsets = [0, 0, 384], sizes = [1, 64, 64], strides = [1, 1, 1]} : vector<1x64x512xbf16> to vector<1x64x64xbf16>
    %184 = vector.extract_strided_slice %51 {offsets = [0, 0, 384], sizes = [1, 64, 64], strides = [1, 1, 1]} : vector<1x64x512xbf16> to vector<1x64x64xbf16>
    %185 = vector.extract_strided_slice %56 {offsets = [0, 0, 384], sizes = [1, 64, 64], strides = [1, 1, 1]} : vector<1x64x512xbf16> to vector<1x64x64xbf16>
    "tpu.trace_start"() <{level = 10 : i32, message = "bqd,bkd->bqk"}> : () -> ()
    %cst_64 = arith.constant dense<0.000000e+00> : vector<1x64x64xf32>
    %186 = tpu.matmul %183, %184, %cst_64 {dimension_numbers = #tpu.dot_dimension_numbers<[2], [2], [1], [1], [0, 0, 0, 1, 1, 1], [0], [0]>} : vector<1x64x64xbf16>, vector<1x64x64xbf16>, vector<1x64x64xf32> -> vector<1x64x64xf32>
    "tpu.trace_stop"() : () -> ()
    %187 = vector.broadcast %5 : vector<1x1x64xf32> to vector<1x64x64xf32>
    %188 = arith.addf %186, %187 : vector<1x64x64xf32>
    %cst_65 = arith.constant dense<0xFF800000> : vector<1x64xf32>
    %189 = vector.multi_reduction <maximumf>, %188, %cst_65 [2] : vector<1x64x64xf32> to vector<1x64xf32>
    %190 = vector.shape_cast %189 : vector<1x64xf32> to vector<1x64x1xf32>
    %191 = vector.broadcast %190 : vector<1x64x1xf32> to vector<1x64x64xf32>
    %192 = arith.subf %188, %191 : vector<1x64x64xf32>
    %193 = math.exp %192 : vector<1x64x64xf32>
    %cst_66 = arith.constant dense<0.000000e+00> : vector<1x64xf32>
    %194 = vector.multi_reduction <add>, %193, %cst_66 [2] : vector<1x64x64xf32> to vector<1x64xf32>
    %195 = vector.shape_cast %194 : vector<1x64xf32> to vector<1x64x1xf32>
    %196 = tpu.reciprocal %195 {approx = true} : vector<1x64x1xf32> -> vector<1x64x1xf32>
    %197 = vector.broadcast %196 : vector<1x64x1xf32> to vector<1x64x64xf32>
    %198 = arith.mulf %193, %197 : vector<1x64x64xf32>
    %199 = arith.truncf %198 : vector<1x64x64xf32> to vector<1x64x64xbf16>
    "tpu.trace_start"() <{level = 10 : i32, message = "bqk,bkd->bqd"}> : () -> ()
    %cst_67 = arith.constant dense<0.000000e+00> : vector<1x64x64xf32>
    %200 = tpu.matmul %199, %185, %cst_67 {dimension_numbers = #tpu.dot_dimension_numbers<[2], [1], [1], [2], [0, 0, 0, 1, 1, 2], [0], [0]>} : vector<1x64x64xbf16>, vector<1x64x64xbf16>, vector<1x64x64xf32> -> vector<1x64x64xf32>
    "tpu.trace_stop"() : () -> ()
    %201 = arith.truncf %200 : vector<1x64x64xf32> to vector<1x64x64xbf16>
    %202 = vector.extract_strided_slice %46 {offsets = [0, 0, 448], sizes = [1, 64, 64], strides = [1, 1, 1]} : vector<1x64x512xbf16> to vector<1x64x64xbf16>
    %203 = vector.extract_strided_slice %51 {offsets = [0, 0, 448], sizes = [1, 64, 64], strides = [1, 1, 1]} : vector<1x64x512xbf16> to vector<1x64x64xbf16>
    %204 = vector.extract_strided_slice %56 {offsets = [0, 0, 448], sizes = [1, 64, 64], strides = [1, 1, 1]} : vector<1x64x512xbf16> to vector<1x64x64xbf16>
    "tpu.trace_start"() <{level = 10 : i32, message = "bqd,bkd->bqk"}> : () -> ()
    %cst_68 = arith.constant dense<0.000000e+00> : vector<1x64x64xf32>
    %205 = tpu.matmul %202, %203, %cst_68 {dimension_numbers = #tpu.dot_dimension_numbers<[2], [2], [1], [1], [0, 0, 0, 1, 1, 1], [0], [0]>} : vector<1x64x64xbf16>, vector<1x64x64xbf16>, vector<1x64x64xf32> -> vector<1x64x64xf32>
    "tpu.trace_stop"() : () -> ()
    %206 = vector.broadcast %5 : vector<1x1x64xf32> to vector<1x64x64xf32>
    %207 = arith.addf %205, %206 : vector<1x64x64xf32>
    %cst_69 = arith.constant dense<0xFF800000> : vector<1x64xf32>
    %208 = vector.multi_reduction <maximumf>, %207, %cst_69 [2] : vector<1x64x64xf32> to vector<1x64xf32>
    %209 = vector.shape_cast %208 : vector<1x64xf32> to vector<1x64x1xf32>
    %210 = vector.broadcast %209 : vector<1x64x1xf32> to vector<1x64x64xf32>
    %211 = arith.subf %207, %210 : vector<1x64x64xf32>
    %212 = math.exp %211 : vector<1x64x64xf32>
    %cst_70 = arith.constant dense<0.000000e+00> : vector<1x64xf32>
    %213 = vector.multi_reduction <add>, %212, %cst_70 [2] : vector<1x64x64xf32> to vector<1x64xf32>
    %214 = vector.shape_cast %213 : vector<1x64xf32> to vector<1x64x1xf32>
    %215 = tpu.reciprocal %214 {approx = true} : vector<1x64x1xf32> -> vector<1x64x1xf32>
    %216 = vector.broadcast %215 : vector<1x64x1xf32> to vector<1x64x64xf32>
    %217 = arith.mulf %212, %216 : vector<1x64x64xf32>
    %218 = arith.truncf %217 : vector<1x64x64xf32> to vector<1x64x64xbf16>
    "tpu.trace_start"() <{level = 10 : i32, message = "bqk,bkd->bqd"}> : () -> ()
    %cst_71 = arith.constant dense<0.000000e+00> : vector<1x64x64xf32>
    %219 = tpu.matmul %218, %204, %cst_71 {dimension_numbers = #tpu.dot_dimension_numbers<[2], [1], [1], [2], [0, 0, 0, 1, 1, 2], [0], [0]>} : vector<1x64x64xbf16>, vector<1x64x64xbf16>, vector<1x64x64xf32> -> vector<1x64x64xf32>
    "tpu.trace_stop"() : () -> ()
    %220 = arith.truncf %219 : vector<1x64x64xf32> to vector<1x64x64xbf16>
    %221 = tpu.concatenate %199, %218 in 2 : vector<1x64x64xbf16>, vector<1x64x64xbf16> -> vector<1x64x128xbf16>
    %c0_72 = arith.constant 0 : index
    %c0_73 = arith.constant 0 : index
    %c3 = arith.constant 3 : index
    %c0_74 = arith.constant 0 : index
    %c0_75 = arith.constant 0 : index
    %222 = vector.load %arg23[%c0_72, %c0_73, %c3, %c0_74, %c0_75] : memref<1x1x4x64x128xbf16, #tpu.memory_space<vmem>>, vector<1x1x1x64x128xbf16>
    %223 = vector.shape_cast %222 : vector<1x1x1x64x128xbf16> to vector<1x64x128xbf16>
    %224 = vector.shape_cast %221 : vector<1x64x128xbf16> to vector<1x1x1x64x128xbf16>
    tpu.vector_store %arg23[%c0_72, %c0_73, %c3, %c0_74, %c0_75], %224 {strides = array<i32>} : memref<1x1x4x64x128xbf16, #tpu.memory_space<vmem>>, vector<1x1x1x64x128xbf16>,
    %225 = tpu.concatenate %75, %94, %117, %136, %159, %178, %201, %220 in 2 : vector<1x64x64xbf16>, vector<1x64x64xbf16>, vector<1x64x64xbf16>, vector<1x64x64xbf16>, vector<1x64x64xbf16>, vector<1x64x64xbf16>, vector<1x64x64xbf16>, vector<1x64x64xbf16> -> vector<1x64x512xbf16>
    %226 = vector.shape_cast %225 : vector<1x64x512xbf16> to vector<64x512xbf16>
    %c0_76 = arith.constant 0 : index
    %c0_77 = arith.constant 0 : index
    %c0_78 = arith.constant 0 : index
    %227 = vector.load %arg10[%c0_76, %c0_77, %c0_78] : memref<1x512x64xbf16, #tpu.memory_space<vmem>>, vector<1x512x64xbf16>
    %228 = vector.shape_cast %227 : vector<1x512x64xbf16> to vector<512x64xbf16>
    %cst_79 = arith.constant dense<0.000000e+00> : vector<64x64xf32>
    %229 = tpu.matmul %226, %228, %cst_79 {dimension_numbers = #tpu.dot_dimension_numbers<[1], [0], [0], [1], [0, 0, 1, 1], [], []>} : vector<64x512xbf16>, vector<512x64xbf16>, vector<64x64xf32> -> vector<64x64xf32>
    %230 = arith.addf %14, %229 : vector<64x64xf32>
    %c0_80 = arith.constant 0 : index
    %c0_81 = arith.constant 0 : index
    %c0_82 = arith.constant 0 : index
    %231 = vector.load %arg11[%c0_80, %c0_81, %c0_82] : memref<1x1x64xf32, #tpu.memory_space<vmem>>, vector<1x1x64xf32>
    %232 = vector.shape_cast %231 : vector<1x1x64xf32> to vector<1x64xf32>
    %233 = vector.broadcast %232 : vector<1x64xf32> to vector<64x64xf32>
    %234 = arith.addf %230, %233 : vector<64x64xf32>
    %c0_83 = arith.constant 0 : index
    %c0_84 = arith.constant 0 : index
    %c0_85 = arith.constant 0 : index
    %235 = vector.load %arg12[%c0_83, %c0_84, %c0_85] : memref<1x1x64xf32, #tpu.memory_space<vmem>>, vector<1x1x64xf32>
    %236 = vector.shape_cast %235 : vector<1x1x64xf32> to vector<1x64xf32>
    %c0_86 = arith.constant 0 : index
    %c0_87 = arith.constant 0 : index
    %c0_88 = arith.constant 0 : index
    %237 = vector.load %arg13[%c0_86, %c0_87, %c0_88] : memref<1x1x64xf32, #tpu.memory_space<vmem>>, vector<1x1x64xf32>
    %238 = vector.shape_cast %237 : vector<1x1x64xf32> to vector<1x64xf32>
    %cst_89 = arith.constant dense<0.000000e+00> : vector<64xf32>
    %239 = vector.multi_reduction <add>, %234, %cst_89 [1] : vector<64x64xf32> to vector<64xf32>
    %240 = vector.shape_cast %239 : vector<64xf32> to vector<64x1xf32>
    %cst_90 = arith.constant 6.400000e+01 : f32
    %241 = vector.broadcast %cst_90 : f32 to vector<64x1xf32>
    %242 = arith.divf %240, %241 : vector<64x1xf32>
    %243 = vector.broadcast %242 : vector<64x1xf32> to vector<64x64xf32>
    %244 = arith.subf %234, %243 : vector<64x64xf32>
    %245 = arith.mulf %244, %244 : vector<64x64xf32>
    %cst_91 = arith.constant dense<0.000000e+00> : vector<64xf32>
    %246 = vector.multi_reduction <add>, %245, %cst_91 [1] : vector<64x64xf32> to vector<64xf32>
    %247 = vector.shape_cast %246 : vector<64xf32> to vector<64x1xf32>
    %cst_92 = arith.constant 6.400000e+01 : f32
    %248 = vector.broadcast %cst_92 : f32 to vector<64x1xf32>
    %249 = arith.divf %247, %248 : vector<64x1xf32>
    %250 = vector.broadcast %242 : vector<64x1xf32> to vector<64x64xf32>
    %251 = arith.subf %234, %250 : vector<64x64xf32>
    %cst_93 = arith.constant 9.99999974E-6 : f32
    %252 = vector.broadcast %cst_93 : f32 to vector<64x1xf32>
    %253 = arith.addf %249, %252 : vector<64x1xf32>
    %254 = math.rsqrt %253 : vector<64x1xf32>
    %255 = vector.broadcast %254 : vector<64x1xf32> to vector<64x64xf32>
    %256 = arith.mulf %251, %255 : vector<64x64xf32>
    %257 = vector.broadcast %236 : vector<1x64xf32> to vector<64x64xf32>
    %258 = arith.mulf %256, %257 : vector<64x64xf32>
    %259 = vector.broadcast %238 : vector<1x64xf32> to vector<64x64xf32>
    %260 = arith.addf %258, %259 : vector<64x64xf32>
    %261 = arith.truncf %260 : vector<64x64xf32> to vector<64x64xbf16>
    %c0_94 = arith.constant 0 : index
    %c0_95 = arith.constant 0 : index
    %c0_96 = arith.constant 0 : index
    %262 = vector.load %arg14[%c0_94, %c0_95, %c0_96] : memref<1x64x128xbf16, #tpu.memory_space<vmem>>, vector<1x64x128xbf16>
    %263 = vector.shape_cast %262 : vector<1x64x128xbf16> to vector<64x128xbf16>
    %cst_97 = arith.constant dense<0.000000e+00> : vector<64x128xf32>
    %264 = tpu.matmul %261, %263, %cst_97 {dimension_numbers = #tpu.dot_dimension_numbers<[1], [0], [0], [1], [0, 0, 1, 1], [], []>} : vector<64x64xbf16>, vector<64x128xbf16>, vector<64x128xf32> -> vector<64x128xf32>
    %c0_98 = arith.constant 0 : index
    %c0_99 = arith.constant 0 : index
    %c0_100 = arith.constant 0 : index
    %265 = vector.load %arg15[%c0_98, %c0_99, %c0_100] : memref<1x1x128xf32, #tpu.memory_space<vmem>>, vector<1x1x128xf32>
    %266 = vector.shape_cast %265 : vector<1x1x128xf32> to vector<1x128xf32>
    %267 = vector.broadcast %266 : vector<1x128xf32> to vector<64x128xf32>
    %268 = arith.addf %264, %267 : vector<64x128xf32>
    %cst_101 = arith.constant 5.000000e-01 : f32
    %269 = vector.broadcast %cst_101 : f32 to vector<64x128xf32>
    %270 = arith.mulf %269, %268 : vector<64x128xf32>
    %cst_102 = arith.constant 4.471500e-02 : f32
    %271 = vector.broadcast %cst_102 : f32 to vector<64x128xf32>
    %272 = arith.mulf %271, %268 : vector<64x128xf32>
    %273 = arith.mulf %272, %268 : vector<64x128xf32>
    %274 = arith.mulf %273, %268 : vector<64x128xf32>
    %275 = arith.addf %268, %274 : vector<64x128xf32>
    %cst_103 = arith.constant 0.797884583 : f32
    %276 = vector.broadcast %cst_103 : f32 to vector<64x128xf32>
    %277 = arith.mulf %276, %275 : vector<64x128xf32>
    %278 = math.tanh %277 : vector<64x128xf32>
    %cst_104 = arith.constant 1.000000e+00 : f32
    %279 = vector.broadcast %cst_104 : f32 to vector<64x128xf32>
    %280 = arith.addf %279, %278 : vector<64x128xf32>
    %281 = arith.mulf %270, %280 : vector<64x128xf32>
    %282 = arith.truncf %281 : vector<64x128xf32> to vector<64x128xbf16>
    %c0_105 = arith.constant 0 : index
    %c0_106 = arith.constant 0 : index
    %c0_107 = arith.constant 0 : index
    %283 = vector.load %arg16[%c0_105, %c0_106, %c0_107] : memref<1x128x64xbf16, #tpu.memory_space<vmem>>, vector<1x128x64xbf16>
    %284 = vector.shape_cast %283 : vector<1x128x64xbf16> to vector<128x64xbf16>
    %cst_108 = arith.constant dense<0.000000e+00> : vector<64x64xf32>
    %285 = tpu.matmul %282, %284, %cst_108 {dimension_numbers = #tpu.dot_dimension_numbers<[1], [0], [0], [1], [0, 0, 1, 1], [], []>} : vector<64x128xbf16>, vector<128x64xbf16>, vector<64x64xf32> -> vector<64x64xf32>
    %286 = arith.addf %234, %285 : vector<64x64xf32>
    %c0_109 = arith.constant 0 : index
    %c0_110 = arith.constant 0 : index
    %c0_111 = arith.constant 0 : index
    %287 = vector.load %arg17[%c0_109, %c0_110, %c0_111] : memref<1x1x64xf32, #tpu.memory_space<vmem>>, vector<1x1x64xf32>
    %288 = vector.shape_cast %287 : vector<1x1x64xf32> to vector<1x64xf32>
    %289 = vector.broadcast %288 : vector<1x64xf32> to vector<64x64xf32>
    %290 = arith.addf %286, %289 : vector<64x64xf32>
    %c0_112 = arith.constant 0 : index
    %c0_113 = arith.constant 0 : index
    %291 = vector.load %arg24[%c0_112, %c0_113] : memref<64x64xf32, #tpu.memory_space<vmem>>, vector<64x64xf32>
    tpu.vector_store %arg24[%c0_112, %c0_113], %290 {strides = array<i32>} : memref<64x64xf32, #tpu.memory_space<vmem>>, vector<64x64xf32>,
    %c5_i32 = arith.constant 5 : i32
    %292 = arith.cmpi eq, %arg1, %c5_i32 : i32
    %293 = arith.extui %292 : i1 to i32
    %c0_i32_114 = arith.constant 0 : i32
    %294 = arith.cmpi ne, %293, %c0_i32_114 : i32
    scf.if %294 {
      %295 = vector.shape_cast %290 : vector<64x64xf32> to vector<1x64x64xf32>
      %296 = vector.broadcast %10 : vector<1x64x1xf32> to vector<1x64x64xf32>
      %297 = arith.mulf %295, %296 : vector<1x64x64xf32>
      %cst_115 = arith.constant dense<0.000000e+00> : vector<1x64xf32>
      %298 = vector.multi_reduction <add>, %297, %cst_115 [1] : vector<1x64x64xf32> to vector<1x64xf32>
      %cst_116 = arith.constant 2.000000e-02 : f32
      %299 = vector.broadcast %cst_116 : f32 to vector<1x64xf32>
      %300 = arith.mulf %298, %299 : vector<1x64xf32>
      %c0_117 = arith.constant 0 : index
      %c0_118 = arith.constant 0 : index
      %301 = vector.load %arg18[%c0_117, %c0_118] : memref<64x16xf32, #tpu.memory_space<vmem>>, vector<64x16xf32>
      %cst_119 = arith.constant dense<0.000000e+00> : vector<1x16xf32>
      %302 = tpu.matmul %300, %301, %cst_119 {dimension_numbers = #tpu.dot_dimension_numbers<[1], [0], [0], [1], [0, 0, 1, 1], [], []>} : vector<1x64xf32>, vector<64x16xf32>, vector<1x16xf32> -> vector<1x16xf32>
      %c0_120 = arith.constant 0 : index
      %c0_121 = arith.constant 0 : index
      %303 = vector.load %arg19[%c0_120, %c0_121] : memref<1x16xf32, #tpu.memory_space<vmem>>, vector<1x16xf32>
      %304 = arith.addf %302, %303 : vector<1x16xf32>
      %cst_122 = arith.constant 0.000000e+00 : f32
      %305 = vector.broadcast %cst_122 : f32 to vector<1x16xf32>
      %306 = arith.maximumf %304, %305 : vector<1x16xf32>
      %c0_123 = arith.constant 0 : index
      %c0_124 = arith.constant 0 : index
      %307 = vector.load %arg20[%c0_123, %c0_124] : memref<16x1xf32, #tpu.memory_space<vmem>>, vector<16x1xf32>
      %cst_125 = arith.constant dense<0.000000e+00> : vector<1x1xf32>
      %308 = tpu.matmul %306, %307, %cst_125 {dimension_numbers = #tpu.dot_dimension_numbers<[1], [0], [0], [1], [0, 0, 1, 1], [], []>} : vector<1x16xf32>, vector<16x1xf32>, vector<1x1xf32> -> vector<1x1xf32>
      %c0_126 = arith.constant 0 : index
      %c0_127 = arith.constant 0 : index
      %309 = vector.load %arg21[%c0_126, %c0_127] : memref<1x1xf32, #tpu.memory_space<vmem>>, vector<1x1xf32>
      %310 = arith.addf %308, %309 : vector<1x1xf32>
      %311 = arith.negf %310 : vector<1x1xf32>
      %312 = math.exp %311 : vector<1x1xf32>
      %cst_128 = arith.constant 1.000000e+00 : f32
      %313 = vector.broadcast %cst_128 : f32 to vector<1x1xf32>
      %314 = arith.addf %313, %312 : vector<1x1xf32>
      %315 = arith.divf %313, %314 : vector<1x1xf32>
      %316 = vector.shape_cast %315 : vector<1x1xf32> to vector<1x1x1xf32>
      %c0_129 = arith.constant 0 : index
      %c0_130 = arith.constant 0 : index
      %c0_131 = arith.constant 0 : index
      %317 = vector.load %arg22[%c0_129, %c0_130, %c0_131] : memref<1x1x1xf32, #tpu.memory_space<vmem>>, vector<1x1x1xf32>
      tpu.vector_store %arg22[%c0_129, %c0_130, %c0_131], %316 {strides = array<i32>} : memref<1x1x1xf32, #tpu.memory_space<vmem>>, vector<1x1x1xf32>,
    } else {
    }
    return
  }
  func.func @transform_0(%arg0: i32, %arg1: i32) -> (i32, i32, i32) {
    %c0_i32 = arith.constant 0 : i32
    %c0_i32_0 = arith.constant 0 : i32
    %c0_i32_1 = arith.constant 0 : i32
    return %arg0, %c0_i32, %c0_i32_0 : i32, i32, i32
  }
  func.func @transform_1(%arg0: i32, %arg1: i32) -> (i32, i32) {
    %c0_i32 = arith.constant 0 : i32
    %c0_i32_0 = arith.constant 0 : i32
    %c0_i32_1 = arith.constant 0 : i32
    return %c0_i32, %c0_i32_0 : i32, i32
  }
  func.func @transform_2(%arg0: i32, %arg1: i32) -> (i32, i32) {
    %c0_i32 = arith.constant 0 : i32
    %c0_i32_0 = arith.constant 0 : i32
    %c0_i32_1 = arith.constant 0 : i32
    return %c0_i32, %c0_i32_0 : i32, i32
  }
  func.func @transform_3(%arg0: i32, %arg1: i32) -> (i32, i32, i32) {
    %c0_i32 = arith.constant 0 : i32
    %c0_i32_0 = arith.constant 0 : i32
    %c0_i32_1 = arith.constant 0 : i32
    return %arg1, %c0_i32, %c0_i32_0 : i32, i32, i32
  }
  func.func @transform_4(%arg0: i32, %arg1: i32) -> (i32, i32, i32) {
    %c0_i32 = arith.constant 0 : i32
    %c0_i32_0 = arith.constant 0 : i32
    %c0_i32_1 = arith.constant 0 : i32
    return %arg1, %c0_i32, %c0_i32_0 : i32, i32, i32
  }
  func.func @transform_5(%arg0: i32, %arg1: i32) -> (i32, i32, i32) {
    %c0_i32 = arith.constant 0 : i32
    %c0_i32_0 = arith.constant 0 : i32
    %c0_i32_1 = arith.constant 0 : i32
    return %arg1, %c0_i32, %c0_i32_0 : i32, i32, i32
  }
  func.func @transform_6(%arg0: i32, %arg1: i32) -> (i32, i32, i32) {
    %c0_i32 = arith.constant 0 : i32
    %c0_i32_0 = arith.constant 0 : i32
    %c0_i32_1 = arith.constant 0 : i32
    return %arg1, %c0_i32, %c0_i32_0 : i32, i32, i32
  }
  func.func @transform_7(%arg0: i32, %arg1: i32) -> (i32, i32, i32) {
    %c0_i32 = arith.constant 0 : i32
    %c0_i32_0 = arith.constant 0 : i32
    %c0_i32_1 = arith.constant 0 : i32
    return %arg1, %c0_i32, %c0_i32_0 : i32, i32, i32
  }
  func.func @transform_8(%arg0: i32, %arg1: i32) -> (i32, i32, i32) {
    %c0_i32 = arith.constant 0 : i32
    %c0_i32_0 = arith.constant 0 : i32
    %c0_i32_1 = arith.constant 0 : i32
    return %arg1, %c0_i32, %c0_i32_0 : i32, i32, i32
  }
  func.func @transform_9(%arg0: i32, %arg1: i32) -> (i32, i32, i32) {
    %c0_i32 = arith.constant 0 : i32
    %c0_i32_0 = arith.constant 0 : i32
    %c0_i32_1 = arith.constant 0 : i32
    return %arg1, %c0_i32, %c0_i32_0 : i32, i32, i32
  }
  func.func @transform_10(%arg0: i32, %arg1: i32) -> (i32, i32, i32) {
    %c0_i32 = arith.constant 0 : i32
    %c0_i32_0 = arith.constant 0 : i32
    %c0_i32_1 = arith.constant 0 : i32
    return %arg1, %c0_i32, %c0_i32_0 : i32, i32, i32
  }
  func.func @transform_11(%arg0: i32, %arg1: i32) -> (i32, i32, i32) {
    %c0_i32 = arith.constant 0 : i32
    %c0_i32_0 = arith.constant 0 : i32
    %c0_i32_1 = arith.constant 0 : i32
    return %arg1, %c0_i32, %c0_i32_0 : i32, i32, i32
  }
  func.func @transform_12(%arg0: i32, %arg1: i32) -> (i32, i32, i32) {
    %c0_i32 = arith.constant 0 : i32
    %c0_i32_0 = arith.constant 0 : i32
    %c0_i32_1 = arith.constant 0 : i32
    return %arg1, %c0_i32, %c0_i32_0 : i32, i32, i32
  }
  func.func @transform_13(%arg0: i32, %arg1: i32) -> (i32, i32, i32) {
    %c0_i32 = arith.constant 0 : i32
    %c0_i32_0 = arith.constant 0 : i32
    %c0_i32_1 = arith.constant 0 : i32
    return %arg1, %c0_i32, %c0_i32_0 : i32, i32, i32
  }
  func.func @transform_14(%arg0: i32, %arg1: i32) -> (i32, i32, i32) {
    %c0_i32 = arith.constant 0 : i32
    %c0_i32_0 = arith.constant 0 : i32
    %c0_i32_1 = arith.constant 0 : i32
    return %arg1, %c0_i32, %c0_i32_0 : i32, i32, i32
  }
  func.func @transform_15(%arg0: i32, %arg1: i32) -> (i32, i32, i32) {
    %c0_i32 = arith.constant 0 : i32
    %c0_i32_0 = arith.constant 0 : i32
    %c0_i32_1 = arith.constant 0 : i32
    return %arg1, %c0_i32, %c0_i32_0 : i32, i32, i32
  }
  func.func @transform_16(%arg0: i32, %arg1: i32) -> (i32, i32) {
    %c0_i32 = arith.constant 0 : i32
    %c0_i32_0 = arith.constant 0 : i32
    %c0_i32_1 = arith.constant 0 : i32
    return %c0_i32, %c0_i32_0 : i32, i32
  }
  func.func @transform_17(%arg0: i32, %arg1: i32) -> (i32, i32) {
    %c0_i32 = arith.constant 0 : i32
    %c0_i32_0 = arith.constant 0 : i32
    %c0_i32_1 = arith.constant 0 : i32
    return %c0_i32, %c0_i32_0 : i32, i32
  }
  func.func @transform_18(%arg0: i32, %arg1: i32) -> (i32, i32) {
    %c0_i32 = arith.constant 0 : i32
    %c0_i32_0 = arith.constant 0 : i32
    %c0_i32_1 = arith.constant 0 : i32
    return %c0_i32, %c0_i32_0 : i32, i32
  }
  func.func @transform_19(%arg0: i32, %arg1: i32) -> (i32, i32) {
    %c0_i32 = arith.constant 0 : i32
    %c0_i32_0 = arith.constant 0 : i32
    %c0_i32_1 = arith.constant 0 : i32
    return %c0_i32, %c0_i32_0 : i32, i32
  }
  func.func @transform_20(%arg0: i32, %arg1: i32) -> (i32, i32, i32) {
    %c0_i32 = arith.constant 0 : i32
    %c0_i32_0 = arith.constant 0 : i32
    %c0_i32_1 = arith.constant 0 : i32
    return %arg0, %c0_i32, %c0_i32_0 : i32, i32, i32
  }
  func.func @transform_21(%arg0: i32, %arg1: i32) -> (i32, i32, i32, i32, i32) {
    %c0_i32 = arith.constant 0 : i32
    %c0_i32_0 = arith.constant 0 : i32
    %c0_i32_1 = arith.constant 0 : i32
    %c0_i32_2 = arith.constant 0 : i32
    return %arg0, %arg1, %c0_i32, %c0_i32_0, %c0_i32_1 : i32, i32, i32, i32, i32
  }
}

</mosaic_0001>

<llo_original>
// kernel: cbvit_forward.1
$region0: #{cbvit_forward.1}
  #allocation0 [shape = 'u32[]', space=smem, size = 0x4, offset = 0x4, fixed_abs, tag = 'smem constant byte address 0x4 - core index']
  #allocation1 [shape = 'u32[144,128]{1,0:T(1,128)}', space=vmem, size = 0x12000, scoped, tag = 'internal scratch']
  #allocation2 [shape = 'f32[64,64]{1,0:T(8,128)}', space=vmem, size = 0x8000, scoped, tag = 'scratch operand']
  #allocation3 [shape = 'f32[1,1]{1,0:T(1,128)S(1)}', space=vmem, size = 0x200, scoped, tag = 'scoped memory for cbvit_forward.1']
  %s0 = inlined_call_operand.vmem [shape: bf16[2,64,32], index: 0, kind: input, shape index: {}]
  %s1 = inlined_call_operand.vmem [shape: bf16[32,64], index: 1, kind: input, shape index: {}]
  %s2 = inlined_call_operand.vmem [shape: f32[64,64], index: 2, kind: input, shape index: {}]
  %s3 = inlined_call_operand.vmem [shape: f32[6,1,64], index: 3, kind: input, shape index: {}]
  %s4 = inlined_call_operand.vmem [shape: f32[6,1,64], index: 4, kind: input, shape index: {}]
  %s5 = inlined_call_operand.vmem [shape: bf16[6,64,512], index: 5, kind: input, shape index: {}]
  %s6 = inlined_call_operand.vmem [shape: bf16[6,64,512], index: 6, kind: input, shape index: {}]
  %s7 = inlined_call_operand.vmem [shape: bf16[6,64,512], index: 7, kind: input, shape index: {}]
  %s8 = inlined_call_operand.vmem [shape: bf16[6,512,64], index: 8, kind: input, shape index: {}]
  %s9 = inlined_call_operand.vmem [shape: f32[6,1,64], index: 9, kind: input, shape index: {}]
  %s10 = inlined_call_operand.vmem [shape: f32[6,1,64], index: 10, kind: input, shape index: {}]
  %s11 = inlined_call_operand.vmem [shape: f32[6,1,64], index: 11, kind: input, shape index: {}]
  %s12 = inlined_call_operand.vmem [shape: bf16[6,64,128], index: 12, kind: input, shape index: {}]
  %s13 = inlined_call_operand.vmem [shape: f32[6,1,128], index: 13, kind: input, shape index: {}]
  %s14 = inlined_call_operand.vmem [shape: bf16[6,128,64], index: 14, kind: input, shape index: {}]
  %s15 = inlined_call_operand.vmem [shape: f32[6,1,64], index: 15, kind: input, shape index: {}]
  %s16 = inlined_call_operand.vmem [shape: f32[64,16], index: 16, kind: input, shape index: {}]
  %s17 = inlined_call_operand.vmem [shape: f32[1,16], index: 17, kind: input, shape index: {}]
  %s18 = inlined_call_operand.vmem [shape: f32[16,1], index: 18, kind: input, shape index: {}]
  %s19 = inlined_call_operand.<no memory space> [shape: f32[1,1], index: 19, kind: input, shape index: {}]
  %s20 = inlined_call_operand.vmem [shape: f32[2,1,1], index: 20, kind: output, shape index: {0}]
  %s21 = inlined_call_operand.vmem [shape: bf16[2,6,4,64,128], index: 21, kind: output, shape index: {1}]
  %22 = xla_tuple %s20, %s21
  %s23 = sld [smem:[#allocation0]]
  $region129: #{cbvit_forward.1} parent=0
    _
  %s25 = ssub.s32 1, %s23
  %s26 = scalar_select 0, %s25, %s23
  %v27 = vstv %s19
  %28 = vst [vmem:[#allocation3] sm:$0x1] %v27
  loop: start=0, step=1, limit=14
  $region2: #{cbvit_forward.1} parent=0 // loop_pre_header
    _
  $region3: #{cbvit_forward.1} parent=0 // loop_header
    %s30 = sphi 0, %s34
    %p31 = scmp.ge.s32.totalorder %s30, 14
    %s37 = sphi 0, %s49
    %s38 = sphi 0, %s45
    %s39 = sphi 0, %s37
    %s40 = sphi 0, %s38
    %s41 = sphi 0, %s39
    %s42 = sphi 0, %s40
    %s52 = sphi 0, %s54
    %s55 = sphi 0, %s52
    %s56 = sphi 0, %s55
    %s72 = sphi 0, %s56
    %s76 = sphi 0, %s76
    %s78 = sphi 0, %s76
    %s79 = sphi 0, %s78
    %s93 = sphi 0, %s79
    %s97 = sphi 0, %s97
    %s99 = sphi 0, %s97
    %s100 = sphi 0, %s99
    %s114 = sphi 0, %s100
    %s120 = sphi 0, %s122
    %s123 = sphi 0, %s120
    %s124 = sphi 0, %s123
    %s140 = sphi 0, %s124
    %s146 = sphi 0, %s148
    %s149 = sphi 0, %s146
    %s150 = sphi 0, %s149
    %s166 = sphi 0, %s150
    %s172 = sphi 0, %s174
    %s175 = sphi 0, %s172
    %s176 = sphi 0, %s175
    %s192 = sphi 0, %s176
    %s198 = sphi 0, %s200
    %s201 = sphi 0, %s198
    %s202 = sphi 0, %s201
    %s218 = sphi 0, %s202
    %s224 = sphi 0, %s226
    %s227 = sphi 0, %s224
    %s228 = sphi 0, %s227
    %s244 = sphi 0, %s228
    %s250 = sphi 0, %s252
    %s253 = sphi 0, %s250
    %s254 = sphi 0, %s253
    %s270 = sphi 0, %s254
    %s276 = sphi 0, %s278
    %s279 = sphi 0, %s276
    %s280 = sphi 0, %s279
    %s296 = sphi 0, %s280
    %s302 = sphi 0, %s304
    %s305 = sphi 0, %s302
    %s306 = sphi 0, %s305
    %s322 = sphi 0, %s306
    %s328 = sphi 0, %s330
    %s331 = sphi 0, %s328
    %s332 = sphi 0, %s331
    %s348 = sphi 0, %s332
    %s354 = sphi 0, %s356
    %s357 = sphi 0, %s354
    %s358 = sphi 0, %s357
    %s374 = sphi 0, %s358
    %s380 = sphi 0, %s382
    %s383 = sphi 0, %s380
    %s384 = sphi 0, %s383
    %s400 = sphi 0, %s384
    %s406 = sphi 0, %s408
    %s409 = sphi 0, %s406
    %s410 = sphi 0, %s409
    %s426 = sphi 0, %s410
    %s432 = sphi 0, %s434
    %s435 = sphi 0, %s432
    %s436 = sphi 0, %s435
    %s452 = sphi 0, %s436
    %s456 = sphi 0, %s456
    %s458 = sphi 0, %s456
    %s459 = sphi 0, %s458
    %s473 = sphi 0, %s459
    %s477 = sphi 0, %s477
    %s479 = sphi 0, %s477
    %s480 = sphi 0, %s479
    %s494 = sphi 0, %s480
    %s498 = sphi 0, %s498
    %s500 = sphi 0, %s498
    %s501 = sphi 0, %s500
    %s515 = sphi 0, %s501
    %s519 = sphi 0, %s519
    %s521 = sphi 0, %s519
    %s522 = sphi 0, %s521
    %s536 = sphi 0, %s522
    %s542 = sphi 0, %s544
    %s545 = sphi 0, %s542
    %s546 = sphi 0, %s545
    %s562 = sphi 0, %s546
    %s570 = sphi 0, %s572
    %s573 = sphi 0, %s570
    %s574 = sphi 0, %s573
    %s590 = sphi 0, %s574
  $region4: #{cbvit_forward.1} parent=0 // loop_header_branch
    %33 = sbr.rel (%p31) target = $region8
  $region5: #{cbvit_forward.1} parent=0 // loop_body
    %s35 = ssub.s32 %s30, 1
    %s36 = ssub.s32 %s30, 2
    %s43 = sadd.s32 1, %s38
    %p44 = scmp.ge.s32.totalorder %s43, 6
    %s45 = scalar_select %p44, 0, %s43
    %s46 = sadd.s32 1, %s37
    %s47 = scalar_select %p44, %s46, %s37
    %p48 = scmp.ge.s32.totalorder %s47, 2
    %s49 = scalar_select %p48, 0, %s47
    %s50 = ssub.s32 %s37, %s49
    %p51 = scmp.eq.s32.totalorder %s50, 0
    %s53 = sadd.s32 %s52, 1
    %s54 = scalar_select %p51, %s52, %s53
    %p57 = pneg %p51
    %p58 = scmp.eq.s32.totalorder %s30, 11
    %p59 = por %p57, %p58
    %p60 = scmp.ne.s32.totalorder %s52, %s55
    %p61 = scmp.eq.s32.totalorder %s30, 0
    %p62 = por %p60, %p61
    %p63 = scmp.ne.s32.totalorder %s52, %s55
    %p64 = scmp.eq.s32.totalorder %s35, 11
    %p65 = por %p63, %p64
    %p66 = scmp.ne.s32.totalorder %s55, %s56
    %p67 = scmp.eq.s32.totalorder %s35, 0
    %p68 = por %p66, %p67
    %p69 = scmp.ne.s32.totalorder %s55, %s56
    %p70 = scmp.eq.s32.totalorder %s36, 11
    %p71 = por %p69, %p70
    %p73 = scmp.ne.s32.totalorder %s56, %s72
    %p74 = scmp.eq.s32.totalorder %s36, 0
    %p75 = por %p73, %p74
    %s77 = sadd.s32 %s76, 1
    %p80 = scmp.eq.s32.totalorder %s30, 11
    %p81 = scmp.ne.s32.totalorder %s76, %s78
    %p82 = scmp.eq.s32.totalorder %s30, 0
    %p83 = por %p81, %p82
    %p84 = scmp.ne.s32.totalorder %s76, %s78
    %p85 = scmp.eq.s32.totalorder %s35, 11
    %p86 = por %p84, %p85
    %p87 = scmp.ne.s32.totalorder %s78, %s79
    %p88 = scmp.eq.s32.totalorder %s35, 0
    %p89 = por %p87, %p88
    %p90 = scmp.ne.s32.totalorder %s78, %s79
    %p91 = scmp.eq.s32.totalorder %s36, 11
    %p92 = por %p90, %p91
    %p94 = scmp.ne.s32.totalorder %s79, %s93
    %p95 = scmp.eq.s32.totalorder %s36, 0
    %p96 = por %p94, %p95
    %s98 = sadd.s32 %s97, 1
    %p101 = scmp.eq.s32.totalorder %s30, 11
    %p102 = scmp.ne.s32.totalorder %s97, %s99
    %p103 = scmp.eq.s32.totalorder %s30, 0
    %p104 = por %p102, %p103
    %p105 = scmp.ne.s32.totalorder %s97, %s99
    %p106 = scmp.eq.s32.totalorder %s35, 11
    %p107 = por %p105, %p106
    %p108 = scmp.ne.s32.totalorder %s99, %s100
    %p109 = scmp.eq.s32.totalorder %s35, 0
    %p110 = por %p108, %p109
    %p111 = scmp.ne.s32.totalorder %s99, %s100
    %p112 = scmp.eq.s32.totalorder %s36, 11
    %p113 = por %p111, %p112
    %p115 = scmp.ne.s32.totalorder %s100, %s114
    %p116 = scmp.eq.s32.totalorder %s36, 0
    %p117 = por %p115, %p116
    %s118 = ssub.s32 %s38, %s45
    %p119 = scmp.eq.s32.totalorder %s118, 0
    %s121 = sadd.s32 %s120, 1
    %s122 = scalar_select %p119, %s120, %s121
    %p125 = pneg %p119
    %p126 = scmp.eq.s32.totalorder %s30, 11
    %p127 = por %p125, %p126
    %p128 = scmp.ne.s32.totalorder %s120, %s123
    %p129 = scmp.eq.s32.totalorder %s30, 0
    %p130 = por %p128, %p129
    %p131 = scmp.ne.s32.totalorder %s120, %s123
    %p132 = scmp.eq.s32.totalorder %s35, 11
    %p133 = por %p131, %p132
    %p134 = scmp.ne.s32.totalorder %s123, %s124
    %p135 = scmp.eq.s32.totalorder %s35, 0
    %p136 = por %p134, %p135
    %p137 = scmp.ne.s32.totalorder %s123, %s124
    %p138 = scmp.eq.s32.totalorder %s36, 11
    %p139 = por %p137, %p138
    %p141 = scmp.ne.s32.totalorder %s124, %s140
    %p142 = scmp.eq.s32.totalorder %s36, 0
    %p143 = por %p141, %p142
    %s144 = ssub.s32 %s38, %s45
    %p145 = scmp.eq.s32.totalorder %s144, 0
    %s147 = sadd.s32 %s146, 1
    %s148 = scalar_select %p145, %s146, %s147
    %p151 = pneg %p145
    %p152 = scmp.eq.s32.totalorder %s30, 11
    %p153 = por %p151, %p152
    %p154 = scmp.ne.s32.totalorder %s146, %s149
    %p155 = scmp.eq.s32.totalorder %s30, 0
    %p156 = por %p154, %p155
    %p157 = scmp.ne.s32.totalorder %s146, %s149
    %p158 = scmp.eq.s32.totalorder %s35, 11
    %p159 = por %p157, %p158
    %p160 = scmp.ne.s32.totalorder %s149, %s150
    %p161 = scmp.eq.s32.totalorder %s35, 0
    %p162 = por %p160, %p161
    %p163 = scmp.ne.s32.totalorder %s149, %s150
    %p164 = scmp.eq.s32.totalorder %s36, 11
    %p165 = por %p163, %p164
    %p167 = scmp.ne.s32.totalorder %s150, %s166
    %p168 = scmp.eq.s32.totalorder %s36, 0
    %p169 = por %p167, %p168
    %s170 = ssub.s32 %s38, %s45
    %p171 = scmp.eq.s32.totalorder %s170, 0
    %s173 = sadd.s32 %s172, 1
    %s174 = scalar_select %p171, %s172, %s173
    %p177 = pneg %p171
    %p178 = scmp.eq.s32.totalorder %s30, 11
    %p179 = por %p177, %p178
    %p180 = scmp.ne.s32.totalorder %s172, %s175
    %p181 = scmp.eq.s32.totalorder %s30, 0
    %p182 = por %p180, %p181
    %p183 = scmp.ne.s32.totalorder %s172, %s175
    %p184 = scmp.eq.s32.totalorder %s35, 11
    %p185 = por %p183, %p184
    %p186 = scmp.ne.s32.totalorder %s175, %s176
    %p187 = scmp.eq.s32.totalorder %s35, 0
    %p188 = por %p186, %p187
    %p189 = scmp.ne.s32.totalorder %s175, %s176
    %p190 = scmp.eq.s32.totalorder %s36, 11
    %p191 = por %p189, %p190
    %p193 = scmp.ne.s32.totalorder %s176, %s192
    %p194 = scmp.eq.s32.totalorder %s36, 0
    %p195 = por %p193, %p194
    %s196 = ssub.s32 %s38, %s45
    %p197 = scmp.eq.s32.totalorder %s196, 0
    %s199 = sadd.s32 %s198, 1
    %s200 = scalar_select %p197, %s198, %s199
    %p203 = pneg %p197
    %p204 = scmp.eq.s32.totalorder %s30, 11
    %p205 = por %p203, %p204
    %p206 = scmp.ne.s32.totalorder %s198, %s201
    %p207 = scmp.eq.s32.totalorder %s30, 0
    %p208 = por %p206, %p207
    %p209 = scmp.ne.s32.totalorder %s198, %s201
    %p210 = scmp.eq.s32.totalorder %s35, 11
    %p211 = por %p209, %p210
    %p212 = scmp.ne.s32.totalorder %s201, %s202
    %p213 = scmp.eq.s32.totalorder %s35, 0
    %p214 = por %p212, %p213
    %p215 = scmp.ne.s32.totalorder %s201, %s202
    %p216 = scmp.eq.s32.totalorder %s36, 11
    %p217 = por %p215, %p216
    %p219 = scmp.ne.s32.totalorder %s202, %s218
    %p220 = scmp.eq.s32.totalorder %s36, 0
    %p221 = por %p219, %p220
    %s222 = ssub.s32 %s38, %s45
    %p223 = scmp.eq.s32.totalorder %s222, 0
    %s225 = sadd.s32 %s224, 1
    %s226 = scalar_select %p223, %s224, %s225
    %p229 = pneg %p223
    %p230 = scmp.eq.s32.totalorder %s30, 11
    %p231 = por %p229, %p230
    %p232 = scmp.ne.s32.totalorder %s224, %s227
    %p233 = scmp.eq.s32.totalorder %s30, 0
    %p234 = por %p232, %p233
    %p235 = scmp.ne.s32.totalorder %s224, %s227
    %p236 = scmp.eq.s32.totalorder %s35, 11
    %p237 = por %p235, %p236
    %p238 = scmp.ne.s32.totalorder %s227, %s228
    %p239 = scmp.eq.s32.totalorder %s35, 0
    %p240 = por %p238, %p239
    %p241 = scmp.ne.s32.totalorder %s227, %s228
    %p242 = scmp.eq.s32.totalorder %s36, 11
    %p243 = por %p241, %p242
    %p245 = scmp.ne.s32.totalorder %s228, %s244
    %p246 = scmp.eq.s32.totalorder %s36, 0
    %p247 = por %p245, %p246
    %s248 = ssub.s32 %s38, %s45
    %p249 = scmp.eq.s32.totalorder %s248, 0
    %s251 = sadd.s32 %s250, 1
    %s252 = scalar_select %p249, %s250, %s251
    %p255 = pneg %p249
    %p256 = scmp.eq.s32.totalorder %s30, 11
    %p257 = por %p255, %p256
    %p258 = scmp.ne.s32.totalorder %s250, %s253
    %p259 = scmp.eq.s32.totalorder %s30, 0
    %p260 = por %p258, %p259
    %p261 = scmp.ne.s32.totalorder %s250, %s253
    %p262 = scmp.eq.s32.totalorder %s35, 11
    %p263 = por %p261, %p262
    %p264 = scmp.ne.s32.totalorder %s253, %s254
    %p265 = scmp.eq.s32.totalorder %s35, 0
    %p266 = por %p264, %p265
    %p267 = scmp.ne.s32.totalorder %s253, %s254
    %p268 = scmp.eq.s32.totalorder %s36, 11
    %p269 = por %p267, %p268
    %p271 = scmp.ne.s32.totalorder %s254, %s270
    %p272 = scmp.eq.s32.totalorder %s36, 0
    %p273 = por %p271, %p272
    %s274 = ssub.s32 %s38, %s45
    %p275 = scmp.eq.s32.totalorder %s274, 0
    %s277 = sadd.s32 %s276, 1
    %s278 = scalar_select %p275, %s276, %s277
    %p281 = pneg %p275
    %p282 = scmp.eq.s32.totalorder %s30, 11
    %p283 = por %p281, %p282
    %p284 = scmp.ne.s32.totalorder %s276, %s279
    %p285 = scmp.eq.s32.totalorder %s30, 0
    %p286 = por %p284, %p285
    %p287 = scmp.ne.s32.totalorder %s276, %s279
    %p288 = scmp.eq.s32.totalorder %s35, 11
    %p289 = por %p287, %p288
    %p290 = scmp.ne.s32.totalorder %s279, %s280
    %p291 = scmp.eq.s32.totalorder %s35, 0
    %p292 = por %p290, %p291
    %p293 = scmp.ne.s32.totalorder %s279, %s280
    %p294 = scmp.eq.s32.totalorder %s36, 11
    %p295 = por %p293, %p294
    %p297 = scmp.ne.s32.totalorder %s280, %s296
    %p298 = scmp.eq.s32.totalorder %s36, 0
    %p299 = por %p297, %p298
    %s300 = ssub.s32 %s38, %s45
    %p301 = scmp.eq.s32.totalorder %s300, 0
    %s303 = sadd.s32 %s302, 1
    %s304 = scalar_select %p301, %s302, %s303
    %p307 = pneg %p301
    %p308 = scmp.eq.s32.totalorder %s30, 11
    %p309 = por %p307, %p308
    %p310 = scmp.ne.s32.totalorder %s302, %s305
    %p311 = scmp.eq.s32.totalorder %s30, 0
    %p312 = por %p310, %p311
    %p313 = scmp.ne.s32.totalorder %s302, %s305
    %p314 = scmp.eq.s32.totalorder %s35, 11
    %p315 = por %p313, %p314
    %p316 = scmp.ne.s32.totalorder %s305, %s306
    %p317 = scmp.eq.s32.totalorder %s35, 0
    %p318 = por %p316, %p317
    %p319 = scmp.ne.s32.totalorder %s305, %s306
    %p320 = scmp.eq.s32.totalorder %s36, 11
    %p321 = por %p319, %p320
    %p323 = scmp.ne.s32.totalorder %s306, %s322
    %p324 = scmp.eq.s32.totalorder %s36, 0
    %p325 = por %p323, %p324
    %s326 = ssub.s32 %s38, %s45
    %p327 = scmp.eq.s32.totalorder %s326, 0
    %s329 = sadd.s32 %s328, 1
    %s330 = scalar_select %p327, %s328, %s329
    %p333 = pneg %p327
    %p334 = scmp.eq.s32.totalorder %s30, 11
    %p335 = por %p333, %p334
    %p336 = scmp.ne.s32.totalorder %s328, %s331
    %p337 = scmp.eq.s32.totalorder %s30, 0
    %p338 = por %p336, %p337
    %p339 = scmp.ne.s32.totalorder %s328, %s331
    %p340 = scmp.eq.s32.totalorder %s35, 11
    %p341 = por %p339, %p340
    %p342 = scmp.ne.s32.totalorder %s331, %s332
    %p343 = scmp.eq.s32.totalorder %s35, 0
    %p344 = por %p342, %p343
    %p345 = scmp.ne.s32.totalorder %s331, %s332
    %p346 = scmp.eq.s32.totalorder %s36, 11
    %p347 = por %p345, %p346
    %p349 = scmp.ne.s32.totalorder %s332, %s348
    %p350 = scmp.eq.s32.totalorder %s36, 0
    %p351 = por %p349, %p350
    %s352 = ssub.s32 %s38, %s45
    %p353 = scmp.eq.s32.totalorder %s352, 0
    %s355 = sadd.s32 %s354, 1
    %s356 = scalar_select %p353, %s354, %s355
    %p359 = pneg %p353
    %p360 = scmp.eq.s32.totalorder %s30, 11
    %p361 = por %p359, %p360
    %p362 = scmp.ne.s32.totalorder %s354, %s357
    %p363 = scmp.eq.s32.totalorder %s30, 0
    %p364 = por %p362, %p363
    %p365 = scmp.ne.s32.totalorder %s354, %s357
    %p366 = scmp.eq.s32.totalorder %s35, 11
    %p367 = por %p365, %p366
    %p368 = scmp.ne.s32.totalorder %s357, %s358
    %p369 = scmp.eq.s32.totalorder %s35, 0
    %p370 = por %p368, %p369
    %p371 = scmp.ne.s32.totalorder %s357, %s358
    %p372 = scmp.eq.s32.totalorder %s36, 11
    %p373 = por %p371, %p372
    %p375 = scmp.ne.s32.totalorder %s358, %s374
    %p376 = scmp.eq.s32.totalorder %s36, 0
    %p377 = por %p375, %p376
    %s378 = ssub.s32 %s38, %s45
    %p379 = scmp.eq.s32.totalorder %s378, 0
    %s381 = sadd.s32 %s380, 1
    %s382 = scalar_select %p379, %s380, %s381
    %p385 = pneg %p379
    %p386 = scmp.eq.s32.totalorder %s30, 11
    %p387 = por %p385, %p386
    %p388 = scmp.ne.s32.totalorder %s380, %s383
    %p389 = scmp.eq.s32.totalorder %s30, 0
    %p390 = por %p388, %p389
    %p391 = scmp.ne.s32.totalorder %s380, %s383
    %p392 = scmp.eq.s32.totalorder %s35, 11
    %p393 = por %p391, %p392
    %p394 = scmp.ne.s32.totalorder %s383, %s384
    %p395 = scmp.eq.s32.totalorder %s35, 0
    %p396 = por %p394, %p395
    %p397 = scmp.ne.s32.totalorder %s383, %s384
    %p398 = scmp.eq.s32.totalorder %s36, 11
    %p399 = por %p397, %p398
    %p401 = scmp.ne.s32.totalorder %s384, %s400
    %p402 = scmp.eq.s32.totalorder %s36, 0
    %p403 = por %p401, %p402
    %s404 = ssub.s32 %s38, %s45
    %p405 = scmp.eq.s32.totalorder %s404, 0
    %s407 = sadd.s32 %s406, 1
    %s408 = scalar_select %p405, %s406, %s407
    %p411 = pneg %p405
    %p412 = scmp.eq.s32.totalorder %s30, 11
    %p413 = por %p411, %p412
    %p414 = scmp.ne.s32.totalorder %s406, %s409
    %p415 = scmp.eq.s32.totalorder %s30, 0
    %p416 = por %p414, %p415
    %p417 = scmp.ne.s32.totalorder %s406, %s409
    %p418 = scmp.eq.s32.totalorder %s35, 11
    %p419 = por %p417, %p418
    %p420 = scmp.ne.s32.totalorder %s409, %s410
    %p421 = scmp.eq.s32.totalorder %s35, 0
    %p422 = por %p420, %p421
    %p423 = scmp.ne.s32.totalorder %s409, %s410
    %p424 = scmp.eq.s32.totalorder %s36, 11
    %p425 = por %p423, %p424
    %p427 = scmp.ne.s32.totalorder %s410, %s426
    %p428 = scmp.eq.s32.totalorder %s36, 0
    %p429 = por %p427, %p428
    %s430 = ssub.s32 %s38, %s45
    %p431 = scmp.eq.s32.totalorder %s430, 0
    %s433 = sadd.s32 %s432, 1
    %s434 = scalar_select %p431, %s432, %s433
    %p437 = pneg %p431
    %p438 = scmp.eq.s32.totalorder %s30, 11
    %p439 = por %p437, %p438
    %p440 = scmp.ne.s32.totalorder %s432, %s435
    %p441 = scmp.eq.s32.totalorder %s30, 0
    %p442 = por %p440, %p441
    %p443 = scmp.ne.s32.totalorder %s432, %s435
    %p444 = scmp.eq.s32.totalorder %s35, 11
    %p445 = por %p443, %p444
    %p446 = scmp.ne.s32.totalorder %s435, %s436
    %p447 = scmp.eq.s32.totalorder %s35, 0
    %p448 = por %p446, %p447
    %p449 = scmp.ne.s32.totalorder %s435, %s436
    %p450 = scmp.eq.s32.totalorder %s36, 11
    %p451 = por %p449, %p450
    %p453 = scmp.ne.s32.totalorder %s436, %s452
    %p454 = scmp.eq.s32.totalorder %s36, 0
    %p455 = por %p453, %p454
    %s457 = sadd.s32 %s456, 1
    %p460 = scmp.eq.s32.totalorder %s30, 11
    %p461 = scmp.ne.s32.totalorder %s456, %s458
    %p462 = scmp.eq.s32.totalorder %s30, 0
    %p463 = por %p461, %p462
    %p464 = scmp.ne.s32.totalorder %s456, %s458
    %p465 = scmp.eq.s32.totalorder %s35, 11
    %p466 = por %p464, %p465
    %p467 = scmp.ne.s32.totalorder %s458, %s459
    %p468 = scmp.eq.s32.totalorder %s35, 0
    %p469 = por %p467, %p468
    %p470 = scmp.ne.s32.totalorder %s458, %s459
    %p471 = scmp.eq.s32.totalorder %s36, 11
    %p472 = por %p470, %p471
    %p474 = scmp.ne.s32.totalorder %s459, %s473
    %p475 = scmp.eq.s32.totalorder %s36, 0
    %p476 = por %p474, %p475
    %s478 = sadd.s32 %s477, 1
    %p481 = scmp.eq.s32.totalorder %s30, 11
    %p482 = scmp.ne.s32.totalorder %s477, %s479
    %p483 = scmp.eq.s32.totalorder %s30, 0
    %p484 = por %p482, %p483
    %p485 = scmp.ne.s32.totalorder %s477, %s479
    %p486 = scmp.eq.s32.totalorder %s35, 11
    %p487 = por %p485, %p486
    %p488 = scmp.ne.s32.totalorder %s479, %s480
    %p489 = scmp.eq.s32.totalorder %s35, 0
    %p490 = por %p488, %p489
    %p491 = scmp.ne.s32.totalorder %s479, %s480
    %p492 = scmp.eq.s32.totalorder %s36, 11
    %p493 = por %p491, %p492
    %p495 = scmp.ne.s32.totalorder %s480, %s494
    %p496 = scmp.eq.s32.totalorder %s36, 0
    %p497 = por %p495, %p496
    %s499 = sadd.s32 %s498, 1
    %p502 = scmp.eq.s32.totalorder %s30, 11
    %p503 = scmp.ne.s32.totalorder %s498, %s500
    %p504 = scmp.eq.s32.totalorder %s30, 0
    %p505 = por %p503, %p504
    %p506 = scmp.ne.s32.totalorder %s498, %s500
    %p507 = scmp.eq.s32.totalorder %s35, 11
    %p508 = por %p506, %p507
    %p509 = scmp.ne.s32.totalorder %s500, %s501
    %p510 = scmp.eq.s32.totalorder %s35, 0
    %p511 = por %p509, %p510
    %p512 = scmp.ne.s32.totalorder %s500, %s501
    %p513 = scmp.eq.s32.totalorder %s36, 11
    %p514 = por %p512, %p513
    %p516 = scmp.ne.s32.totalorder %s501, %s515
    %p517 = scmp.eq.s32.totalorder %s36, 0
    %p518 = por %p516, %p517
    %s520 = sadd.s32 %s519, 1
    %p523 = scmp.eq.s32.totalorder %s30, 11
    %p524 = scmp.ne.s32.totalorder %s519, %s521
    %p525 = scmp.eq.s32.totalorder %s30, 0
    %p526 = por %p524, %p525
    %p527 = scmp.ne.s32.totalorder %s519, %s521
    %p528 = scmp.eq.s32.totalorder %s35, 11
    %p529 = por %p527, %p528
    %p530 = scmp.ne.s32.totalorder %s521, %s522
    %p531 = scmp.eq.s32.totalorder %s35, 0
    %p532 = por %p530, %p531
    %p533 = scmp.ne.s32.totalorder %s521, %s522
    %p534 = scmp.eq.s32.totalorder %s36, 11
    %p535 = por %p533, %p534
    %p537 = scmp.ne.s32.totalorder %s522, %s536
    %p538 = scmp.eq.s32.totalorder %s36, 0
    %p539 = por %p537, %p538
    %s540 = ssub.s32 %s37, %s49
    %p541 = scmp.eq.s32.totalorder %s540, 0
    %s543 = sadd.s32 %s542, 1
    %s544 = scalar_select %p541, %s542, %s543
    %p547 = pneg %p541
    %p548 = scmp.eq.s32.totalorder %s30, 11
    %p549 = por %p547, %p548
    %p550 = scmp.ne.s32.totalorder %s542, %s545
    %p551 = scmp.eq.s32.totalorder %s30, 0
    %p552 = por %p550, %p551
    %p553 = scmp.ne.s32.totalorder %s542, %s545
    %p554 = scmp.eq.s32.totalorder %s35, 11
    %p555 = por %p553, %p554
    %p556 = scmp.ne.s32.totalorder %s545, %s546
    %p557 = scmp.eq.s32.totalorder %s35, 0
    %p558 = por %p556, %p557
    %p559 = scmp.ne.s32.totalorder %s545, %s546
    %p560 = scmp.eq.s32.totalorder %s36, 11
    %p561 = por %p559, %p560
    %p563 = scmp.ne.s32.totalorder %s546, %s562
    %p564 = scmp.eq.s32.totalorder %s36, 0
    %p565 = por %p563, %p564
    %s566 = ssub.s32 %s37, %s49
    %s567 = ssub.s32 %s38, %s45
    %s568 = sor.u32 %s566, %s567
    %p569 = scmp.eq.s32.totalorder %s568, 0
    %s571 = sadd.s32 %s570, 1
    %s572 = scalar_select %p569, %s570, %s571
    %p575 = pneg %p569
    %p576 = scmp.eq.s32.totalorder %s30, 11
    %p577 = por %p575, %p576
    %p578 = scmp.ne.s32.totalorder %s570, %s573
    %p579 = scmp.eq.s32.totalorder %s30, 0
    %p580 = por %p578, %p579
    %p581 = scmp.ne.s32.totalorder %s570, %s573
    %p582 = scmp.eq.s32.totalorder %s35, 11
    %p583 = por %p581, %p582
    %p584 = scmp.ne.s32.totalorder %s573, %s574
    %p585 = scmp.eq.s32.totalorder %s35, 0
    %p586 = por %p584, %p585
    %p587 = scmp.ne.s32.totalorder %s573, %s574
    %p588 = scmp.eq.s32.totalorder %s36, 11
    %p589 = por %p587, %p588
    %p591 = scmp.ne.s32.totalorder %s574, %s590
    %p592 = scmp.eq.s32.totalorder %s36, 0
    %p593 = por %p591, %p592
    %p594 = scmp.le.s32.totalorder 1, %s30
    %p595 = scmp.lt.s32.totalorder %s30, 13
    %p596 = pnand %p594, %p595
    %p597 = pneg %p596
    // Predicated region
    $region9: #{cbvit_forward.1} parent=5 // pred_check
      _
    $region10: #{cbvit_forward.1} parent=5 // pred_check_branch
      %599 = sbr.rel (%p596) target = $region12
    $region11: #{cbvit_forward.1} parent=5 // pred_region
      %s600 = ssub.s32 %s30, 1
      // Predicated region
      $region13: #{cbvit_forward.1} parent=11 // pred_check
        %p601 = pneg %p89
      $region14: #{cbvit_forward.1} parent=11 // pred_check_branch
        %603 = sbr.rel (%p601) target = $region16
      $region15: #{cbvit_forward.1} parent=11 // pred_region
        _
      $region16: #{cbvit_forward.1} parent=11 // pred_fallthru
        _
      // Predicated region
      $region17: #{cbvit_forward.1} parent=11 // pred_check
        %p604 = pneg %p110
      $region18: #{cbvit_forward.1} parent=11 // pred_check_branch
        %606 = sbr.rel (%p604) target = $region20
      $region19: #{cbvit_forward.1} parent=11 // pred_region
        _
      $region20: #{cbvit_forward.1} parent=11 // pred_fallthru
        _
      // Predicated region
      $region21: #{cbvit_forward.1} parent=11 // pred_check
        %p607 = pneg %p469
      $region22: #{cbvit_forward.1} parent=11 // pred_check_branch
        %609 = sbr.rel (%p607) target = $region24
      $region23: #{cbvit_forward.1} parent=11 // pred_region
        _
      $region24: #{cbvit_forward.1} parent=11 // pred_fallthru
        _
      // Predicated region
      $region25: #{cbvit_forward.1} parent=11 // pred_check
        %p610 = pneg %p490
      $region26: #{cbvit_forward.1} parent=11 // pred_check_branch
        %612 = sbr.rel (%p610) target = $region28
      $region27: #{cbvit_forward.1} parent=11 // pred_region
        _
      $region28: #{cbvit_forward.1} parent=11 // pred_fallthru
        _
      // Predicated region
      $region29: #{cbvit_forward.1} parent=11 // pred_check
        %p613 = pneg %p511
      $region30: #{cbvit_forward.1} parent=11 // pred_check_branch
        %615 = sbr.rel (%p613) target = $region32
      $region31: #{cbvit_forward.1} parent=11 // pred_region
        _
      $region32: #{cbvit_forward.1} parent=11 // pred_fallthru
        _
      // Predicated region
      $region33: #{cbvit_forward.1} parent=11 // pred_check
        %p616 = pneg %p532
      $region34: #{cbvit_forward.1} parent=11 // pred_check_branch
        %618 = sbr.rel (%p616) target = $region36
      $region35: #{cbvit_forward.1} parent=11 // pred_region
        _
      $region36: #{cbvit_forward.1} parent=11 // pred_fallthru
        _
    $region12: #{cbvit_forward.1} parent=5 // pred_fallthru
      _
    %p619 = scmp.lt.s32.totalorder %s30, 12
    // Predicated region
    $region37: #{cbvit_forward.1} parent=5 // pred_check
      %p620 = pneg %p619
    $region38: #{cbvit_forward.1} parent=5 // pred_check_branch
      %622 = sbr.rel (%p620) target = $region40
    $region39: #{cbvit_forward.1} parent=5 // pred_region
      // Predicated region
      $region41: #{cbvit_forward.1} parent=39 // pred_check
        %p623 = pneg %p62
      $region42: #{cbvit_forward.1} parent=39 // pred_check_branch
        %625 = sbr.rel (%p623) target = $region44
      $region43: #{cbvit_forward.1} parent=39 // pred_region
        %p626 = scmp.lt.s32.totalorder %s37, 1
        %s627 = scalar_select %p626, %s37, 1
        %s628 = smul.addr %s627, 8
        %s629 = smul.addr %s628, 4
        %s630 = scalar_lea.vmem %s0, %s629
      $region44: #{cbvit_forward.1} parent=39 // pred_fallthru
        _
      // Predicated region
      $region45: #{cbvit_forward.1} parent=39 // pred_check
        %p631 = pneg %p130
      $region46: #{cbvit_forward.1} parent=39 // pred_check_branch
        %633 = sbr.rel (%p631) target = $region48
      $region47: #{cbvit_forward.1} parent=39 // pred_region
        %p634 = scmp.lt.s32.totalorder %s38, 5
        %s635 = scalar_select %p634, %s38, 5
        %s636 = scalar_lea.vmem %s3, %s635
      $region48: #{cbvit_forward.1} parent=39 // pred_fallthru
        _
      // Predicated region
      $region49: #{cbvit_forward.1} parent=39 // pred_check
        %p637 = pneg %p156
      $region50: #{cbvit_forward.1} parent=39 // pred_check_branch
        %639 = sbr.rel (%p637) target = $region52
      $region51: #{cbvit_forward.1} parent=39 // pred_region
        %p640 = scmp.lt.s32.totalorder %s38, 5
        %s641 = scalar_select %p640, %s38, 5
        %s642 = scalar_lea.vmem %s4, %s641
      $region52: #{cbvit_forward.1} parent=39 // pred_fallthru
        _
      // Predicated region
      $region53: #{cbvit_forward.1} parent=39 // pred_check
        %p643 = pneg %p182
      $region54: #{cbvit_forward.1} parent=39 // pred_check_branch
        %645 = sbr.rel (%p643) target = $region56
      $region55: #{cbvit_forward.1} parent=39 // pred_region
        %p646 = scmp.lt.s32.totalorder %s38, 5
        %s647 = scalar_select %p646, %s38, 5
        %s648 = smul.addr %s647, 32
        %s649 = smul.addr %s648, 4
        %s650 = scalar_lea.vmem %s5, %s649
      $region56: #{cbvit_forward.1} parent=39 // pred_fallthru
        _
      // Predicated region
      $region57: #{cbvit_forward.1} parent=39 // pred_check
        %p651 = pneg %p208
      $region58: #{cbvit_forward.1} parent=39 // pred_check_branch
        %653 = sbr.rel (%p651) target = $region60
      $region59: #{cbvit_forward.1} parent=39 // pred_region
        %p654 = scmp.lt.s32.totalorder %s38, 5
        %s655 = scalar_select %p654, %s38, 5
        %s656 = smul.addr %s655, 32
        %s657 = smul.addr %s656, 4
        %s658 = scalar_lea.vmem %s6, %s657
      $region60: #{cbvit_forward.1} parent=39 // pred_fallthru
        _
      // Predicated region
      $region61: #{cbvit_forward.1} parent=39 // pred_check
        %p659 = pneg %p234
      $region62: #{cbvit_forward.1} parent=39 // pred_check_branch
        %661 = sbr.rel (%p659) target = $region64
      $region63: #{cbvit_forward.1} parent=39 // pred_region
        %p662 = scmp.lt.s32.totalorder %s38, 5
        %s663 = scalar_select %p662, %s38, 5
        %s664 = smul.addr %s663, 32
        %s665 = smul.addr %s664, 4
        %s666 = scalar_lea.vmem %s7, %s665
      $region64: #{cbvit_forward.1} parent=39 // pred_fallthru
        _
      // Predicated region
      $region65: #{cbvit_forward.1} parent=39 // pred_check
        %p667 = pneg %p260
      $region66: #{cbvit_forward.1} parent=39 // pred_check_branch
        %669 = sbr.rel (%p667) target = $region68
      $region67: #{cbvit_forward.1} parent=39 // pred_region
        %p670 = scmp.lt.s32.totalorder %s38, 5
        %s671 = scalar_select %p670, %s38, 5
        %s672 = smul.addr %s671, 64
        %s673 = smul.addr %s672, 4
        %s674 = scalar_lea.vmem %s8, %s673
      $region68: #{cbvit_forward.1} parent=39 // pred_fallthru
        _
      // Predicated region
      $region69: #{cbvit_forward.1} parent=39 // pred_check
        %p675 = pneg %p286
      $region70: #{cbvit_forward.1} parent=39 // pred_check_branch
        %677 = sbr.rel (%p675) target = $region72
      $region71: #{cbvit_forward.1} parent=39 // pred_region
        %p678 = scmp.lt.s32.totalorder %s38, 5
        %s679 = scalar_select %p678, %s38, 5
        %s680 = scalar_lea.vmem %s9, %s679
      $region72: #{cbvit_forward.1} parent=39 // pred_fallthru
        _
      // Predicated region
      $region73: #{cbvit_forward.1} parent=39 // pred_check
        %p681 = pneg %p312
      $region74: #{cbvit_forward.1} parent=39 // pred_check_branch
        %683 = sbr.rel (%p681) target = $region76
      $region75: #{cbvit_forward.1} parent=39 // pred_region
        %p684 = scmp.lt.s32.totalorder %s38, 5
        %s685 = scalar_select %p684, %s38, 5
        %s686 = scalar_lea.vmem %s10, %s685
      $region76: #{cbvit_forward.1} parent=39 // pred_fallthru
        _
      // Predicated region
      $region77: #{cbvit_forward.1} parent=39 // pred_check
        %p687 = pneg %p338
      $region78: #{cbvit_forward.1} parent=39 // pred_check_branch
        %689 = sbr.rel (%p687) target = $region80
      $region79: #{cbvit_forward.1} parent=39 // pred_region
        %p690 = scmp.lt.s32.totalorder %s38, 5
        %s691 = scalar_select %p690, %s38, 5
        %s692 = scalar_lea.vmem %s11, %s691
      $region80: #{cbvit_forward.1} parent=39 // pred_fallthru
        _
      // Predicated region
      $region81: #{cbvit_forward.1} parent=39 // pred_check
        %p693 = pneg %p364
      $region82: #{cbvit_forward.1} parent=39 // pred_check_branch
        %695 = sbr.rel (%p693) target = $region84
      $region83: #{cbvit_forward.1} parent=39 // pred_region
        %p696 = scmp.lt.s32.totalorder %s38, 5
        %s697 = scalar_select %p696, %s38, 5
        %s698 = smul.addr %s697, 8
        %s699 = smul.addr %s698, 4
        %s700 = scalar_lea.vmem %s12, %s699
      $region84: #{cbvit_forward.1} parent=39 // pred_fallthru
        _
      // Predicated region
      $region85: #{cbvit_forward.1} parent=39 // pred_check
        %p701 = pneg %p390
      $region86: #{cbvit_forward.1} parent=39 // pred_check_branch
        %703 = sbr.rel (%p701) target = $region88
      $region87: #{cbvit_forward.1} parent=39 // pred_region
        %p704 = scmp.lt.s32.totalorder %s38, 5
        %s705 = scalar_select %p704, %s38, 5
        %s706 = scalar_lea.vmem %s13, %s705
      $region88: #{cbvit_forward.1} parent=39 // pred_fallthru
        _
      // Predicated region
      $region89: #{cbvit_forward.1} parent=39 // pred_check
        %p707 = pneg %p416
      $region90: #{cbvit_forward.1} parent=39 // pred_check_branch
        %709 = sbr.rel (%p707) target = $region92
      $region91: #{cbvit_forward.1} parent=39 // pred_region
        %p710 = scmp.lt.s32.totalorder %s38, 5
        %s711 = scalar_select %p710, %s38, 5
        %s712 = smul.addr %s711, 16
        %s713 = smul.addr %s712, 4
        %s714 = scalar_lea.vmem %s14, %s713
      $region92: #{cbvit_forward.1} parent=39 // pred_fallthru
        _
      // Predicated region
      $region93: #{cbvit_forward.1} parent=39 // pred_check
        %p715 = pneg %p442
      $region94: #{cbvit_forward.1} parent=39 // pred_check_branch
        %717 = sbr.rel (%p715) target = $region96
      $region95: #{cbvit_forward.1} parent=39 // pred_region
        %p718 = scmp.lt.s32.totalorder %s38, 5
        %s719 = scalar_select %p718, %s38, 5
        %s720 = scalar_lea.vmem %s15, %s719
      $region96: #{cbvit_forward.1} parent=39 // pred_fallthru
        _
    $region40: #{cbvit_forward.1} parent=5 // pred_fallthru
      _
    %p721 = scmp.le.s32.totalorder 1, %s30
    %p722 = scmp.lt.s32.totalorder %s30, 13
    %p723 = pnand %p721, %p722
    %p724 = pneg %p723
    // Predicated region
    $region97: #{cbvit_forward.1} parent=5 // pred_check
      _
    $region98: #{cbvit_forward.1} parent=5 // pred_check_branch
      %726 = sbr.rel (%p723) target = $region100
    $region99: #{cbvit_forward.1} parent=5 // pred_region
      %s727 = ssub.s32 %s30, 1
      %p728 = scmp.lt.s32.totalorder %s39, 1
      %s729 = scalar_select %p728, %s39, 1
      %s730 = smul.addr %s729, 8
      %s731 = smul.addr %s730, 4
      %s732 = scalar_lea.vmem %s0, %s731
      %p733 = pneg %p68
      %p734 = pneg %p65
      %p735 = pneg %p89
      %p736 = pneg %p86
      %p737 = pneg %p110
      %p738 = pneg %p107
      %p739 = scmp.lt.s32.totalorder %s40, 5
      %s740 = scalar_select %p739, %s40, 5
      %s741 = scalar_lea.vmem %s3, %s740
      %p742 = pneg %p136
      %p743 = pneg %p133
      %p744 = scmp.lt.s32.totalorder %s40, 5
      %s745 = scalar_select %p744, %s40, 5
      %s746 = scalar_lea.vmem %s4, %s745
      %p747 = pneg %p162
      %p748 = pneg %p159
      %p749 = scmp.lt.s32.totalorder %s40, 5
      %s750 = scalar_select %p749, %s40, 5
      %s751 = smul.addr %s750, 32
      %s752 = smul.addr %s751, 4
      %s753 = scalar_lea.vmem %s5, %s752
      %p754 = pneg %p188
      %p755 = pneg %p185
      %p756 = scmp.lt.s32.totalorder %s40, 5
      %s757 = scalar_select %p756, %s40, 5
      %s758 = smul.addr %s757, 32
      %s759 = smul.addr %s758, 4
      %s760 = scalar_lea.vmem %s6, %s759
      %p761 = pneg %p214
      %p762 = pneg %p211
      %p763 = scmp.lt.s32.totalorder %s40, 5
      %s764 = scalar_select %p763, %s40, 5
      %s765 = smul.addr %s764, 32
      %s766 = smul.addr %s765, 4
      %s767 = scalar_lea.vmem %s7, %s766
      %p768 = pneg %p240
      %p769 = pneg %p237
      %p770 = scmp.lt.s32.totalorder %s40, 5
      %s771 = scalar_select %p770, %s40, 5
      %s772 = smul.addr %s771, 64
      %s773 = smul.addr %s772, 4
      %s774 = scalar_lea.vmem %s8, %s773
      %p775 = pneg %p266
      %p776 = pneg %p263
      %p777 = scmp.lt.s32.totalorder %s40, 5
      %s778 = scalar_select %p777, %s40, 5
      %s779 = scalar_lea.vmem %s9, %s778
      %p780 = pneg %p292
      %p781 = pneg %p289
      %p782 = scmp.lt.s32.totalorder %s40, 5
      %s783 = scalar_select %p782, %s40, 5
      %s784 = scalar_lea.vmem %s10, %s783
      %p785 = pneg %p318
      %p786 = pneg %p315
      %p787 = scmp.lt.s32.totalorder %s40, 5
      %s788 = scalar_select %p787, %s40, 5
      %s789 = scalar_lea.vmem %s11, %s788
      %p790 = pneg %p344
      %p791 = pneg %p341
      %p792 = scmp.lt.s32.totalorder %s40, 5
      %s793 = scalar_select %p792, %s40, 5
      %s794 = smul.addr %s793, 8
      %s795 = smul.addr %s794, 4
      %s796 = scalar_lea.vmem %s12, %s795
      %p797 = pneg %p370
      %p798 = pneg %p367
      %p799 = scmp.lt.s32.totalorder %s40, 5
      %s800 = scalar_select %p799, %s40, 5
      %s801 = scalar_lea.vmem %s13, %s800
      %p802 = pneg %p396
      %p803 = pneg %p393
      %p804 = scmp.lt.s32.totalorder %s40, 5
      %s805 = scalar_select %p804, %s40, 5
      %s806 = smul.addr %s805, 16
      %s807 = smul.addr %s806, 4
      %s808 = scalar_lea.vmem %s14, %s807
      %p809 = pneg %p422
      %p810 = pneg %p419
      %p811 = scmp.lt.s32.totalorder %s40, 5
      %s812 = scalar_select %p811, %s40, 5
      %s813 = scalar_lea.vmem %s15, %s812
      %p814 = pneg %p448
      %p815 = pneg %p445
      %p816 = pneg %p469
      %p817 = pneg %p466
      %p818 = pneg %p490
      %p819 = pneg %p487
      %p820 = pneg %p511
      %p821 = pneg %p508
      %p822 = pneg %p532
      %p823 = pneg %p529
      %p824 = pneg %p558
      %p825 = pneg %p555
      %p826 = scmp.lt.s32.totalorder %s39, 1
      %s827 = scalar_select %p826, %s39, 1
      %s828 = scalar_lea.vmem %s20, %s827
      %p829 = pneg %p586
      %p830 = pneg %p583
      %p831 = scmp.lt.s32.totalorder %s39, 1
      %s832 = scalar_select %p831, %s39, 1
      %p833 = scmp.lt.s32.totalorder %s40, 5
      %s834 = scalar_select %p833, %s40, 5
      %s835 = smul.addr %s834, 32
      %s836 = smul.addr %s832, 192
      %s837 = sadd.s32 %s835, %s836
      %s838 = smul.addr %s837, 4
      %s839 = scalar_lea.vmem %s21, %s838
      %p840 = scmp.lt.s32.totalorder %s39, 1
      %s841 = scalar_select %p840, %s39, 1
      %s842 = smul.addr %s841, 8
      %s843 = smul.addr %s842, 4
      %s844 = scalar_lea.vmem %s0, %s843
      %p845 = scmp.lt.s32.totalorder %s40, 5
      %s846 = scalar_select %p845, %s40, 5
      %s847 = scalar_lea.vmem %s3, %s846
      %p848 = scmp.lt.s32.totalorder %s40, 5
      %s849 = scalar_select %p848, %s40, 5
      %s850 = scalar_lea.vmem %s4, %s849
      %p851 = scmp.lt.s32.totalorder %s40, 5
      %s852 = scalar_select %p851, %s40, 5
      %s853 = smul.addr %s852, 32
      %s854 = smul.addr %s853, 4
      %s855 = scalar_lea.vmem %s5, %s854
      %p856 = scmp.lt.s32.totalorder %s40, 5
      %s857 = scalar_select %p856, %s40, 5
      %s858 = smul.addr %s857, 32
      %s859 = smul.addr %s858, 4
      %s860 = scalar_lea.vmem %s6, %s859
      %p861 = scmp.lt.s32.totalorder %s40, 5
      %s862 = scalar_select %p861, %s40, 5
      %s863 = smul.addr %s862, 32
      %s864 = smul.addr %s863, 4
      %s865 = scalar_lea.vmem %s7, %s864
      %p866 = scmp.lt.s32.totalorder %s40, 5
      %s867 = scalar_select %p866, %s40, 5
      %s868 = smul.addr %s867, 64
      %s869 = smul.addr %s868, 4
      %s870 = scalar_lea.vmem %s8, %s869
      %p871 = scmp.lt.s32.totalorder %s40, 5
      %s872 = scalar_select %p871, %s40, 5
      %s873 = scalar_lea.vmem %s9, %s872
      %p874 = scmp.lt.s32.totalorder %s40, 5
      %s875 = scalar_select %p874, %s40, 5
      %s876 = scalar_lea.vmem %s10, %s875
      %p877 = scmp.lt.s32.totalorder %s40, 5
      %s878 = scalar_select %p877, %s40, 5
      %s879 = scalar_lea.vmem %s11, %s878
      %p880 = scmp.lt.s32.totalorder %s40, 5
      %s881 = scalar_select %p880, %s40, 5
      %s882 = smul.addr %s881, 8
      %s883 = smul.addr %s882, 4
      %s884 = scalar_lea.vmem %s12, %s883
      %p885 = scmp.lt.s32.totalorder %s40, 5
      %s886 = scalar_select %p885, %s40, 5
      %s887 = scalar_lea.vmem %s13, %s886
      %p888 = scmp.lt.s32.totalorder %s40, 5
      %s889 = scalar_select %p888, %s40, 5
      %s890 = smul.addr %s889, 16
      %s891 = smul.addr %s890, 4
      %s892 = scalar_lea.vmem %s14, %s891
      %p893 = scmp.lt.s32.totalorder %s40, 5
      %s894 = scalar_select %p893, %s40, 5
      %s895 = scalar_lea.vmem %s15, %s894
      %p896 = scmp.lt.s32.totalorder %s39, 1
      %s897 = scalar_select %p896, %s39, 1
      %s898 = scalar_lea.vmem %s20, %s897
      %p899 = scmp.lt.s32.totalorder %s39, 1
      %s900 = scalar_select %p899, %s39, 1
      %p901 = scmp.lt.s32.totalorder %s40, 5
      %s902 = scalar_select %p901, %s40, 5
      %s903 = smul.addr %s902, 32
      %s904 = smul.addr %s900, 192
      %s905 = sadd.s32 %s903, %s904
      %s906 = smul.addr %s905, 4
      %s907 = scalar_lea.vmem %s21, %s906
      %v909 = vlaneseq
      %v910 = vand.u32 %v909, 127
      %vm911 = vcmp.lt.s32.totalorder %v910, 50
      %v912 = vsel %vm911, 0.0, -1e+09
      %v913 = vlaneseq
      %v914 = vshrl.u32 %v913, 7
      %v915 = vadd.s32 %v914, 8
      %v916 = vadd.s32 %v914, 16
      %v917 = vadd.s32 %v914, 24
      %v918 = vadd.s32 %v914, 32
      %v919 = vadd.s32 %v914, 40
      %v920 = vadd.s32 %v914, 48
      %v921 = vadd.s32 %v914, 56
      %vm922 = vcmp.lt.s32.totalorder %v914, 50
      %vm923 = vcmp.lt.s32.totalorder %v915, 50
      %vm924 = vcmp.lt.s32.totalorder %v916, 50
      %vm925 = vcmp.lt.s32.totalorder %v917, 50
      %vm926 = vcmp.lt.s32.totalorder %v918, 50
      %vm927 = vcmp.lt.s32.totalorder %v919, 50
      %vm928 = vcmp.lt.s32.totalorder %v920, 50
      %vm929 = vcmp.lt.s32.totalorder %v921, 50
      %v930 = vsel %vm922, 1, 0
      %v931 = vsel %vm923, 1, 0
      %v932 = vsel %vm924, 1, 0
      %v933 = vsel %vm925, 1, 0
      %v934 = vsel %vm926, 1, 0
      %v935 = vsel %vm927, 1, 0
      %v936 = vsel %vm928, 1, 0
      %v937 = vsel %vm929, 1, 0
      %v938 = vcvt.s32.f32 %v930
      %v939 = vcvt.s32.f32 %v931
      %v940 = vcvt.s32.f32 %v932
      %v941 = vcvt.s32.f32 %v933
      %v942 = vcvt.s32.f32 %v934
      %v943 = vcvt.s32.f32 %v935
      %v944 = vcvt.s32.f32 %v936
      %v945 = vcvt.s32.f32 %v937
      %p946 = scmp.eq.s32.totalorder %s40, 0
      // Predicated region
      $region101: #{cbvit_forward.1} parent=99 // pred_check
        %p947 = pneg %p946
      $region102: #{cbvit_forward.1} parent=99 // pred_check_branch
        %949 = sbr.rel (%p947) target = $region104
      $region103: #{cbvit_forward.1} parent=99 // pred_region
        %v950 = vld [vmem:[%s844] sm:$0xf]
        %v951 = vld [vmem:[%s844 + $0x4] sm:$0xf]
        %v952 = vld [vmem:[%s844 + $0x8] sm:$0xf]
        %v953 = vld [vmem:[%s844 + $0xc] sm:$0xf]
        %v954 = vld [vmem:[%s844 + $0x10] sm:$0xf]
        %v955 = vld [vmem:[%s844 + $0x14] sm:$0xf]
        %v956 = vld [vmem:[%s844 + $0x18] sm:$0xf]
        %v957 = vld [vmem:[%s844 + $0x1c] sm:$0xf]
        %v958 = vld [vmem:[%s1] sm:$0xf]
        %v959 = vld [vmem:[%s1 + $0x4] sm:$0xf]
        %v960 = vld [vmem:[%s1 + $0x8] sm:$0xf]
        %v961 = vld [vmem:[%s1 + $0xc] sm:$0xf]
        %v970 = vunpack.c.l.b16 %v950
        %v971 = vunpack.c.l.b16 %v951
        %v972 = vunpack.c.l.b16 %v952
        %v973 = vunpack.c.l.b16 %v953
        %v974 = vunpack.c.l.b16 %v954
        %v975 = vunpack.c.l.b16 %v955
        %v976 = vunpack.c.l.b16 %v956
        %v977 = vunpack.c.l.b16 %v957
        %v978 = vpack.c.b16 %v971, %v970
        %v979 = vpack.c.b16 %v973, %v972
        %v980 = vpack.c.b16 %v975, %v974
        %v981 = vpack.c.b16 %v977, %v976
        %v986 = vunpack.c.l.b16 %v958
        %v987 = vunpack.c.l.b16 %v959
        %v988 = vunpack.c.l.b16 %v960
        %v989 = vunpack.c.l.b16 %v961
        %v990 = vpack.c.b16 %v987, %v986
        %v991 = vpack.c.b16 %v989, %v988
        %vm994 = vcmask 261120
        %v996 = vsel %vm994, %v978, 0
        %v999 = vsel %vm994, %v979, 0
        %v1002 = vsel %vm994, %v980, 0
        %v1005 = vsel %vm994, %v981, 0
        %1007 = vmatprep.subr.bf16.mxu0 0
        %1008 = vmatpush1.bf16.msra.mxu0 %v990
        %1009 = vmatprep.subr.bf16.mxu0 0
        %1010 = vmatpush1.bf16.msra.mxu0 %v991
        %1011 = vmatprep.subr.bf16.mxu0 0
        %1012 = vmatpush1.bf16.msra.mxu0 0
        %1013 = vmatprep.subr.bf16.mxu0 0
        %1014 = vmatpush1.bf16.msra.mxu0 0
        %1015 = vmatprep.subr.bf16.mxu0 0
        %1016 = vmatpush1.bf16.msra.mxu0 0
        %1017 = vmatprep.subr.bf16.mxu0 0
        %1018 = vmatpush1.bf16.msra.mxu0 0
        %1019 = vmatprep.subr.bf16.mxu0 0
        %1020 = vmatpush1.bf16.msra.mxu0 0
        %1021 = vmatprep.subr.bf16.mxu0 0
        %1022 = vmatpush1.bf16.msra.mxu0 0
        %1023 = vmatprep.subr.bf16.mxu0 0
        %1024 = vmatpush1.bf16.msra.mxu0 0
        %1025 = vmatprep.subr.bf16.mxu0 0
        %1026 = vmatpush1.bf16.msra.mxu0 0
        %1027 = vmatprep.subr.bf16.mxu0 0
        %1028 = vmatpush1.bf16.msra.mxu0 0
        %1029 = vmatprep.subr.bf16.mxu0 0
        %1030 = vmatpush1.bf16.msra.mxu0 0
        %1031 = vmatprep.subr.bf16.mxu0 0
        %1032 = vmatpush1.bf16.msra.mxu0 0
        %1033 = vmatprep.subr.bf16.mxu0 0
        %1034 = vmatpush1.bf16.msra.mxu0 0
        %1035 = vmatprep.subr.bf16.mxu0 0
        %1036 = vmatpush1.bf16.msra.mxu0 0
        %1037 = vmatprep.subr.bf16.mxu0 0
        %1038 = vmatpush1.bf16.msra.mxu0 0
        %1039 = vmatprep.mubr.bf16.mxu0 0
        %1040 = vmatmul.mubr.bf16.gmra.mrb[0].mxu0 %v996
        %v1041 = vpop.f32.mrb[0].mxu0
        %v1042 = vadd.f32 0.0, %v1041
        %v1043 = vpop.f32.mrb[0].mxu0
        %v1044 = vpop.f32.mrb[0].mxu0
        %v1045 = vadd.f32 0.0, %v1044
        %v1046 = vpop.f32.mrb[0].mxu0
        %1047 = vmatprep.mubr.bf16.mxu0 0
        %1048 = vmatmul.mubr.bf16.gmra.mrb[0].mxu0 %v999
        %v1049 = vpop.f32.mrb[0].mxu0
        %v1050 = vadd.f32 0.0, %v1049
        %v1051 = vpop.f32.mrb[0].mxu0
        %v1052 = vpop.f32.mrb[0].mxu0
        %v1053 = vadd.f32 0.0, %v1052
        %v1054 = vpop.f32.mrb[0].mxu0
        %1055 = vmatprep.mubr.bf16.mxu0 0
        %1056 = vmatmul.mubr.bf16.gmra.mrb[0].mxu0 %v1002
        %v1057 = vpop.f32.mrb[0].mxu0
        %v1058 = vadd.f32 0.0, %v1057
        %v1059 = vpop.f32.mrb[0].mxu0
        %v1060 = vpop.f32.mrb[0].mxu0
        %v1061 = vadd.f32 0.0, %v1060
        %v1062 = vpop.f32.mrb[0].mxu0
        %1063 = vmatprep.mubr.bf16.mxu0 0
        %1064 = vmatmul.mubr.bf16.gmra.mrb[0].mxu0 %v1005
        %v1065 = vpop.f32.mrb[0].mxu0
        %v1066 = vadd.f32 0.0, %v1065
        %v1067 = vpop.f32.mrb[0].mxu0
        %v1068 = vpop.f32.mrb[0].mxu0
        %v1069 = vadd.f32 0.0, %v1068
        %v1070 = vpop.f32.mrb[0].mxu0
        %1071 = vdwg.mxu0
        %v1072 = vld [vmem:[%s2] sm:$0xff]
        %v1073 = vld [vmem:[%s2 + $0x8] sm:$0xff]
        %v1074 = vld [vmem:[%s2 + $0x10] sm:$0xff]
        %v1075 = vld [vmem:[%s2 + $0x18] sm:$0xff]
        %v1076 = vld [vmem:[%s2 + $0x20] sm:$0xff]
        %v1077 = vld [vmem:[%s2 + $0x28] sm:$0xff]
        %v1078 = vld [vmem:[%s2 + $0x30] sm:$0xff]
        %v1079 = vld [vmem:[%s2 + $0x38] sm:$0xff]
        %v1080 = vadd.f32 %v1042, %v1072
        %v1081 = vadd.f32 %v1045, %v1073
        %v1082 = vadd.f32 %v1050, %v1074
        %v1083 = vadd.f32 %v1053, %v1075
        %v1084 = vadd.f32 %v1058, %v1076
        %v1085 = vadd.f32 %v1061, %v1077
        %v1086 = vadd.f32 %v1066, %v1078
        %v1087 = vadd.f32 %v1069, %v1079
        %vm1088 = vcmask 523264
        %1089 = vst.msk [vmem:[#allocation2] sm:$0xff] %vm1088, %v1080
        %1090 = vst.msk [vmem:[#allocation2 + $0x8] sm:$0xff] %vm1088, %v1081
        %1091 = vst.msk [vmem:[#allocation2 + $0x10] sm:$0xff] %vm1088, %v1082
        %1092 = vst.msk [vmem:[#allocation2 + $0x18] sm:$0xff] %vm1088, %v1083
        %1093 = vst.msk [vmem:[#allocation2 + $0x20] sm:$0xff] %vm1088, %v1084
        %1094 = vst.msk [vmem:[#allocation2 + $0x28] sm:$0xff] %vm1088, %v1085
        %1095 = vst.msk [vmem:[#allocation2 + $0x30] sm:$0xff] %vm1088, %v1086
        %1096 = vst.msk [vmem:[#allocation2 + $0x38] sm:$0xff] %vm1088, %v1087
      $region104: #{cbvit_forward.1} parent=99 // pred_fallthru
        _
      %v1097 = vld [vmem:[#allocation2] sm:$0xff]
      %v1098 = vld [vmem:[#allocation2 + $0x8] sm:$0xff]
      %v1099 = vld [vmem:[#allocation2 + $0x10] sm:$0xff]
      %v1100 = vld [vmem:[#allocation2 + $0x18] sm:$0xff]
      %v1101 = vld [vmem:[#allocation2 + $0x20] sm:$0xff]
      %v1102 = vld [vmem:[#allocation2 + $0x28] sm:$0xff]
      %v1103 = vld [vmem:[#allocation2 + $0x30] sm:$0xff]
      %v1104 = vld [vmem:[#allocation2 + $0x38] sm:$0xff]
      %v1105 = vld [vmem:[%s847] sm:$0x1]
      %v1106 = vld [vmem:[%s850] sm:$0x1]
      %vm1107 = vcmask 523264
      %v1108 = vsel %vm1107, %v1097, 0.0
      %1109 = vadd.xlane.f32.xlu0 %v1108
      %v1110 = vpop.xlane.xlu0 %1109
      %v1111 = vsel %vm1107, %v1098, 0.0
      %1112 = vadd.xlane.f32.xlu0 %v1111
      %v1113 = vpop.xlane.xlu0 %1112
      %v1114 = vsel %vm1107, %v1099, 0.0
      %1115 = vadd.xlane.f32.xlu0 %v1114
      %v1116 = vpop.xlane.xlu0 %1115
      %v1117 = vsel %vm1107, %v1100, 0.0
      %1118 = vadd.xlane.f32.xlu0 %v1117
      %v1119 = vpop.xlane.xlu0 %1118
      %v1120 = vsel %vm1107, %v1101, 0.0
      %1121 = vadd.xlane.f32.xlu0 %v1120
      %v1122 = vpop.xlane.xlu0 %1121
      %v1123 = vsel %vm1107, %v1102, 0.0
      %1124 = vadd.xlane.f32.xlu0 %v1123
      %v1125 = vpop.xlane.xlu0 %1124
      %v1126 = vsel %vm1107, %v1103, 0.0
      %1127 = vadd.xlane.f32.xlu0 %v1126
      %v1128 = vpop.xlane.xlu0 %1127
      %v1129 = vsel %vm1107, %v1104, 0.0
      %1130 = vadd.xlane.f32.xlu0 %v1129
      %v1131 = vpop.xlane.xlu0 %1130
      %v1132 = vrcp.pop 64.0
      %v1133 = vmul.f32 %v1110, %v1132
      %v1134 = vmul.f32 %v1113, %v1132
      %v1135 = vmul.f32 %v1116, %v1132
      %v1136 = vmul.f32 %v1119, %v1132
      %v1137 = vmul.f32 %v1122, %v1132
      %v1138 = vmul.f32 %v1125, %v1132
      %v1139 = vmul.f32 %v1128, %v1132
      %v1140 = vmul.f32 %v1131, %v1132
      %v1141 = vsub.f32 %v1097, %v1133
      %v1142 = vsub.f32 %v1098, %v1134
      %v1143 = vsub.f32 %v1099, %v1135
      %v1144 = vsub.f32 %v1100, %v1136
      %v1145 = vsub.f32 %v1101, %v1137
      %v1146 = vsub.f32 %v1102, %v1138
      %v1147 = vsub.f32 %v1103, %v1139
      %v1148 = vsub.f32 %v1104, %v1140
      %v1149 = vmul.f32 %v1141, %v1141
      %v1150 = vmul.f32 %v1142, %v1142
      %v1151 = vmul.f32 %v1143, %v1143
      %v1152 = vmul.f32 %v1144, %v1144
      %v1153 = vmul.f32 %v1145, %v1145
      %v1154 = vmul.f32 %v1146, %v1146
      %v1155 = vmul.f32 %v1147, %v1147
      %v1156 = vmul.f32 %v1148, %v1148
      %v1157 = vsel %vm1107, %v1149, 0.0
      %1158 = vadd.xlane.f32.xlu0 %v1157
      %v1159 = vpop.xlane.xlu0 %1158
      %v1160 = vsel %vm1107, %v1150, 0.0
      %1161 = vadd.xlane.f32.xlu0 %v1160
      %v1162 = vpop.xlane.xlu0 %1161
      %v1163 = vsel %vm1107, %v1151, 0.0
      %1164 = vadd.xlane.f32.xlu0 %v1163
      %v1165 = vpop.xlane.xlu0 %1164
      %v1166 = vsel %vm1107, %v1152, 0.0
      %1167 = vadd.xlane.f32.xlu0 %v1166
      %v1168 = vpop.xlane.xlu0 %1167
      %v1169 = vsel %vm1107, %v1153, 0.0
      %1170 = vadd.xlane.f32.xlu0 %v1169
      %v1171 = vpop.xlane.xlu0 %1170
      %v1172 = vsel %vm1107, %v1154, 0.0
      %1173 = vadd.xlane.f32.xlu0 %v1172
      %v1174 = vpop.xlane.xlu0 %1173
      %v1175 = vsel %vm1107, %v1155, 0.0
      %1176 = vadd.xlane.f32.xlu0 %v1175
      %v1177 = vpop.xlane.xlu0 %1176
      %v1178 = vsel %vm1107, %v1156, 0.0
      %1179 = vadd.xlane.f32.xlu0 %v1178
      %v1180 = vpop.xlane.xlu0 %1179
      %v1181 = vmul.f32 %v1159, %v1132
      %v1182 = vmul.f32 %v1162, %v1132
      %v1183 = vmul.f32 %v1165, %v1132
      %v1184 = vmul.f32 %v1168, %v1132
      %v1185 = vmul.f32 %v1171, %v1132
      %v1186 = vmul.f32 %v1174, %v1132
      %v1187 = vmul.f32 %v1177, %v1132
      %v1188 = vmul.f32 %v1180, %v1132
      %v1189 = vadd.f32 %v1181, 1e-05
      %v1190 = vadd.f32 %v1182, 1e-05
      %v1191 = vadd.f32 %v1183, 1e-05
      %v1192 = vadd.f32 %v1184, 1e-05
      %v1193 = vadd.f32 %v1185, 1e-05
      %v1194 = vadd.f32 %v1186, 1e-05
      %v1195 = vadd.f32 %v1187, 1e-05
      %v1196 = vadd.f32 %v1188, 1e-05
      %v1197 = vrsqrt.pop %v1189
      %v1198 = vrsqrt.pop %v1190
      %v1199 = vrsqrt.pop %v1191
      %v1200 = vrsqrt.pop %v1192
      %v1201 = vrsqrt.pop %v1193
      %v1202 = vrsqrt.pop %v1194
      %v1203 = vrsqrt.pop %v1195
      %v1204 = vrsqrt.pop %v1196
      %v1205 = vmul.f32 %v1141, %v1197
      %v1206 = vmul.f32 %v1142, %v1198
      %v1207 = vmul.f32 %v1143, %v1199
      %v1208 = vmul.f32 %v1144, %v1200
      %v1209 = vmul.f32 %v1145, %v1201
      %v1210 = vmul.f32 %v1146, %v1202
      %v1211 = vmul.f32 %v1147, %v1203
      %v1212 = vmul.f32 %v1148, %v1204
      %v1214 = vlaneseq
      %v1215 = vshrl.u32 %v1214, 7
      %v1216 = vsub.s32 0, %v1215
      %v1217 = vrot.slane %v1105, %v1216
      %v1219 = vmul.f32 %v1205, %v1217
      %v1220 = vmul.f32 %v1206, %v1217
      %v1221 = vmul.f32 %v1207, %v1217
      %v1222 = vmul.f32 %v1208, %v1217
      %v1223 = vmul.f32 %v1209, %v1217
      %v1224 = vmul.f32 %v1210, %v1217
      %v1225 = vmul.f32 %v1211, %v1217
      %v1226 = vmul.f32 %v1212, %v1217
      %v1228 = vlaneseq
      %v1229 = vshrl.u32 %v1228, 7
      %v1230 = vsub.s32 0, %v1229
      %v1231 = vrot.slane %v1106, %v1230
      %v1233 = vadd.f32 %v1219, %v1231
      %v1234 = vadd.f32 %v1220, %v1231
      %v1235 = vadd.f32 %v1221, %v1231
      %v1236 = vadd.f32 %v1222, %v1231
      %v1237 = vadd.f32 %v1223, %v1231
      %v1238 = vadd.f32 %v1224, %v1231
      %v1239 = vadd.f32 %v1225, %v1231
      %v1240 = vadd.f32 %v1226, %v1231
      %v1241 = vpack.c.bf16 %v1234, %v1233
      %v1242 = vpack.c.bf16 %v1236, %v1235
      %v1243 = vpack.c.bf16 %v1238, %v1237
      %v1244 = vpack.c.bf16 %v1240, %v1239
      %v1245 = vld [vmem:[%s855] sm:$0xff]
      %v1246 = vld [vmem:[%s855 + $0x8] sm:$0xff]
      %v1247 = vld [vmem:[%s855 + $0x10] sm:$0xff]
      %v1248 = vld [vmem:[%s855 + $0x18] sm:$0xff]
      %v1249 = vld [vmem:[%s855 + $0x20] sm:$0xff]
      %v1250 = vld [vmem:[%s855 + $0x28] sm:$0xff]
      %v1251 = vld [vmem:[%s855 + $0x30] sm:$0xff]
      %v1252 = vld [vmem:[%s855 + $0x38] sm:$0xff]
      %v1253 = vld [vmem:[%s855 + $0x40] sm:$0xff]
      %v1254 = vld [vmem:[%s855 + $0x48] sm:$0xff]
      %v1255 = vld [vmem:[%s855 + $0x50] sm:$0xff]
      %v1256 = vld [vmem:[%s855 + $0x58] sm:$0xff]
      %v1257 = vld [vmem:[%s855 + $0x60] sm:$0xff]
      %v1258 = vld [vmem:[%s855 + $0x68] sm:$0xff]
      %v1259 = vld [vmem:[%s855 + $0x70] sm:$0xff]
      %v1260 = vld [vmem:[%s855 + $0x78] sm:$0xff]
      %v1277 = vunpack.c.l.b16 %v1245
      %v1278 = vunpack.c.h.b16 %v1245
      %v1279 = vunpack.c.l.b16 %v1246
      %v1280 = vunpack.c.h.b16 %v1246
      %v1281 = vunpack.c.l.b16 %v1247
      %v1282 = vunpack.c.h.b16 %v1247
      %v1283 = vunpack.c.l.b16 %v1248
      %v1284 = vunpack.c.h.b16 %v1248
      %v1285 = vunpack.c.l.b16 %v1249
      %v1286 = vunpack.c.h.b16 %v1249
      %v1287 = vunpack.c.l.b16 %v1250
      %v1288 = vunpack.c.h.b16 %v1250
      %v1289 = vunpack.c.l.b16 %v1251
      %v1290 = vunpack.c.h.b16 %v1251
      %v1291 = vunpack.c.l.b16 %v1252
      %v1292 = vunpack.c.h.b16 %v1252
      %v1293 = vunpack.c.l.b16 %v1253
      %v1294 = vunpack.c.h.b16 %v1253
      %v1295 = vunpack.c.l.b16 %v1254
      %v1296 = vunpack.c.h.b16 %v1254
      %v1297 = vunpack.c.l.b16 %v1255
      %v1298 = vunpack.c.h.b16 %v1255
      %v1299 = vunpack.c.l.b16 %v1256
      %v1300 = vunpack.c.h.b16 %v1256
      %v1301 = vunpack.c.l.b16 %v1257
      %v1302 = vunpack.c.h.b16 %v1257
      %v1303 = vunpack.c.l.b16 %v1258
      %v1304 = vunpack.c.h.b16 %v1258
      %v1305 = vunpack.c.l.b16 %v1259
      %v1306 = vunpack.c.h.b16 %v1259
      %v1307 = vunpack.c.l.b16 %v1260
      %v1308 = vunpack.c.h.b16 %v1260
      %v1309 = vpack.c.b16 %v1281, %v1277
      %v1310 = vpack.c.b16 %v1282, %v1278
      %v1311 = vpack.c.b16 %v1283, %v1279
      %v1312 = vpack.c.b16 %v1284, %v1280
      %v1313 = vpack.c.b16 %v1289, %v1285
      %v1314 = vpack.c.b16 %v1290, %v1286
      %v1315 = vpack.c.b16 %v1291, %v1287
      %v1316 = vpack.c.b16 %v1292, %v1288
      %v1317 = vpack.c.b16 %v1297, %v1293
      %v1318 = vpack.c.b16 %v1298, %v1294
      %v1319 = vpack.c.b16 %v1299, %v1295
      %v1320 = vpack.c.b16 %v1300, %v1296
      %v1321 = vpack.c.b16 %v1305, %v1301
      %v1322 = vpack.c.b16 %v1306, %v1302
      %v1323 = vpack.c.b16 %v1307, %v1303
      %v1324 = vpack.c.b16 %v1308, %v1304
      %v1342 = vsel %vm1107, %v1241, 0
      %v1345 = vsel %vm1107, %v1242, 0
      %v1348 = vsel %vm1107, %v1243, 0
      %v1351 = vsel %vm1107, %v1244, 0
      %1353 = vmatprep.subr.bf16.mxu0 %v1310
      %1354 = vmatpush1.bf16.msra.mxu0 %v1309
      %1355 = vmatprep.subr.bf16.mxu0 %v1314
      %1356 = vmatpush1.bf16.msra.mxu0 %v1313
      %1357 = vmatprep.subr.bf16.mxu0 %v1318
      %1358 = vmatpush1.bf16.msra.mxu0 %v1317
      %1359 = vmatprep.subr.bf16.mxu0 %v1322
      %1360 = vmatpush1.bf16.msra.mxu0 %v1321
      %1361 = vmatprep.subr.bf16.mxu0 0
      %1362 = vmatpush1.bf16.msra.mxu0 0
      %1363 = vmatprep.subr.bf16.mxu0 0
      %1364 = vmatpush1.bf16.msra.mxu0 0
      %1365 = vmatprep.subr.bf16.mxu0 0
      %1366 = vmatpush1.bf16.msra.mxu0 0
      %1367 = vmatprep.subr.bf16.mxu0 0
      %1368 = vmatpush1.bf16.msra.mxu0 0
      %1369 = vmatprep.subr.bf16.mxu0 0
      %1370 = vmatpush1.bf16.msra.mxu0 0
      %1371 = vmatprep.subr.bf16.mxu0 0
      %1372 = vmatpush1.bf16.msra.mxu0 0
      %1373 = vmatprep.subr.bf16.mxu0 0
      %1374 = vmatpush1.bf16.msra.mxu0 0
      %1375 = vmatprep.subr.bf16.mxu0 0
      %1376 = vmatpush1.bf16.msra.mxu0 0
      %1377 = vmatprep.subr.bf16.mxu0 0
      %1378 = vmatpush1.bf16.msra.mxu0 0
      %1379 = vmatprep.subr.bf16.mxu0 0
      %1380 = vmatpush1.bf16.msra.mxu0 0
      %1381 = vmatprep.subr.bf16.mxu0 0
      %1382 = vmatpush1.bf16.msra.mxu0 0
      %1383 = vmatprep.subr.bf16.mxu0 0
      %1384 = vmatpush1.bf16.msra.mxu0 0
      %1385 = vmatprep.mubr.bf16.mxu0 0
      %1386 = vmatmul.mubr.bf16.gmra.mrb[0].mxu0 %v1342
      %v1387 = vpop.f32.mrb[0].mxu0
      %v1388 = vadd.f32 0.0, %v1387
      %v1389 = vpop.f32.mrb[0].mxu0
      %v1390 = vadd.f32 0.0, %v1389
      %v1391 = vpop.f32.mrb[0].mxu0
      %v1392 = vadd.f32 0.0, %v1391
      %v1393 = vpop.f32.mrb[0].mxu0
      %v1394 = vadd.f32 0.0, %v1393
      %1395 = vmatprep.mubr.bf16.mxu0 0
      %1396 = vmatmul.mubr.bf16.gmra.mrb[0].mxu0 %v1345
      %v1397 = vpop.f32.mrb[0].mxu0
      %v1398 = vadd.f32 0.0, %v1397
      %v1399 = vpop.f32.mrb[0].mxu0
      %v1400 = vadd.f32 0.0, %v1399
      %v1401 = vpop.f32.mrb[0].mxu0
      %v1402 = vadd.f32 0.0, %v1401
      %v1403 = vpop.f32.mrb[0].mxu0
      %v1404 = vadd.f32 0.0, %v1403
      %1405 = vmatprep.mubr.bf16.mxu0 0
      %1406 = vmatmul.mubr.bf16.gmra.mrb[0].mxu0 %v1348
      %v1407 = vpop.f32.mrb[0].mxu0
      %v1408 = vadd.f32 0.0, %v1407
      %v1409 = vpop.f32.mrb[0].mxu0
      %v1410 = vadd.f32 0.0, %v1409
      %v1411 = vpop.f32.mrb[0].mxu0
      %v1412 = vadd.f32 0.0, %v1411
      %v1413 = vpop.f32.mrb[0].mxu0
      %v1414 = vadd.f32 0.0, %v1413
      %1415 = vmatprep.mubr.bf16.mxu0 0
      %1416 = vmatmul.mubr.bf16.gmra.mrb[0].mxu0 %v1351
      %v1417 = vpop.f32.mrb[0].mxu0
      %v1418 = vadd.f32 0.0, %v1417
      %v1419 = vpop.f32.mrb[0].mxu0
      %v1420 = vadd.f32 0.0, %v1419
      %v1421 = vpop.f32.mrb[0].mxu0
      %v1422 = vadd.f32 0.0, %v1421
      %v1423 = vpop.f32.mrb[0].mxu0
      %v1424 = vadd.f32 0.0, %v1423
      %1425 = vdwg.mxu0
      %1426 = vmatprep.subr.bf16.mxu0 %v1312
      %1427 = vmatpush1.bf16.msra.mxu0 %v1311
      %1428 = vmatprep.subr.bf16.mxu0 %v1316
      %1429 = vmatpush1.bf16.msra.mxu0 %v1315
      %1430 = vmatprep.subr.bf16.mxu0 %v1320
      %1431 = vmatpush1.bf16.msra.mxu0 %v1319
      %1432 = vmatprep.subr.bf16.mxu0 %v1324
      %1433 = vmatpush1.bf16.msra.mxu0 %v1323
      %1434 = vmatprep.subr.bf16.mxu0 0
      %1435 = vmatpush1.bf16.msra.mxu0 0
      %1436 = vmatprep.subr.bf16.mxu0 0
      %1437 = vmatpush1.bf16.msra.mxu0 0
      %1438 = vmatprep.subr.bf16.mxu0 0
      %1439 = vmatpush1.bf16.msra.mxu0 0
      %1440 = vmatprep.subr.bf16.mxu0 0
      %1441 = vmatpush1.bf16.msra.mxu0 0
      %1442 = vmatprep.subr.bf16.mxu0 0
      %1443 = vmatpush1.bf16.msra.mxu0 0
      %1444 = vmatprep.subr.bf16.mxu0 0
      %1445 = vmatpush1.bf16.msra.mxu0 0
      %1446 = vmatprep.subr.bf16.mxu0 0
      %1447 = vmatpush1.bf16.msra.mxu0 0
      %1448 = vmatprep.subr.bf16.mxu0 0
      %1449 = vmatpush1.bf16.msra.mxu0 0
      %1450 = vmatprep.subr.bf16.mxu0 0
      %1451 = vmatpush1.bf16.msra.mxu0 0
      %1452 = vmatprep.subr.bf16.mxu0 0
      %1453 = vmatpush1.bf16.msra.mxu0 0
      %1454 = vmatprep.subr.bf16.mxu0 0
      %1455 = vmatpush1.bf16.msra.mxu0 0
      %1456 = vmatprep.subr.bf16.mxu0 0
      %1457 = vmatpush1.bf16.msra.mxu0 0
      %1458 = vmatprep.mubr.bf16.mxu0 0
      %1459 = vmatmul.mubr.bf16.gmra.mrb[0].mxu0 %v1342
      %v1460 = vpop.f32.mrb[0].mxu0
      %v1461 = vadd.f32 0.0, %v1460
      %v1462 = vpop.f32.mrb[0].mxu0
      %v1463 = vadd.f32 0.0, %v1462
      %v1464 = vpop.f32.mrb[0].mxu0
      %v1465 = vadd.f32 0.0, %v1464
      %v1466 = vpop.f32.mrb[0].mxu0
      %v1467 = vadd.f32 0.0, %v1466
      %1468 = vmatprep.mubr.bf16.mxu0 0
      %1469 = vmatmul.mubr.bf16.gmra.mrb[0].mxu0 %v1345
      %v1470 = vpop.f32.mrb[0].mxu0
      %v1471 = vadd.f32 0.0, %v1470
      %v1472 = vpop.f32.mrb[0].mxu0
      %v1473 = vadd.f32 0.0, %v1472
      %v1474 = vpop.f32.mrb[0].mxu0
      %v1475 = vadd.f32 0.0, %v1474
      %v1476 = vpop.f32.mrb[0].mxu0
      %v1477 = vadd.f32 0.0, %v1476
      %1478 = vmatprep.mubr.bf16.mxu0 0
      %1479 = vmatmul.mubr.bf16.gmra.mrb[0].mxu0 %v1348
      %v1480 = vpop.f32.mrb[0].mxu0
      %v1481 = vadd.f32 0.0, %v1480
      %v1482 = vpop.f32.mrb[0].mxu0
      %v1483 = vadd.f32 0.0, %v1482
      %v1484 = vpop.f32.mrb[0].mxu0
      %v1485 = vadd.f32 0.0, %v1484
      %v1486 = vpop.f32.mrb[0].mxu0
      %v1487 = vadd.f32 0.0, %v1486
      %1488 = vmatprep.mubr.bf16.mxu0 0
      %1489 = vmatmul.mubr.bf16.gmra.mrb[0].mxu0 %v1351
      %v1490 = vpop.f32.mrb[0].mxu0
      %v1491 = vadd.f32 0.0, %v1490
      %v1492 = vpop.f32.mrb[0].mxu0
      %v1493 = vadd.f32 0.0, %v1492
      %v1494 = vpop.f32.mrb[0].mxu0
      %v1495 = vadd.f32 0.0, %v1494
      %v1496 = vpop.f32.mrb[0].mxu0
      %v1497 = vadd.f32 0.0, %v1496
      %1498 = vdwg.mxu0
      %v1499 = vpack.c.bf16 %v1392, %v1388
      %v1500 = vpack.c.bf16 %v1394, %v1390
      %v1501 = vpack.c.bf16 %v1465, %v1461
      %v1502 = vpack.c.bf16 %v1467, %v1463
      %v1503 = vpack.c.bf16 %v1402, %v1398
      %v1504 = vpack.c.bf16 %v1404, %v1400
      %v1505 = vpack.c.bf16 %v1475, %v1471
      %v1506 = vpack.c.bf16 %v1477, %v1473
      %v1507 = vpack.c.bf16 %v1412, %v1408
      %v1508 = vpack.c.bf16 %v1414, %v1410
      %v1509 = vpack.c.bf16 %v1485, %v1481
      %v1510 = vpack.c.bf16 %v1487, %v1483
      %v1511 = vpack.c.bf16 %v1422, %v1418
      %v1512 = vpack.c.bf16 %v1424, %v1420
      %v1513 = vpack.c.bf16 %v1495, %v1491
      %v1514 = vpack.c.bf16 %v1497, %v1493
      %v1515 = vld [vmem:[%s860] sm:$0xff]
      %v1516 = vld [vmem:[%s860 + $0x8] sm:$0xff]
      %v1517 = vld [vmem:[%s860 + $0x10] sm:$0xff]
      %v1518 = vld [vmem:[%s860 + $0x18] sm:$0xff]
      %v1519 = vld [vmem:[%s860 + $0x20] sm:$0xff]
      %v1520 = vld [vmem:[%s860 + $0x28] sm:$0xff]
      %v1521 = vld [vmem:[%s860 + $0x30] sm:$0xff]
      %v1522 = vld [vmem:[%s860 + $0x38] sm:$0xff]
      %v1523 = vld [vmem:[%s860 + $0x40] sm:$0xff]
      %v1524 = vld [vmem:[%s860 + $0x48] sm:$0xff]
      %v1525 = vld [vmem:[%s860 + $0x50] sm:$0xff]
      %v1526 = vld [vmem:[%s860 + $0x58] sm:$0xff]
      %v1527 = vld [vmem:[%s860 + $0x60] sm:$0xff]
      %v1528 = vld [vmem:[%s860 + $0x68] sm:$0xff]
      %v1529 = vld [vmem:[%s860 + $0x70] sm:$0xff]
      %v1530 = vld [vmem:[%s860 + $0x78] sm:$0xff]
      %v1547 = vunpack.c.l.b16 %v1515
      %v1548 = vunpack.c.h.b16 %v1515
      %v1549 = vunpack.c.l.b16 %v1516
      %v1550 = vunpack.c.h.b16 %v1516
      %v1551 = vunpack.c.l.b16 %v1517
      %v1552 = vunpack.c.h.b16 %v1517
      %v1553 = vunpack.c.l.b16 %v1518
      %v1554 = vunpack.c.h.b16 %v1518
      %v1555 = vunpack.c.l.b16 %v1519
      %v1556 = vunpack.c.h.b16 %v1519
      %v1557 = vunpack.c.l.b16 %v1520
      %v1558 = vunpack.c.h.b16 %v1520
      %v1559 = vunpack.c.l.b16 %v1521
      %v1560 = vunpack.c.h.b16 %v1521
      %v1561 = vunpack.c.l.b16 %v1522
      %v1562 = vunpack.c.h.b16 %v1522
      %v1563 = vunpack.c.l.b16 %v1523
      %v1564 = vunpack.c.h.b16 %v1523
      %v1565 = vunpack.c.l.b16 %v1524
      %v1566 = vunpack.c.h.b16 %v1524
      %v1567 = vunpack.c.l.b16 %v1525
      %v1568 = vunpack.c.h.b16 %v1525
      %v1569 = vunpack.c.l.b16 %v1526
      %v1570 = vunpack.c.h.b16 %v1526
      %v1571 = vunpack.c.l.b16 %v1527
      %v1572 = vunpack.c.h.b16 %v1527
      %v1573 = vunpack.c.l.b16 %v1528
      %v1574 = vunpack.c.h.b16 %v1528
      %v1575 = vunpack.c.l.b16 %v1529
      %v1576 = vunpack.c.h.b16 %v1529
      %v1577 = vunpack.c.l.b16 %v1530
      %v1578 = vunpack.c.h.b16 %v1530
      %v1579 = vpack.c.b16 %v1551, %v1547
      %v1580 = vpack.c.b16 %v1552, %v1548
      %v1581 = vpack.c.b16 %v1553, %v1549
      %v1582 = vpack.c.b16 %v1554, %v1550
      %v1583 = vpack.c.b16 %v1559, %v1555
      %v1584 = vpack.c.b16 %v1560, %v1556
      %v1585 = vpack.c.b16 %v1561, %v1557
      %v1586 = vpack.c.b16 %v1562, %v1558
      %v1587 = vpack.c.b16 %v1567, %v1563
      %v1588 = vpack.c.b16 %v1568, %v1564
      %v1589 = vpack.c.b16 %v1569, %v1565
      %v1590 = vpack.c.b16 %v1570, %v1566
      %v1591 = vpack.c.b16 %v1575, %v1571
      %v1592 = vpack.c.b16 %v1576, %v1572
      %v1593 = vpack.c.b16 %v1577, %v1573
      %v1594 = vpack.c.b16 %v1578, %v1574
      %1611 = vmatprep.subr.bf16.mxu0 %v1580
      %1612 = vmatpush1.bf16.msra.mxu0 %v1579
      %1613 = vmatprep.subr.bf16.mxu0 %v1584
      %1614 = vmatpush1.bf16.msra.mxu0 %v1583
      %1615 = vmatprep.subr.bf16.mxu0 %v1588
      %1616 = vmatpush1.bf16.msra.mxu0 %v1587
      %1617 = vmatprep.subr.bf16.mxu0 %v1592
      %1618 = vmatpush1.bf16.msra.mxu0 %v1591
      %1619 = vmatprep.subr.bf16.mxu0 0
      %1620 = vmatpush1.bf16.msra.mxu0 0
      %1621 = vmatprep.subr.bf16.mxu0 0
      %1622 = vmatpush1.bf16.msra.mxu0 0
      %1623 = vmatprep.subr.bf16.mxu0 0
      %1624 = vmatpush1.bf16.msra.mxu0 0
      %1625 = vmatprep.subr.bf16.mxu0 0
      %1626 = vmatpush1.bf16.msra.mxu0 0
      %1627 = vmatprep.subr.bf16.mxu0 0
      %1628 = vmatpush1.bf16.msra.mxu0 0
      %1629 = vmatprep.subr.bf16.mxu0 0
      %1630 = vmatpush1.bf16.msra.mxu0 0
      %1631 = vmatprep.subr.bf16.mxu0 0
      %1632 = vmatpush1.bf16.msra.mxu0 0
      %1633 = vmatprep.subr.bf16.mxu0 0
      %1634 = vmatpush1.bf16.msra.mxu0 0
      %1635 = vmatprep.subr.bf16.mxu0 0
      %1636 = vmatpush1.bf16.msra.mxu0 0
      %1637 = vmatprep.subr.bf16.mxu0 0
      %1638 = vmatpush1.bf16.msra.mxu0 0
      %1639 = vmatprep.subr.bf16.mxu0 0
      %1640 = vmatpush1.bf16.msra.mxu0 0
      %1641 = vmatprep.subr.bf16.mxu0 0
      %1642 = vmatpush1.bf16.msra.mxu0 0
      %1643 = vmatprep.mubr.bf16.mxu0 0
      %1644 = vmatmul.mubr.bf16.gmra.mrb[0].mxu0 %v1342
      %v1645 = vpop.f32.mrb[0].mxu0
      %v1646 = vadd.f32 0.0, %v1645
      %v1647 = vpop.f32.mrb[0].mxu0
      %v1648 = vadd.f32 0.0, %v1647
      %v1649 = vpop.f32.mrb[0].mxu0
      %v1650 = vadd.f32 0.0, %v1649
      %v1651 = vpop.f32.mrb[0].mxu0
      %v1652 = vadd.f32 0.0, %v1651
      %1653 = vmatprep.mubr.bf16.mxu0 0
      %1654 = vmatmul.mubr.bf16.gmra.mrb[0].mxu0 %v1345
      %v1655 = vpop.f32.mrb[0].mxu0
      %v1656 = vadd.f32 0.0, %v1655
      %v1657 = vpop.f32.mrb[0].mxu0
      %v1658 = vadd.f32 0.0, %v1657
      %v1659 = vpop.f32.mrb[0].mxu0
      %v1660 = vadd.f32 0.0, %v1659
      %v1661 = vpop.f32.mrb[0].mxu0
      %v1662 = vadd.f32 0.0, %v1661
      %1663 = vmatprep.mubr.bf16.mxu0 0
      %1664 = vmatmul.mubr.bf16.gmra.mrb[0].mxu0 %v1348
      %v1665 = vpop.f32.mrb[0].mxu0
      %v1666 = vadd.f32 0.0, %v1665
      %v1667 = vpop.f32.mrb[0].mxu0
      %v1668 = vadd.f32 0.0, %v1667
      %v1669 = vpop.f32.mrb[0].mxu0
      %v1670 = vadd.f32 0.0, %v1669
      %v1671 = vpop.f32.mrb[0].mxu0
      %v1672 = vadd.f32 0.0, %v1671
      %1673 = vmatprep.mubr.bf16.mxu0 0
      %1674 = vmatmul.mubr.bf16.gmra.mrb[0].mxu0 %v1351
      %v1675 = vpop.f32.mrb[0].mxu0
      %v1676 = vadd.f32 0.0, %v1675
      %v1677 = vpop.f32.mrb[0].mxu0
      %v1678 = vadd.f32 0.0, %v1677
      %v1679 = vpop.f32.mrb[0].mxu0
      %v1680 = vadd.f32 0.0, %v1679
      %v1681 = vpop.f32.mrb[0].mxu0
      %v1682 = vadd.f32 0.0, %v1681
      %1683 = vdwg.mxu0
      %1684 = vmatprep.subr.bf16.mxu0 %v1582
      %1685 = vmatpush1.bf16.msra.mxu0 %v1581
      %1686 = vmatprep.subr.bf16.mxu0 %v1586
      %1687 = vmatpush1.bf16.msra.mxu0 %v1585
      %1688 = vmatprep.subr.bf16.mxu0 %v1590
      %1689 = vmatpush1.bf16.msra.mxu0 %v1589
      %1690 = vmatprep.subr.bf16.mxu0 %v1594
      %1691 = vmatpush1.bf16.msra.mxu0 %v1593
      %1692 = vmatprep.subr.bf16.mxu0 0
      %1693 = vmatpush1.bf16.msra.mxu0 0
      %1694 = vmatprep.subr.bf16.mxu0 0
      %1695 = vmatpush1.bf16.msra.mxu0 0
      %1696 = vmatprep.subr.bf16.mxu0 0
      %1697 = vmatpush1.bf16.msra.mxu0 0
      %1698 = vmatprep.subr.bf16.mxu0 0
      %1699 = vmatpush1.bf16.msra.mxu0 0
      %1700 = vmatprep.subr.bf16.mxu0 0
      %1701 = vmatpush1.bf16.msra.mxu0 0
      %1702 = vmatprep.subr.bf16.mxu0 0
      %1703 = vmatpush1.bf16.msra.mxu0 0
      %1704 = vmatprep.subr.bf16.mxu0 0
      %1705 = vmatpush1.bf16.msra.mxu0 0
      %1706 = vmatprep.subr.bf16.mxu0 0
      %1707 = vmatpush1.bf16.msra.mxu0 0
      %1708 = vmatprep.subr.bf16.mxu0 0
      %1709 = vmatpush1.bf16.msra.mxu0 0
      %1710 = vmatprep.subr.bf16.mxu0 0
      %1711 = vmatpush1.bf16.msra.mxu0 0
      %1712 = vmatprep.subr.bf16.mxu0 0
      %1713 = vmatpush1.bf16.msra.mxu0 0
      %1714 = vmatprep.subr.bf16.mxu0 0
      %1715 = vmatpush1.bf16.msra.mxu0 0
      %1716 = vmatprep.mubr.bf16.mxu0 0
      %1717 = vmatmul.mubr.bf16.gmra.mrb[0].mxu0 %v1342
      %v1718 = vpop.f32.mrb[0].mxu0
      %v1719 = vadd.f32 0.0, %v1718
      %v1720 = vpop.f32.mrb[0].mxu0
      %v1721 = vadd.f32 0.0, %v1720
      %v1722 = vpop.f32.mrb[0].mxu0
      %v1723 = vadd.f32 0.0, %v1722
      %v1724 = vpop.f32.mrb[0].mxu0
      %v1725 = vadd.f32 0.0, %v1724
      %1726 = vmatprep.mubr.bf16.mxu0 0
      %1727 = vmatmul.mubr.bf16.gmra.mrb[0].mxu0 %v1345
      %v1728 = vpop.f32.mrb[0].mxu0
      %v1729 = vadd.f32 0.0, %v1728
      %v1730 = vpop.f32.mrb[0].mxu0
      %v1731 = vadd.f32 0.0, %v1730
      %v1732 = vpop.f32.mrb[0].mxu0
      %v1733 = vadd.f32 0.0, %v1732
      %v1734 = vpop.f32.mrb[0].mxu0
      %v1735 = vadd.f32 0.0, %v1734
      %1736 = vmatprep.mubr.bf16.mxu0 0
      %1737 = vmatmul.mubr.bf16.gmra.mrb[0].mxu0 %v1348
      %v1738 = vpop.f32.mrb[0].mxu0
      %v1739 = vadd.f32 0.0, %v1738
      %v1740 = vpop.f32.mrb[0].mxu0
      %v1741 = vadd.f32 0.0, %v1740
      %v1742 = vpop.f32.mrb[0].mxu0
      %v1743 = vadd.f32 0.0, %v1742
      %v1744 = vpop.f32.mrb[0].mxu0
      %v1745 = vadd.f32 0.0, %v1744
      %1746 = vmatprep.mubr.bf16.mxu0 0
      %1747 = vmatmul.mubr.bf16.gmra.mrb[0].mxu0 %v1351
      %v1748 = vpop.f32.mrb[0].mxu0
      %v1749 = vadd.f32 0.0, %v1748
      %v1750 = vpop.f32.mrb[0].mxu0
      %v1751 = vadd.f32 0.0, %v1750
      %v1752 = vpop.f32.mrb[0].mxu0
      %v1753 = vadd.f32 0.0, %v1752
      %v1754 = vpop.f32.mrb[0].mxu0
      %v1755 = vadd.f32 0.0, %v1754
      %1756 = vdwg.mxu0
      %v1757 = vpack.c.bf16 %v1650, %v1646
      %v1758 = vpack.c.bf16 %v1652, %v1648
      %v1759 = vpack.c.bf16 %v1723, %v1719
      %v1760 = vpack.c.bf16 %v1725, %v1721
      %v1761 = vpack.c.bf16 %v1660, %v1656
      %v1762 = vpack.c.bf16 %v1662, %v1658
      %v1763 = vpack.c.bf16 %v1733, %v1729
      %v1764 = vpack.c.bf16 %v1735, %v1731
      %v1765 = vpack.c.bf16 %v1670, %v1666
      %v1766 = vpack.c.bf16 %v1672, %v1668
      %v1767 = vpack.c.bf16 %v1743, %v1739
      %v1768 = vpack.c.bf16 %v1745, %v1741
      %v1769 = vpack.c.bf16 %v1680, %v1676
      %v1770 = vpack.c.bf16 %v1682, %v1678
      %v1771 = vpack.c.bf16 %v1753, %v1749
      %v1772 = vpack.c.bf16 %v1755, %v1751
      %v1773 = vld [vmem:[%s865] sm:$0xff]
      %v1774 = vld [vmem:[%s865 + $0x8] sm:$0xff]
      %v1775 = vld [vmem:[%s865 + $0x10] sm:$0xff]
      %v1776 = vld [vmem:[%s865 + $0x18] sm:$0xff]
      %v1777 = vld [vmem:[%s865 + $0x20] sm:$0xff]
      %v1778 = vld [vmem:[%s865 + $0x28] sm:$0xff]
      %v1779 = vld [vmem:[%s865 + $0x30] sm:$0xff]
      %v1780 = vld [vmem:[%s865 + $0x38] sm:$0xff]
      %v1781 = vld [vmem:[%s865 + $0x40] sm:$0xff]
      %v1782 = vld [vmem:[%s865 + $0x48] sm:$0xff]
      %v1783 = vld [vmem:[%s865 + $0x50] sm:$0xff]
      %v1784 = vld [vmem:[%s865 + $0x58] sm:$0xff]
      %v1785 = vld [vmem:[%s865 + $0x60] sm:$0xff]
      %v1786 = vld [vmem:[%s865 + $0x68] sm:$0xff]
      %v1787 = vld [vmem:[%s865 + $0x70] sm:$0xff]
      %v1788 = vld [vmem:[%s865 + $0x78] sm:$0xff]
      %v1805 = vunpack.c.l.b16 %v1773
      %v1806 = vunpack.c.h.b16 %v1773
      %v1807 = vunpack.c.l.b16 %v1774
      %v1808 = vunpack.c.h.b16 %v1774
      %v1809 = vunpack.c.l.b16 %v1775
      %v1810 = vunpack.c.h.b16 %v1775
      %v1811 = vunpack.c.l.b16 %v1776
      %v1812 = vunpack.c.h.b16 %v1776
      %v1813 = vunpack.c.l.b16 %v1777
      %v1814 = vunpack.c.h.b16 %v1777
      %v1815 = vunpack.c.l.b16 %v1778
      %v1816 = vunpack.c.h.b16 %v1778
      %v1817 = vunpack.c.l.b16 %v1779
      %v1818 = vunpack.c.h.b16 %v1779
      %v1819 = vunpack.c.l.b16 %v1780
      %v1820 = vunpack.c.h.b16 %v1780
      %v1821 = vunpack.c.l.b16 %v1781
      %v1822 = vunpack.c.h.b16 %v1781
      %v1823 = vunpack.c.l.b16 %v1782
      %v1824 = vunpack.c.h.b16 %v1782
      %v1825 = vunpack.c.l.b16 %v1783
      %v1826 = vunpack.c.h.b16 %v1783
      %v1827 = vunpack.c.l.b16 %v1784
      %v1828 = vunpack.c.h.b16 %v1784
      %v1829 = vunpack.c.l.b16 %v1785
      %v1830 = vunpack.c.h.b16 %v1785
      %v1831 = vunpack.c.l.b16 %v1786
      %v1832 = vunpack.c.h.b16 %v1786
      %v1833 = vunpack.c.l.b16 %v1787
      %v1834 = vunpack.c.h.b16 %v1787
      %v1835 = vunpack.c.l.b16 %v1788
      %v1836 = vunpack.c.h.b16 %v1788
      %v1837 = vpack.c.b16 %v1809, %v1805
      %v1838 = vpack.c.b16 %v1810, %v1806
      %v1839 = vpack.c.b16 %v1811, %v1807
      %v1840 = vpack.c.b16 %v1812, %v1808
      %v1841 = vpack.c.b16 %v1817, %v1813
      %v1842 = vpack.c.b16 %v1818, %v1814
      %v1843 = vpack.c.b16 %v1819, %v1815
      %v1844 = vpack.c.b16 %v1820, %v1816
      %v1845 = vpack.c.b16 %v1825, %v1821
      %v1846 = vpack.c.b16 %v1826, %v1822
      %v1847 = vpack.c.b16 %v1827, %v1823
      %v1848 = vpack.c.b16 %v1828, %v1824
      %v1849 = vpack.c.b16 %v1833, %v1829
      %v1850 = vpack.c.b16 %v1834, %v1830
      %v1851 = vpack.c.b16 %v1835, %v1831
      %v1852 = vpack.c.b16 %v1836, %v1832
      %1869 = vmatprep.subr.bf16.mxu0 %v1838
      %1870 = vmatpush1.bf16.msra.mxu0 %v1837
      %1871 = vmatprep.subr.bf16.mxu0 %v1842
      %1872 = vmatpush1.bf16.msra.mxu0 %v1841
      %1873 = vmatprep.subr.bf16.mxu0 %v1846
      %1874 = vmatpush1.bf16.msra.mxu0 %v1845
      %1875 = vmatprep.subr.bf16.mxu0 %v1850
      %1876 = vmatpush1.bf16.msra.mxu0 %v1849
      %1877 = vmatprep.subr.bf16.mxu0 0
      %1878 = vmatpush1.bf16.msra.mxu0 0
      %1879 = vmatprep.subr.bf16.mxu0 0
      %1880 = vmatpush1.bf16.msra.mxu0 0
      %1881 = vmatprep.subr.bf16.mxu0 0
      %1882 = vmatpush1.bf16.msra.mxu0 0
      %1883 = vmatprep.subr.bf16.mxu0 0
      %1884 = vmatpush1.bf16.msra.mxu0 0
      %1885 = vmatprep.subr.bf16.mxu0 0
      %1886 = vmatpush1.bf16.msra.mxu0 0
      %1887 = vmatprep.subr.bf16.mxu0 0
      %1888 = vmatpush1.bf16.msra.mxu0 0
      %1889 = vmatprep.subr.bf16.mxu0 0
      %1890 = vmatpush1.bf16.msra.mxu0 0
      %1891 = vmatprep.subr.bf16.mxu0 0
      %1892 = vmatpush1.bf16.msra.mxu0 0
      %1893 = vmatprep.subr.bf16.mxu0 0
      %1894 = vmatpush1.bf16.msra.mxu0 0
      %1895 = vmatprep.subr.bf16.mxu0 0
      %1896 = vmatpush1.bf16.msra.mxu0 0
      %1897 = vmatprep.subr.bf16.mxu0 0
      %1898 = vmatpush1.bf16.msra.mxu0 0
      %1899 = vmatprep.subr.bf16.mxu0 0
      %1900 = vmatpush1.bf16.msra.mxu0 0
      %1901 = vmatprep.mubr.bf16.mxu0 0
      %1902 = vmatmul.mubr.bf16.gmra.mrb[0].mxu0 %v1342
      %v1903 = vpop.f32.mrb[0].mxu0
      %v1904 = vadd.f32 0.0, %v1903
      %v1905 = vpop.f32.mrb[0].mxu0
      %v1906 = vadd.f32 0.0, %v1905
      %v1907 = vpop.f32.mrb[0].mxu0
      %v1908 = vadd.f32 0.0, %v1907
      %v1909 = vpop.f32.mrb[0].mxu0
      %v1910 = vadd.f32 0.0, %v1909
      %1911 = vmatprep.mubr.bf16.mxu0 0
      %1912 = vmatmul.mubr.bf16.gmra.mrb[0].mxu0 %v1345
      %v1913 = vpop.f32.mrb[0].mxu0
      %v1914 = vadd.f32 0.0, %v1913
      %v1915 = vpop.f32.mrb[0].mxu0
      %v1916 = vadd.f32 0.0, %v1915
      %v1917 = vpop.f32.mrb[0].mxu0
      %v1918 = vadd.f32 0.0, %v1917
      %v1919 = vpop.f32.mrb[0].mxu0
      %v1920 = vadd.f32 0.0, %v1919
      %1921 = vmatprep.mubr.bf16.mxu0 0
      %1922 = vmatmul.mubr.bf16.gmra.mrb[0].mxu0 %v1348
      %v1923 = vpop.f32.mrb[0].mxu0
      %v1924 = vadd.f32 0.0, %v1923
      %v1925 = vpop.f32.mrb[0].mxu0
      %v1926 = vadd.f32 0.0, %v1925
      %v1927 = vpop.f32.mrb[0].mxu0
      %v1928 = vadd.f32 0.0, %v1927
      %v1929 = vpop.f32.mrb[0].mxu0
      %v1930 = vadd.f32 0.0, %v1929
      %1931 = vmatprep.mubr.bf16.mxu0 0
      %1932 = vmatmul.mubr.bf16.gmra.mrb[0].mxu0 %v1351
      %v1933 = vpop.f32.mrb[0].mxu0
      %v1934 = vadd.f32 0.0, %v1933
      %v1935 = vpop.f32.mrb[0].mxu0
      %v1936 = vadd.f32 0.0, %v1935
      %v1937 = vpop.f32.mrb[0].mxu0
      %v1938 = vadd.f32 0.0, %v1937
      %v1939 = vpop.f32.mrb[0].mxu0
      %v1940 = vadd.f32 0.0, %v1939
      %1941 = vdwg.mxu0
      %1942 = vmatprep.subr.bf16.mxu0 %v1840
      %1943 = vmatpush1.bf16.msra.mxu0 %v1839
      %1944 = vmatprep.subr.bf16.mxu0 %v1844
      %1945 = vmatpush1.bf16.msra.mxu0 %v1843
      %1946 = vmatprep.subr.bf16.mxu0 %v1848
      %1947 = vmatpush1.bf16.msra.mxu0 %v1847
      %1948 = vmatprep.subr.bf16.mxu0 %v1852
      %1949 = vmatpush1.bf16.msra.mxu0 %v1851
      %1950 = vmatprep.subr.bf16.mxu0 0
      %1951 = vmatpush1.bf16.msra.mxu0 0
      %1952 = vmatprep.subr.bf16.mxu0 0
      %1953 = vmatpush1.bf16.msra.mxu0 0
      %1954 = vmatprep.subr.bf16.mxu0 0
      %1955 = vmatpush1.bf16.msra.mxu0 0
      %1956 = vmatprep.subr.bf16.mxu0 0
      %1957 = vmatpush1.bf16.msra.mxu0 0
      %1958 = vmatprep.subr.bf16.mxu0 0
      %1959 = vmatpush1.bf16.msra.mxu0 0
      %1960 = vmatprep.subr.bf16.mxu0 0
      %1961 = vmatpush1.bf16.msra.mxu0 0
      %1962 = vmatprep.subr.bf16.mxu0 0
      %1963 = vmatpush1.bf16.msra.mxu0 0
      %1964 = vmatprep.subr.bf16.mxu0 0
      %1965 = vmatpush1.bf16.msra.mxu0 0
      %1966 = vmatprep.subr.bf16.mxu0 0
      %1967 = vmatpush1.bf16.msra.mxu0 0
      %1968 = vmatprep.subr.bf16.mxu0 0
      %1969 = vmatpush1.bf16.msra.mxu0 0
      %1970 = vmatprep.subr.bf16.mxu0 0
      %1971 = vmatpush1.bf16.msra.mxu0 0
      %1972 = vmatprep.subr.bf16.mxu0 0
      %1973 = vmatpush1.bf16.msra.mxu0 0
      %1974 = vmatprep.mubr.bf16.mxu0 0
      %1975 = vmatmul.mubr.bf16.gmra.mrb[0].mxu0 %v1342
      %v1976 = vpop.f32.mrb[0].mxu0
      %v1977 = vadd.f32 0.0, %v1976
      %v1978 = vpop.f32.mrb[0].mxu0
      %v1979 = vadd.f32 0.0, %v1978
      %v1980 = vpop.f32.mrb[0].mxu0
      %v1981 = vadd.f32 0.0, %v1980
      %v1982 = vpop.f32.mrb[0].mxu0
      %v1983 = vadd.f32 0.0, %v1982
      %1984 = vmatprep.mubr.bf16.mxu0 0
      %1985 = vmatmul.mubr.bf16.gmra.mrb[0].mxu0 %v1345
      %v1986 = vpop.f32.mrb[0].mxu0
      %v1987 = vadd.f32 0.0, %v1986
      %v1988 = vpop.f32.mrb[0].mxu0
      %v1989 = vadd.f32 0.0, %v1988
      %v1990 = vpop.f32.mrb[0].mxu0
      %v1991 = vadd.f32 0.0, %v1990
      %v1992 = vpop.f32.mrb[0].mxu0
      %v1993 = vadd.f32 0.0, %v1992
      %1994 = vmatprep.mubr.bf16.mxu0 0
      %1995 = vmatmul.mubr.bf16.gmra.mrb[0].mxu0 %v1348
      %v1996 = vpop.f32.mrb[0].mxu0
      %v1997 = vadd.f32 0.0, %v1996
      %v1998 = vpop.f32.mrb[0].mxu0
      %v1999 = vadd.f32 0.0, %v1998
      %v2000 = vpop.f32.mrb[0].mxu0
      %v2001 = vadd.f32 0.0, %v2000
      %v2002 = vpop.f32.mrb[0].mxu0
      %v2003 = vadd.f32 0.0, %v2002
      %2004 = vmatprep.mubr.bf16.mxu0 0
      %2005 = vmatmul.mubr.bf16.gmra.mrb[0].mxu0 %v1351
      %v2006 = vpop.f32.mrb[0].mxu0
      %v2007 = vadd.f32 0.0, %v2006
      %v2008 = vpop.f32.mrb[0].mxu0
      %v2009 = vadd.f32 0.0, %v2008
      %v2010 = vpop.f32.mrb[0].mxu0
      %v2011 = vadd.f32 0.0, %v2010
      %v2012 = vpop.f32.mrb[0].mxu0
      %v2013 = vadd.f32 0.0, %v2012
      %2014 = vdwg.mxu0
      %v2015 = vpack.c.bf16 %v1908, %v1904
      %v2016 = vpack.c.bf16 %v1910, %v1906
      %v2017 = vpack.c.bf16 %v1981, %v1977
      %v2018 = vpack.c.bf16 %v1983, %v1979
      %v2019 = vpack.c.bf16 %v1918, %v1914
      %v2020 = vpack.c.bf16 %v1920, %v1916
      %v2021 = vpack.c.bf16 %v1991, %v1987
      %v2022 = vpack.c.bf16 %v1993, %v1989
      %v2023 = vpack.c.bf16 %v1928, %v1924
      %v2024 = vpack.c.bf16 %v1930, %v1926
      %v2025 = vpack.c.bf16 %v2001, %v1997
      %v2026 = vpack.c.bf16 %v2003, %v1999
      %v2027 = vpack.c.bf16 %v1938, %v1934
      %v2028 = vpack.c.bf16 %v1940, %v1936
      %v2029 = vpack.c.bf16 %v2011, %v2007
      %v2030 = vpack.c.bf16 %v2013, %v2009
      %v2032 = vsel %vm1107, %v1499, 0
      %v2035 = vsel %vm1107, %v1503, 0
      %v2038 = vsel %vm1107, %v1507, 0
      %v2041 = vsel %vm1107, %v1511, 0
      %v2044 = vsel %vm1107, %v1757, 0
      %v2047 = vsel %vm1107, %v1761, 0
      %v2050 = vsel %vm1107, %v1765, 0
      %v2053 = vsel %vm1107, %v1769, 0
      %2055 = vmatprep.subr.bf16.mxu0 0
      %2056 = vmatpush1.bf16.xpose.msra.mxu0 %v2044
      %2057 = vmatprep.subr.bf16.mxu0 0
      %2058 = vmatpush1.bf16.xpose.msra.mxu0 %v2047
      %2059 = vmatprep.subr.bf16.mxu0 0
      %2060 = vmatpush1.bf16.xpose.msra.mxu0 %v2050
      %2061 = vmatprep.subr.bf16.mxu0 0
      %2062 = vmatpush1.bf16.xpose.msra.mxu0 %v2053
      %2063 = vmatprep.subr.bf16.mxu0 0
      %2064 = vmatpush1.bf16.xpose.msra.mxu0 0
      %2065 = vmatprep.subr.bf16.mxu0 0
      %2066 = vmatpush1.bf16.xpose.msra.mxu0 0
      %2067 = vmatprep.subr.bf16.mxu0 0
      %2068 = vmatpush1.bf16.xpose.msra.mxu0 0
      %2069 = vmatprep.subr.bf16.mxu0 0
      %2070 = vmatpush1.bf16.xpose.msra.mxu0 0
      %2071 = vmatprep.subr.bf16.mxu0 0
      %2072 = vmatpush1.bf16.xpose.msra.mxu0 0
      %2073 = vmatprep.subr.bf16.mxu0 0
      %2074 = vmatpush1.bf16.xpose.msra.mxu0 0
      %2075 = vmatprep.subr.bf16.mxu0 0
      %2076 = vmatpush1.bf16.xpose.msra.mxu0 0
      %2077 = vmatprep.subr.bf16.mxu0 0
      %2078 = vmatpush1.bf16.xpose.msra.mxu0 0
      %2079 = vmatprep.subr.bf16.mxu0 0
      %2080 = vmatpush1.bf16.xpose.msra.mxu0 0
      %2081 = vmatprep.subr.bf16.mxu0 0
      %2082 = vmatpush1.bf16.xpose.msra.mxu0 0
      %2083 = vmatprep.subr.bf16.mxu0 0
      %2084 = vmatpush1.bf16.xpose.msra.mxu0 0
      %2085 = vmatprep.subr.bf16.mxu0 0
      %2086 = vmatpush1.bf16.xpose.msra.mxu0 0
      %2087 = vmatprep.mubr.bf16.mxu0 0
      %2088 = vmatmul.mubr.bf16.gmra.mrb[0].mxu0 %v2032
      %v2089 = vpop.f32.mrb[0].mxu0
      %v2090 = vadd.f32 %v912, %v2089
      %v2091 = vpop.f32.mrb[0].mxu0
      %v2092 = vpop.f32.mrb[0].mxu0
      %v2093 = vadd.f32 %v912, %v2092
      %v2094 = vpop.f32.mrb[0].mxu0
      %2095 = vmatprep.mubr.bf16.mxu0 0
      %2096 = vmatmul.mubr.bf16.gmra.mrb[0].mxu0 %v2035
      %v2097 = vpop.f32.mrb[0].mxu0
      %v2098 = vadd.f32 %v912, %v2097
      %v2099 = vpop.f32.mrb[0].mxu0
      %v2100 = vpop.f32.mrb[0].mxu0
      %v2101 = vadd.f32 %v912, %v2100
      %v2102 = vpop.f32.mrb[0].mxu0
      %2103 = vmatprep.mubr.bf16.mxu0 0
      %2104 = vmatmul.mubr.bf16.gmra.mrb[0].mxu0 %v2038
      %v2105 = vpop.f32.mrb[0].mxu0
      %v2106 = vadd.f32 %v912, %v2105
      %v2107 = vpop.f32.mrb[0].mxu0
      %v2108 = vpop.f32.mrb[0].mxu0
      %v2109 = vadd.f32 %v912, %v2108
      %v2110 = vpop.f32.mrb[0].mxu0
      %2111 = vmatprep.mubr.bf16.mxu0 0
      %2112 = vmatmul.mubr.bf16.gmra.mrb[0].mxu0 %v2041
      %v2113 = vpop.f32.mrb[0].mxu0
      %v2114 = vadd.f32 %v912, %v2113
      %v2115 = vpop.f32.mrb[0].mxu0
      %v2116 = vpop.f32.mrb[0].mxu0
      %v2117 = vadd.f32 %v912, %v2116
      %v2118 = vpop.f32.mrb[0].mxu0
      %2119 = vdwg.mxu0
      %v2120 = vsel %vm1107, %v2090, -inf
      %2121 = vmax.xlane.f32.xlu0 %v2120
      %v2122 = vpop.xlane.xlu0 %2121
      %v2123 = vsel %vm1107, %v2093, -inf
      %2124 = vmax.xlane.f32.xlu0 %v2123
      %v2125 = vpop.xlane.xlu0 %2124
      %v2126 = vsel %vm1107, %v2098, -inf
      %2127 = vmax.xlane.f32.xlu0 %v2126
      %v2128 = vpop.xlane.xlu0 %2127
      %v2129 = vsel %vm1107, %v2101, -inf
      %2130 = vmax.xlane.f32.xlu0 %v2129
      %v2131 = vpop.xlane.xlu0 %2130
      %v2132 = vsel %vm1107, %v2106, -inf
      %2133 = vmax.xlane.f32.xlu0 %v2132
      %v2134 = vpop.xlane.xlu0 %2133
      %v2135 = vsel %vm1107, %v2109, -inf
      %2136 = vmax.xlane.f32.xlu0 %v2135
      %v2137 = vpop.xlane.xlu0 %2136
      %v2138 = vsel %vm1107, %v2114, -inf
      %2139 = vmax.xlane.f32.xlu0 %v2138
      %v2140 = vpop.xlane.xlu0 %2139
      %v2141 = vsel %vm1107, %v2117, -inf
      %2142 = vmax.xlane.f32.xlu0 %v2141
      %v2143 = vpop.xlane.xlu0 %2142
      %v2144 = vsub.f32 %v2090, %v2122
      %v2145 = vsub.f32 %v2093, %v2125
      %v2146 = vsub.f32 %v2098, %v2128
      %v2147 = vsub.f32 %v2101, %v2131
      %v2148 = vsub.f32 %v2106, %v2134
      %v2149 = vsub.f32 %v2109, %v2137
      %v2150 = vsub.f32 %v2114, %v2140
      %v2151 = vsub.f32 %v2117, %v2143
      %v2152 = vmul.f32 %v2144, 1.442695
      %v2153 = vpow.pop %v2152
      %v2154 = vmul.f32 %v2145, 1.442695
      %v2155 = vpow.pop %v2154
      %v2156 = vmul.f32 %v2146, 1.442695
      %v2157 = vpow.pop %v2156
      %v2158 = vmul.f32 %v2147, 1.442695
      %v2159 = vpow.pop %v2158
      %v2160 = vmul.f32 %v2148, 1.442695
      %v2161 = vpow.pop %v2160
      %v2162 = vmul.f32 %v2149, 1.442695
      %v2163 = vpow.pop %v2162
      %v2164 = vmul.f32 %v2150, 1.442695
      %v2165 = vpow.pop %v2164
      %v2166 = vmul.f32 %v2151, 1.442695
      %v2167 = vpow.pop %v2166
      %v2168 = vsel %vm1107, %v2153, 0.0
      %2169 = vadd.xlane.f32.xlu0 %v2168
      %v2170 = vpop.xlane.xlu0 %2169
      %v2171 = vsel %vm1107, %v2155, 0.0
      %2172 = vadd.xlane.f32.xlu0 %v2171
      %v2173 = vpop.xlane.xlu0 %2172
      %v2174 = vsel %vm1107, %v2157, 0.0
      %2175 = vadd.xlane.f32.xlu0 %v2174
      %v2176 = vpop.xlane.xlu0 %2175
      %v2177 = vsel %vm1107, %v2159, 0.0
      %2178 = vadd.xlane.f32.xlu0 %v2177
      %v2179 = vpop.xlane.xlu0 %2178
      %v2180 = vsel %vm1107, %v2161, 0.0
      %2181 = vadd.xlane.f32.xlu0 %v2180
      %v2182 = vpop.xlane.xlu0 %2181
      %v2183 = vsel %vm1107, %v2163, 0.0
      %2184 = vadd.xlane.f32.xlu0 %v2183
      %v2185 = vpop.xlane.xlu0 %2184
      %v2186 = vsel %vm1107, %v2165, 0.0
      %2187 = vadd.xlane.f32.xlu0 %v2186
      %v2188 = vpop.xlane.xlu0 %2187
      %v2189 = vsel %vm1107, %v2167, 0.0
      %2190 = vadd.xlane.f32.xlu0 %v2189
      %v2191 = vpop.xlane.xlu0 %2190
      %v2192 = vrcp.pop %v2170
      %v2193 = vrcp.pop %v2173
      %v2194 = vrcp.pop %v2176
      %v2195 = vrcp.pop %v2179
      %v2196 = vrcp.pop %v2182
      %v2197 = vrcp.pop %v2185
      %v2198 = vrcp.pop %v2188
      %v2199 = vrcp.pop %v2191
      %v2200 = vmul.f32 %v2153, %v2192
      %v2201 = vmul.f32 %v2155, %v2193
      %v2202 = vmul.f32 %v2157, %v2194
      %v2203 = vmul.f32 %v2159, %v2195
      %v2204 = vmul.f32 %v2161, %v2196
      %v2205 = vmul.f32 %v2163, %v2197
      %v2206 = vmul.f32 %v2165, %v2198
      %v2207 = vmul.f32 %v2167, %v2199
      %v2208 = vpack.c.bf16 %v2201, %v2200
      %v2209 = vpack.c.bf16 %v2203, %v2202
      %v2210 = vpack.c.bf16 %v2205, %v2204
      %v2211 = vpack.c.bf16 %v2207, %v2206
      %v2213 = vsel %vm1107, %v2208, 0
      %v2216 = vsel %vm1107, %v2209, 0
      %v2219 = vsel %vm1107, %v2210, 0
      %v2222 = vsel %vm1107, %v2211, 0
      %2224 = vmatprep.subr.bf16.mxu0 0
      %2225 = vmatpush1.bf16.msra.mxu0 %v2015
      %2226 = vmatprep.subr.bf16.mxu0 0
      %2227 = vmatpush1.bf16.msra.mxu0 %v2019
      %2228 = vmatprep.subr.bf16.mxu0 0
      %2229 = vmatpush1.bf16.msra.mxu0 %v2023
      %2230 = vmatprep.subr.bf16.mxu0 0
      %2231 = vmatpush1.bf16.msra.mxu0 %v2027
      %2232 = vmatprep.subr.bf16.mxu0 0
      %2233 = vmatpush1.bf16.msra.mxu0 0
      %2234 = vmatprep.subr.bf16.mxu0 0
      %2235 = vmatpush1.bf16.msra.mxu0 0
      %2236 = vmatprep.subr.bf16.mxu0 0
      %2237 = vmatpush1.bf16.msra.mxu0 0
      %2238 = vmatprep.subr.bf16.mxu0 0
      %2239 = vmatpush1.bf16.msra.mxu0 0
      %2240 = vmatprep.subr.bf16.mxu0 0
      %2241 = vmatpush1.bf16.msra.mxu0 0
      %2242 = vmatprep.subr.bf16.mxu0 0
      %2243 = vmatpush1.bf16.msra.mxu0 0
      %2244 = vmatprep.subr.bf16.mxu0 0
      %2245 = vmatpush1.bf16.msra.mxu0 0
      %2246 = vmatprep.subr.bf16.mxu0 0
      %2247 = vmatpush1.bf16.msra.mxu0 0
      %2248 = vmatprep.subr.bf16.mxu0 0
      %2249 = vmatpush1.bf16.msra.mxu0 0
      %2250 = vmatprep.subr.bf16.mxu0 0
      %2251 = vmatpush1.bf16.msra.mxu0 0
      %2252 = vmatprep.subr.bf16.mxu0 0
      %2253 = vmatpush1.bf16.msra.mxu0 0
      %2254 = vmatprep.subr.bf16.mxu0 0
      %2255 = vmatpush1.bf16.msra.mxu0 0
      %2256 = vmatprep.mubr.bf16.mxu0 0
      %2257 = vmatmul.mubr.bf16.gmra.mrb[0].mxu0 %v2213
      %v2258 = vpop.f32.mrb[0].mxu0
      %v2259 = vadd.f32 0.0, %v2258
      %v2260 = vpop.f32.mrb[0].mxu0
      %v2261 = vpop.f32.mrb[0].mxu0
      %v2262 = vadd.f32 0.0, %v2261
      %v2263 = vpop.f32.mrb[0].mxu0
      %2264 = vmatprep.mubr.bf16.mxu0 0
      %2265 = vmatmul.mubr.bf16.gmra.mrb[0].mxu0 %v2216
      %v2266 = vpop.f32.mrb[0].mxu0
      %v2267 = vadd.f32 0.0, %v2266
      %v2268 = vpop.f32.mrb[0].mxu0
      %v2269 = vpop.f32.mrb[0].mxu0
      %v2270 = vadd.f32 0.0, %v2269
      %v2271 = vpop.f32.mrb[0].mxu0
      %2272 = vmatprep.mubr.bf16.mxu0 0
      %2273 = vmatmul.mubr.bf16.gmra.mrb[0].mxu0 %v2219
      %v2274 = vpop.f32.mrb[0].mxu0
      %v2275 = vadd.f32 0.0, %v2274
      %v2276 = vpop.f32.mrb[0].mxu0
      %v2277 = vpop.f32.mrb[0].mxu0
      %v2278 = vadd.f32 0.0, %v2277
      %v2279 = vpop.f32.mrb[0].mxu0
      %2280 = vmatprep.mubr.bf16.mxu0 0
      %2281 = vmatmul.mubr.bf16.gmra.mrb[0].mxu0 %v2222
      %v2282 = vpop.f32.mrb[0].mxu0
      %v2283 = vadd.f32 0.0, %v2282
      %v2284 = vpop.f32.mrb[0].mxu0
      %v2285 = vpop.f32.mrb[0].mxu0
      %v2286 = vadd.f32 0.0, %v2285
      %v2287 = vpop.f32.mrb[0].mxu0
      %2288 = vdwg.mxu0
      %v2289 = vpack.c.bf16 %v2262, %v2259
      %v2290 = vpack.c.bf16 %v2270, %v2267
      %v2291 = vpack.c.bf16 %v2278, %v2275
      %v2292 = vpack.c.bf16 %v2286, %v2283
      %2297 = vrot.lane.b32.xlu0 %v1499, 64
      %v2298 = vpop.permute.xlu0 %2297
      %2299 = vrot.lane.b32.xlu0 %v1503, 64
      %v2300 = vpop.permute.xlu0 %2299
      %2301 = vrot.lane.b32.xlu0 %v1507, 64
      %v2302 = vpop.permute.xlu0 %2301
      %2303 = vrot.lane.b32.xlu0 %v1511, 64
      %v2304 = vpop.permute.xlu0 %2303
      %2309 = vrot.lane.b32.xlu0 %v1757, 64
      %v2310 = vpop.permute.xlu0 %2309
      %2311 = vrot.lane.b32.xlu0 %v1761, 64
      %v2312 = vpop.permute.xlu0 %2311
      %2313 = vrot.lane.b32.xlu0 %v1765, 64
      %v2314 = vpop.permute.xlu0 %2313
      %2315 = vrot.lane.b32.xlu0 %v1769, 64
      %v2316 = vpop.permute.xlu0 %2315
      %v2318 = vsel %vm1107, %v2298, 0
      %v2321 = vsel %vm1107, %v2300, 0
      %v2324 = vsel %vm1107, %v2302, 0
      %v2327 = vsel %vm1107, %v2304, 0
      %v2330 = vsel %vm1107, %v2310, 0
      %v2333 = vsel %vm1107, %v2312, 0
      %v2336 = vsel %vm1107, %v2314, 0
      %v2339 = vsel %vm1107, %v2316, 0
      %2341 = vmatprep.subr.bf16.mxu0 0
      %2342 = vmatpush1.bf16.xpose.msra.mxu0 %v2330
      %2343 = vmatprep.subr.bf16.mxu0 0
      %2344 = vmatpush1.bf16.xpose.msra.mxu0 %v2333
      %2345 = vmatprep.subr.bf16.mxu0 0
      %2346 = vmatpush1.bf16.xpose.msra.mxu0 %v2336
      %2347 = vmatprep.subr.bf16.mxu0 0
      %2348 = vmatpush1.bf16.xpose.msra.mxu0 %v2339
      %2349 = vmatprep.subr.bf16.mxu0 0
      %2350 = vmatpush1.bf16.xpose.msra.mxu0 0
      %2351 = vmatprep.subr.bf16.mxu0 0
      %2352 = vmatpush1.bf16.xpose.msra.mxu0 0
      %2353 = vmatprep.subr.bf16.mxu0 0
      %2354 = vmatpush1.bf16.xpose.msra.mxu0 0
      %2355 = vmatprep.subr.bf16.mxu0 0
      %2356 = vmatpush1.bf16.xpose.msra.mxu0 0
      %2357 = vmatprep.subr.bf16.mxu0 0
      %2358 = vmatpush1.bf16.xpose.msra.mxu0 0
      %2359 = vmatprep.subr.bf16.mxu0 0
      %2360 = vmatpush1.bf16.xpose.msra.mxu0 0
      %2361 = vmatprep.subr.bf16.mxu0 0
      %2362 = vmatpush1.bf16.xpose.msra.mxu0 0
      %2363 = vmatprep.subr.bf16.mxu0 0
      %2364 = vmatpush1.bf16.xpose.msra.mxu0 0
      %2365 = vmatprep.subr.bf16.mxu0 0
      %2366 = vmatpush1.bf16.xpose.msra.mxu0 0
      %2367 = vmatprep.subr.bf16.mxu0 0
      %2368 = vmatpush1.bf16.xpose.msra.mxu0 0
      %2369 = vmatprep.subr.bf16.mxu0 0
      %2370 = vmatpush1.bf16.xpose.msra.mxu0 0
      %2371 = vmatprep.subr.bf16.mxu0 0
      %2372 = vmatpush1.bf16.xpose.msra.mxu0 0
      %2373 = vmatprep.mubr.bf16.mxu0 0
      %2374 = vmatmul.mubr.bf16.gmra.mrb[0].mxu0 %v2318
      %v2375 = vpop.f32.mrb[0].mxu0
      %v2376 = vadd.f32 %v912, %v2375
      %v2377 = vpop.f32.mrb[0].mxu0
      %v2378 = vpop.f32.mrb[0].mxu0
      %v2379 = vadd.f32 %v912, %v2378
      %v2380 = vpop.f32.mrb[0].mxu0
      %2381 = vmatprep.mubr.bf16.mxu0 0
      %2382 = vmatmul.mubr.bf16.gmra.mrb[0].mxu0 %v2321
      %v2383 = vpop.f32.mrb[0].mxu0
      %v2384 = vadd.f32 %v912, %v2383
      %v2385 = vpop.f32.mrb[0].mxu0
      %v2386 = vpop.f32.mrb[0].mxu0
      %v2387 = vadd.f32 %v912, %v2386
      %v2388 = vpop.f32.mrb[0].mxu0
      %2389 = vmatprep.mubr.bf16.mxu0 0
      %2390 = vmatmul.mubr.bf16.gmra.mrb[0].mxu0 %v2324
      %v2391 = vpop.f32.mrb[0].mxu0
      %v2392 = vadd.f32 %v912, %v2391
      %v2393 = vpop.f32.mrb[0].mxu0
      %v2394 = vpop.f32.mrb[0].mxu0
      %v2395 = vadd.f32 %v912, %v2394
      %v2396 = vpop.f32.mrb[0].mxu0
      %2397 = vmatprep.mubr.bf16.mxu0 0
      %2398 = vmatmul.mubr.bf16.gmra.mrb[0].mxu0 %v2327
      %v2399 = vpop.f32.mrb[0].mxu0
      %v2400 = vadd.f32 %v912, %v2399
      %v2401 = vpop.f32.mrb[0].mxu0
      %v2402 = vpop.f32.mrb[0].mxu0
      %v2403 = vadd.f32 %v912, %v2402
      %v2404 = vpop.f32.mrb[0].mxu0
      %2405 = vdwg.mxu0
      %v2406 = vsel %vm1107, %v2376, -inf
      %2407 = vmax.xlane.f32.xlu0 %v2406
      %v2408 = vpop.xlane.xlu0 %2407
      %v2409 = vsel %vm1107, %v2379, -inf
      %2410 = vmax.xlane.f32.xlu0 %v2409
      %v2411 = vpop.xlane.xlu0 %2410
      %v2412 = vsel %vm1107, %v2384, -inf
      %2413 = vmax.xlane.f32.xlu0 %v2412
      %v2414 = vpop.xlane.xlu0 %2413
      %v2415 = vsel %vm1107, %v2387, -inf
      %2416 = vmax.xlane.f32.xlu0 %v2415
      %v2417 = vpop.xlane.xlu0 %2416
      %v2418 = vsel %vm1107, %v2392, -inf
      %2419 = vmax.xlane.f32.xlu0 %v2418
      %v2420 = vpop.xlane.xlu0 %2419
      %v2421 = vsel %vm1107, %v2395, -inf
      %2422 = vmax.xlane.f32.xlu0 %v2421
      %v2423 = vpop.xlane.xlu0 %2422
      %v2424 = vsel %vm1107, %v2400, -inf
      %2425 = vmax.xlane.f32.xlu0 %v2424
      %v2426 = vpop.xlane.xlu0 %2425
      %v2427 = vsel %vm1107, %v2403, -inf
      %2428 = vmax.xlane.f32.xlu0 %v2427
      %v2429 = vpop.xlane.xlu0 %2428
      %v2430 = vsub.f32 %v2376, %v2408
      %v2431 = vsub.f32 %v2379, %v2411
      %v2432 = vsub.f32 %v2384, %v2414
      %v2433 = vsub.f32 %v2387, %v2417
      %v2434 = vsub.f32 %v2392, %v2420
      %v2435 = vsub.f32 %v2395, %v2423
      %v2436 = vsub.f32 %v2400, %v2426
      %v2437 = vsub.f32 %v2403, %v2429
      %v2438 = vmul.f32 %v2430, 1.442695
      %v2439 = vpow.pop %v2438
      %v2440 = vmul.f32 %v2431, 1.442695
      %v2441 = vpow.pop %v2440
      %v2442 = vmul.f32 %v2432, 1.442695
      %v2443 = vpow.pop %v2442
      %v2444 = vmul.f32 %v2433, 1.442695
      %v2445 = vpow.pop %v2444
      %v2446 = vmul.f32 %v2434, 1.442695
      %v2447 = vpow.pop %v2446
      %v2448 = vmul.f32 %v2435, 1.442695
      %v2449 = vpow.pop %v2448
      %v2450 = vmul.f32 %v2436, 1.442695
      %v2451 = vpow.pop %v2450
      %v2452 = vmul.f32 %v2437, 1.442695
      %v2453 = vpow.pop %v2452
      %v2454 = vsel %vm1107, %v2439, 0.0
      %2455 = vadd.xlane.f32.xlu0 %v2454
      %v2456 = vpop.xlane.xlu0 %2455
      %v2457 = vsel %vm1107, %v2441, 0.0
      %2458 = vadd.xlane.f32.xlu0 %v2457
      %v2459 = vpop.xlane.xlu0 %2458
      %v2460 = vsel %vm1107, %v2443, 0.0
      %2461 = vadd.xlane.f32.xlu0 %v2460
      %v2462 = vpop.xlane.xlu0 %2461
      %v2463 = vsel %vm1107, %v2445, 0.0
      %2464 = vadd.xlane.f32.xlu0 %v2463
      %v2465 = vpop.xlane.xlu0 %2464
      %v2466 = vsel %vm1107, %v2447, 0.0
      %2467 = vadd.xlane.f32.xlu0 %v2466
      %v2468 = vpop.xlane.xlu0 %2467
      %v2469 = vsel %vm1107, %v2449, 0.0
      %2470 = vadd.xlane.f32.xlu0 %v2469
      %v2471 = vpop.xlane.xlu0 %2470
      %v2472 = vsel %vm1107, %v2451, 0.0
      %2473 = vadd.xlane.f32.xlu0 %v2472
      %v2474 = vpop.xlane.xlu0 %2473
      %v2475 = vsel %vm1107, %v2453, 0.0
      %2476 = vadd.xlane.f32.xlu0 %v2475
      %v2477 = vpop.xlane.xlu0 %2476
      %v2478 = vrcp.pop %v2456
      %v2479 = vrcp.pop %v2459
      %v2480 = vrcp.pop %v2462
      %v2481 = vrcp.pop %v2465
      %v2482 = vrcp.pop %v2468
      %v2483 = vrcp.pop %v2471
      %v2484 = vrcp.pop %v2474
      %v2485 = vrcp.pop %v2477
      %v2486 = vmul.f32 %v2439, %v2478
      %v2487 = vmul.f32 %v2441, %v2479
      %v2488 = vmul.f32 %v2443, %v2480
      %v2489 = vmul.f32 %v2445, %v2481
      %v2490 = vmul.f32 %v2447, %v2482
      %v2491 = vmul.f32 %v2449, %v2483
      %v2492 = vmul.f32 %v2451, %v2484
      %v2493 = vmul.f32 %v2453, %v2485
      %v2494 = vpack.c.bf16 %v2487, %v2486
      %v2495 = vpack.c.bf16 %v2489, %v2488
      %v2496 = vpack.c.bf16 %v2491, %v2490
      %v2497 = vpack.c.bf16 %v2493, %v2492
      %2502 = vrot.lane.b32.xlu0 %v2015, 64
      %v2503 = vpop.permute.xlu0 %2502
      %2504 = vrot.lane.b32.xlu0 %v2019, 64
      %v2505 = vpop.permute.xlu0 %2504
      %2506 = vrot.lane.b32.xlu0 %v2023, 64
      %v2507 = vpop.permute.xlu0 %2506
      %2508 = vrot.lane.b32.xlu0 %v2027, 64
      %v2509 = vpop.permute.xlu0 %2508
      %v2515 = vsel %vm1107, %v2494, 0
      %v2518 = vsel %vm1107, %v2495, 0
      %v2521 = vsel %vm1107, %v2496, 0
      %v2524 = vsel %vm1107, %v2497, 0
      %2526 = vmatprep.subr.bf16.mxu0 0
      %2527 = vmatpush1.bf16.msra.mxu0 %v2503
      %2528 = vmatprep.subr.bf16.mxu0 0
      %2529 = vmatpush1.bf16.msra.mxu0 %v2505
      %2530 = vmatprep.subr.bf16.mxu0 0
      %2531 = vmatpush1.bf16.msra.mxu0 %v2507
      %2532 = vmatprep.subr.bf16.mxu0 0
      %2533 = vmatpush1.bf16.msra.mxu0 %v2509
      %2534 = vmatprep.subr.bf16.mxu0 0
      %2535 = vmatpush1.bf16.msra.mxu0 0
      %2536 = vmatprep.subr.bf16.mxu0 0
      %2537 = vmatpush1.bf16.msra.mxu0 0
      %2538 = vmatprep.subr.bf16.mxu0 0
      %2539 = vmatpush1.bf16.msra.mxu0 0
      %2540 = vmatprep.subr.bf16.mxu0 0
      %2541 = vmatpush1.bf16.msra.mxu0 0
      %2542 = vmatprep.subr.bf16.mxu0 0
      %2543 = vmatpush1.bf16.msra.mxu0 0
      %2544 = vmatprep.subr.bf16.mxu0 0
      %2545 = vmatpush1.bf16.msra.mxu0 0
      %2546 = vmatprep.subr.bf16.mxu0 0
      %2547 = vmatpush1.bf16.msra.mxu0 0
      %2548 = vmatprep.subr.bf16.mxu0 0
      %2549 = vmatpush1.bf16.msra.mxu0 0
      %2550 = vmatprep.subr.bf16.mxu0 0
      %2551 = vmatpush1.bf16.msra.mxu0 0
      %2552 = vmatprep.subr.bf16.mxu0 0
      %2553 = vmatpush1.bf16.msra.mxu0 0
      %2554 = vmatprep.subr.bf16.mxu0 0
      %2555 = vmatpush1.bf16.msra.mxu0 0
      %2556 = vmatprep.subr.bf16.mxu0 0
      %2557 = vmatpush1.bf16.msra.mxu0 0
      %2558 = vmatprep.mubr.bf16.mxu0 0
      %2559 = vmatmul.mubr.bf16.gmra.mrb[0].mxu0 %v2515
      %v2560 = vpop.f32.mrb[0].mxu0
      %v2561 = vadd.f32 0.0, %v2560
      %v2562 = vpop.f32.mrb[0].mxu0
      %v2563 = vpop.f32.mrb[0].mxu0
      %v2564 = vadd.f32 0.0, %v2563
      %v2565 = vpop.f32.mrb[0].mxu0
      %2566 = vmatprep.mubr.bf16.mxu0 0
      %2567 = vmatmul.mubr.bf16.gmra.mrb[0].mxu0 %v2518
      %v2568 = vpop.f32.mrb[0].mxu0
      %v2569 = vadd.f32 0.0, %v2568
      %v2570 = vpop.f32.mrb[0].mxu0
      %v2571 = vpop.f32.mrb[0].mxu0
      %v2572 = vadd.f32 0.0, %v2571
      %v2573 = vpop.f32.mrb[0].mxu0
      %2574 = vmatprep.mubr.bf16.mxu0 0
      %2575 = vmatmul.mubr.bf16.gmra.mrb[0].mxu0 %v2521
      %v2576 = vpop.f32.mrb[0].mxu0
      %v2577 = vadd.f32 0.0, %v2576
      %v2578 = vpop.f32.mrb[0].mxu0
      %v2579 = vpop.f32.mrb[0].mxu0
      %v2580 = vadd.f32 0.0, %v2579
      %v2581 = vpop.f32.mrb[0].mxu0
      %2582 = vmatprep.mubr.bf16.mxu0 0
      %2583 = vmatmul.mubr.bf16.gmra.mrb[0].mxu0 %v2524
      %v2584 = vpop.f32.mrb[0].mxu0
      %v2585 = vadd.f32 0.0, %v2584
      %v2586 = vpop.f32.mrb[0].mxu0
      %v2587 = vpop.f32.mrb[0].mxu0
      %v2588 = vadd.f32 0.0, %v2587
      %v2589 = vpop.f32.mrb[0].mxu0
      %2590 = vdwg.mxu0
      %v2591 = vpack.c.bf16 %v2564, %v2561
      %v2592 = vpack.c.bf16 %v2572, %v2569
      %v2593 = vpack.c.bf16 %v2580, %v2577
      %v2594 = vpack.c.bf16 %v2588, %v2585
      %2599 = vrot.lane.b32.xlu0 %v2494, 64
      %v2600 = vpop.permute.xlu0 %2599
      %2601 = vrot.lane.b32.xlu0 %v2495, 64
      %v2602 = vpop.permute.xlu0 %2601
      %2603 = vrot.lane.b32.xlu0 %v2496, 64
      %v2604 = vpop.permute.xlu0 %2603
      %2605 = vrot.lane.b32.xlu0 %v2497, 64
      %v2606 = vpop.permute.xlu0 %2605
      %v2608 = vsel %vm1107, %v2208, %v2600
      %v2610 = vsel %vm1107, %v2209, %v2602
      %v2612 = vsel %vm1107, %v2210, %v2604
      %v2614 = vsel %vm1107, %v2211, %v2606
      %v2619 = vunpack.c.l.b16 %v2608
      %v2620 = vunpack.c.h.b16 %v2608
      %v2621 = vunpack.c.l.b16 %v2610
      %v2622 = vunpack.c.h.b16 %v2610
      %v2623 = vunpack.c.l.b16 %v2612
      %v2624 = vunpack.c.h.b16 %v2612
      %v2625 = vunpack.c.l.b16 %v2614
      %v2626 = vunpack.c.h.b16 %v2614
      %v2627 = vpack.c.b16 %v2619, %v2619
      %v2628 = vpack.c.b16 %v2620, %v2620
      %v2629 = vpack.c.b16 %v2621, %v2621
      %v2630 = vpack.c.b16 %v2622, %v2622
      %v2631 = vpack.c.b16 %v2623, %v2623
      %v2632 = vpack.c.b16 %v2624, %v2624
      %v2633 = vpack.c.b16 %v2625, %v2625
      %v2634 = vpack.c.b16 %v2626, %v2626
      %2643 = vst [vmem:[%s907] sm:$0xf] %v2627
      %2644 = vst [vmem:[%s907 + $0x4] sm:$0xf] %v2628
      %2645 = vst [vmem:[%s907 + $0x8] sm:$0xf] %v2629
      %2646 = vst [vmem:[%s907 + $0xc] sm:$0xf] %v2630
      %2647 = vst [vmem:[%s907 + $0x10] sm:$0xf] %v2631
      %2648 = vst [vmem:[%s907 + $0x14] sm:$0xf] %v2632
      %2649 = vst [vmem:[%s907 + $0x18] sm:$0xf] %v2633
      %2650 = vst [vmem:[%s907 + $0x1c] sm:$0xf] %v2634
      %v2652 = vsel %vm1107, %v1500, 0
      %v2655 = vsel %vm1107, %v1504, 0
      %v2658 = vsel %vm1107, %v1508, 0
      %v2661 = vsel %vm1107, %v1512, 0
      %v2664 = vsel %vm1107, %v1758, 0
      %v2667 = vsel %vm1107, %v1762, 0
      %v2670 = vsel %vm1107, %v1766, 0
      %v2673 = vsel %vm1107, %v1770, 0
      %2675 = vmatprep.subr.bf16.mxu0 0
      %2676 = vmatpush1.bf16.xpose.msra.mxu0 %v2664
      %2677 = vmatprep.subr.bf16.mxu0 0
      %2678 = vmatpush1.bf16.xpose.msra.mxu0 %v2667
      %2679 = vmatprep.subr.bf16.mxu0 0
      %2680 = vmatpush1.bf16.xpose.msra.mxu0 %v2670
      %2681 = vmatprep.subr.bf16.mxu0 0
      %2682 = vmatpush1.bf16.xpose.msra.mxu0 %v2673
      %2683 = vmatprep.subr.bf16.mxu0 0
      %2684 = vmatpush1.bf16.xpose.msra.mxu0 0
      %2685 = vmatprep.subr.bf16.mxu0 0
      %2686 = vmatpush1.bf16.xpose.msra.mxu0 0
      %2687 = vmatprep.subr.bf16.mxu0 0
      %2688 = vmatpush1.bf16.xpose.msra.mxu0 0
      %2689 = vmatprep.subr.bf16.mxu0 0
      %2690 = vmatpush1.bf16.xpose.msra.mxu0 0
      %2691 = vmatprep.subr.bf16.mxu0 0
      %2692 = vmatpush1.bf16.xpose.msra.mxu0 0
      %2693 = vmatprep.subr.bf16.mxu0 0
      %2694 = vmatpush1.bf16.xpose.msra.mxu0 0
      %2695 = vmatprep.subr.bf16.mxu0 0
      %2696 = vmatpush1.bf16.xpose.msra.mxu0 0
      %2697 = vmatprep.subr.bf16.mxu0 0
      %2698 = vmatpush1.bf16.xpose.msra.mxu0 0
      %2699 = vmatprep.subr.bf16.mxu0 0
      %2700 = vmatpush1.bf16.xpose.msra.mxu0 0
      %2701 = vmatprep.subr.bf16.mxu0 0
      %2702 = vmatpush1.bf16.xpose.msra.mxu0 0
      %2703 = vmatprep.subr.bf16.mxu0 0
      %2704 = vmatpush1.bf16.xpose.msra.mxu0 0
      %2705 = vmatprep.subr.bf16.mxu0 0
      %2706 = vmatpush1.bf16.xpose.msra.mxu0 0
      %2707 = vmatprep.mubr.bf16.mxu0 0
      %2708 = vmatmul.mubr.bf16.gmra.mrb[0].mxu0 %v2652
      %v2709 = vpop.f32.mrb[0].mxu0
      %v2710 = vadd.f32 %v912, %v2709
      %v2711 = vpop.f32.mrb[0].mxu0
      %v2712 = vpop.f32.mrb[0].mxu0
      %v2713 = vadd.f32 %v912, %v2712
      %v2714 = vpop.f32.mrb[0].mxu0
      %2715 = vmatprep.mubr.bf16.mxu0 0
      %2716 = vmatmul.mubr.bf16.gmra.mrb[0].mxu0 %v2655
      %v2717 = vpop.f32.mrb[0].mxu0
      %v2718 = vadd.f32 %v912, %v2717
      %v2719 = vpop.f32.mrb[0].mxu0
      %v2720 = vpop.f32.mrb[0].mxu0
      %v2721 = vadd.f32 %v912, %v2720
      %v2722 = vpop.f32.mrb[0].mxu0
      %2723 = vmatprep.mubr.bf16.mxu0 0
      %2724 = vmatmul.mubr.bf16.gmra.mrb[0].mxu0 %v2658
      %v2725 = vpop.f32.mrb[0].mxu0
      %v2726 = vadd.f32 %v912, %v2725
      %v2727 = vpop.f32.mrb[0].mxu0
      %v2728 = vpop.f32.mrb[0].mxu0
      %v2729 = vadd.f32 %v912, %v2728
      %v2730 = vpop.f32.mrb[0].mxu0
      %2731 = vmatprep.mubr.bf16.mxu0 0
      %2732 = vmatmul.mubr.bf16.gmra.mrb[0].mxu0 %v2661
      %v2733 = vpop.f32.mrb[0].mxu0
      %v2734 = vadd.f32 %v912, %v2733
      %v2735 = vpop.f32.mrb[0].mxu0
      %v2736 = vpop.f32.mrb[0].mxu0
      %v2737 = vadd.f32 %v912, %v2736
      %v2738 = vpop.f32.mrb[0].mxu0
      %2739 = vdwg.mxu0
      %v2740 = vsel %vm1107, %v2710, -inf
      %2741 = vmax.xlane.f32.xlu0 %v2740
      %v2742 = vpop.xlane.xlu0 %2741
      %v2743 = vsel %vm1107, %v2713, -inf
      %2744 = vmax.xlane.f32.xlu0 %v2743
      %v2745 = vpop.xlane.xlu0 %2744
      %v2746 = vsel %vm1107, %v2718, -inf
      %2747 = vmax.xlane.f32.xlu0 %v2746
      %v2748 = vpop.xlane.xlu0 %2747
      %v2749 = vsel %vm1107, %v2721, -inf
      %2750 = vmax.xlane.f32.xlu0 %v2749
      %v2751 = vpop.xlane.xlu0 %2750
      %v2752 = vsel %vm1107, %v2726, -inf
      %2753 = vmax.xlane.f32.xlu0 %v2752
      %v2754 = vpop.xlane.xlu0 %2753
      %v2755 = vsel %vm1107, %v2729, -inf
      %2756 = vmax.xlane.f32.xlu0 %v2755
      %v2757 = vpop.xlane.xlu0 %2756
      %v2758 = vsel %vm1107, %v2734, -inf
      %2759 = vmax.xlane.f32.xlu0 %v2758
      %v2760 = vpop.xlane.xlu0 %2759
      %v2761 = vsel %vm1107, %v2737, -inf
      %2762 = vmax.xlane.f32.xlu0 %v2761
      %v2763 = vpop.xlane.xlu0 %2762
      %v2764 = vsub.f32 %v2710, %v2742
      %v2765 = vsub.f32 %v2713, %v2745
      %v2766 = vsub.f32 %v2718, %v2748
      %v2767 = vsub.f32 %v2721, %v2751
      %v2768 = vsub.f32 %v2726, %v2754
      %v2769 = vsub.f32 %v2729, %v2757
      %v2770 = vsub.f32 %v2734, %v2760
      %v2771 = vsub.f32 %v2737, %v2763
      %v2772 = vmul.f32 %v2764, 1.442695
      %v2773 = vpow.pop %v2772
      %v2774 = vmul.f32 %v2765, 1.442695
      %v2775 = vpow.pop %v2774
      %v2776 = vmul.f32 %v2766, 1.442695
      %v2777 = vpow.pop %v2776
      %v2778 = vmul.f32 %v2767, 1.442695
      %v2779 = vpow.pop %v2778
      %v2780 = vmul.f32 %v2768, 1.442695
      %v2781 = vpow.pop %v2780
      %v2782 = vmul.f32 %v2769, 1.442695
      %v2783 = vpow.pop %v2782
      %v2784 = vmul.f32 %v2770, 1.442695
      %v2785 = vpow.pop %v2784
      %v2786 = vmul.f32 %v2771, 1.442695
      %v2787 = vpow.pop %v2786
      %v2788 = vsel %vm1107, %v2773, 0.0
      %2789 = vadd.xlane.f32.xlu0 %v2788
      %v2790 = vpop.xlane.xlu0 %2789
      %v2791 = vsel %vm1107, %v2775, 0.0
      %2792 = vadd.xlane.f32.xlu0 %v2791
      %v2793 = vpop.xlane.xlu0 %2792
      %v2794 = vsel %vm1107, %v2777, 0.0
      %2795 = vadd.xlane.f32.xlu0 %v2794
      %v2796 = vpop.xlane.xlu0 %2795
      %v2797 = vsel %vm1107, %v2779, 0.0
      %2798 = vadd.xlane.f32.xlu0 %v2797
      %v2799 = vpop.xlane.xlu0 %2798
      %v2800 = vsel %vm1107, %v2781, 0.0
      %2801 = vadd.xlane.f32.xlu0 %v2800
      %v2802 = vpop.xlane.xlu0 %2801
      %v2803 = vsel %vm1107, %v2783, 0.0
      %2804 = vadd.xlane.f32.xlu0 %v2803
      %v2805 = vpop.xlane.xlu0 %2804
      %v2806 = vsel %vm1107, %v2785, 0.0
      %2807 = vadd.xlane.f32.xlu0 %v2806
      %v2808 = vpop.xlane.xlu0 %2807
      %v2809 = vsel %vm1107, %v2787, 0.0
      %2810 = vadd.xlane.f32.xlu0 %v2809
      %v2811 = vpop.xlane.xlu0 %2810
      %v2812 = vrcp.pop %v2790
      %v2813 = vrcp.pop %v2793
      %v2814 = vrcp.pop %v2796
      %v2815 = vrcp.pop %v2799
      %v2816 = vrcp.pop %v2802
      %v2817 = vrcp.pop %v2805
      %v2818 = vrcp.pop %v2808
      %v2819 = vrcp.pop %v2811
      %v2820 = vmul.f32 %v2773, %v2812
      %v2821 = vmul.f32 %v2775, %v2813
      %v2822 = vmul.f32 %v2777, %v2814
      %v2823 = vmul.f32 %v2779, %v2815
      %v2824 = vmul.f32 %v2781, %v2816
      %v2825 = vmul.f32 %v2783, %v2817
      %v2826 = vmul.f32 %v2785, %v2818
      %v2827 = vmul.f32 %v2787, %v2819
      %v2828 = vpack.c.bf16 %v2821, %v2820
      %v2829 = vpack.c.bf16 %v2823, %v2822
      %v2830 = vpack.c.bf16 %v2825, %v2824
      %v2831 = vpack.c.bf16 %v2827, %v2826
      %v2833 = vsel %vm1107, %v2828, 0
      %v2836 = vsel %vm1107, %v2829, 0
      %v2839 = vsel %vm1107, %v2830, 0
      %v2842 = vsel %vm1107, %v2831, 0
      %2844 = vmatprep.subr.bf16.mxu0 0
      %2845 = vmatpush1.bf16.msra.mxu0 %v2016
      %2846 = vmatprep.subr.bf16.mxu0 0
      %2847 = vmatpush1.bf16.msra.mxu0 %v2020
      %2848 = vmatprep.subr.bf16.mxu0 0
      %2849 = vmatpush1.bf16.msra.mxu0 %v2024
      %2850 = vmatprep.subr.bf16.mxu0 0
      %2851 = vmatpush1.bf16.msra.mxu0 %v2028
      %2852 = vmatprep.subr.bf16.mxu0 0
      %2853 = vmatpush1.bf16.msra.mxu0 0
      %2854 = vmatprep.subr.bf16.mxu0 0
      %2855 = vmatpush1.bf16.msra.mxu0 0
      %2856 = vmatprep.subr.bf16.mxu0 0
      %2857 = vmatpush1.bf16.msra.mxu0 0
      %2858 = vmatprep.subr.bf16.mxu0 0
      %2859 = vmatpush1.bf16.msra.mxu0 0
      %2860 = vmatprep.subr.bf16.mxu0 0
      %2861 = vmatpush1.bf16.msra.mxu0 0
      %2862 = vmatprep.subr.bf16.mxu0 0
      %2863 = vmatpush1.bf16.msra.mxu0 0
      %2864 = vmatprep.subr.bf16.mxu0 0
      %2865 = vmatpush1.bf16.msra.mxu0 0
      %2866 = vmatprep.subr.bf16.mxu0 0
      %2867 = vmatpush1.bf16.msra.mxu0 0
      %2868 = vmatprep.subr.bf16.mxu0 0
      %2869 = vmatpush1.bf16.msra.mxu0 0
      %2870 = vmatprep.subr.bf16.mxu0 0
      %2871 = vmatpush1.bf16.msra.mxu0 0
      %2872 = vmatprep.subr.bf16.mxu0 0
      %2873 = vmatpush1.bf16.msra.mxu0 0
      %2874 = vmatprep.subr.bf16.mxu0 0
      %2875 = vmatpush1.bf16.msra.mxu0 0
      %2876 = vmatprep.mubr.bf16.mxu0 0
      %2877 = vmatmul.mubr.bf16.gmra.mrb[0].mxu0 %v2833
      %v2878 = vpop.f32.mrb[0].mxu0
      %v2879 = vadd.f32 0.0, %v2878
      %v2880 = vpop.f32.mrb[0].mxu0
      %v2881 = vpop.f32.mrb[0].mxu0
      %v2882 = vadd.f32 0.0, %v2881
      %v2883 = vpop.f32.mrb[0].mxu0
      %2884 = vmatprep.mubr.bf16.mxu0 0
      %2885 = vmatmul.mubr.bf16.gmra.mrb[0].mxu0 %v2836
      %v2886 = vpop.f32.mrb[0].mxu0
      %v2887 = vadd.f32 0.0, %v2886
      %v2888 = vpop.f32.mrb[0].mxu0
      %v2889 = vpop.f32.mrb[0].mxu0
      %v2890 = vadd.f32 0.0, %v2889
      %v2891 = vpop.f32.mrb[0].mxu0
      %2892 = vmatprep.mubr.bf16.mxu0 0
      %2893 = vmatmul.mubr.bf16.gmra.mrb[0].mxu0 %v2839
      %v2894 = vpop.f32.mrb[0].mxu0
      %v2895 = vadd.f32 0.0, %v2894
      %v2896 = vpop.f32.mrb[0].mxu0
      %v2897 = vpop.f32.mrb[0].mxu0
      %v2898 = vadd.f32 0.0, %v2897
      %v2899 = vpop.f32.mrb[0].mxu0
      %2900 = vmatprep.mubr.bf16.mxu0 0
      %2901 = vmatmul.mubr.bf16.gmra.mrb[0].mxu0 %v2842
      %v2902 = vpop.f32.mrb[0].mxu0
      %v2903 = vadd.f32 0.0, %v2902
      %v2904 = vpop.f32.mrb[0].mxu0
      %v2905 = vpop.f32.mrb[0].mxu0
      %v2906 = vadd.f32 0.0, %v2905
      %v2907 = vpop.f32.mrb[0].mxu0
      %2908 = vdwg.mxu0
      %v2909 = vpack.c.bf16 %v2882, %v2879
      %v2910 = vpack.c.bf16 %v2890, %v2887
      %v2911 = vpack.c.bf16 %v2898, %v2895
      %v2912 = vpack.c.bf16 %v2906, %v2903
      %2917 = vrot.lane.b32.xlu0 %v1500, 64
      %v2918 = vpop.permute.xlu0 %2917
      %2919 = vrot.lane.b32.xlu0 %v1504, 64
      %v2920 = vpop.permute.xlu0 %2919
      %2921 = vrot.lane.b32.xlu0 %v1508, 64
      %v2922 = vpop.permute.xlu0 %2921
      %2923 = vrot.lane.b32.xlu0 %v1512, 64
      %v2924 = vpop.permute.xlu0 %2923
      %2929 = vrot.lane.b32.xlu0 %v1758, 64
      %v2930 = vpop.permute.xlu0 %2929
      %2931 = vrot.lane.b32.xlu0 %v1762, 64
      %v2932 = vpop.permute.xlu0 %2931
      %2933 = vrot.lane.b32.xlu0 %v1766, 64
      %v2934 = vpop.permute.xlu0 %2933
      %2935 = vrot.lane.b32.xlu0 %v1770, 64
      %v2936 = vpop.permute.xlu0 %2935
      %v2938 = vsel %vm1107, %v2918, 0
      %v2941 = vsel %vm1107, %v2920, 0
      %v2944 = vsel %vm1107, %v2922, 0
      %v2947 = vsel %vm1107, %v2924, 0
      %v2950 = vsel %vm1107, %v2930, 0
      %v2953 = vsel %vm1107, %v2932, 0
      %v2956 = vsel %vm1107, %v2934, 0
      %v2959 = vsel %vm1107, %v2936, 0
      %2961 = vmatprep.subr.bf16.mxu0 0
      %2962 = vmatpush1.bf16.xpose.msra.mxu0 %v2950
      %2963 = vmatprep.subr.bf16.mxu0 0
      %2964 = vmatpush1.bf16.xpose.msra.mxu0 %v2953
      %2965 = vmatprep.subr.bf16.mxu0 0
      %2966 = vmatpush1.bf16.xpose.msra.mxu0 %v2956
      %2967 = vmatprep.subr.bf16.mxu0 0
      %2968 = vmatpush1.bf16.xpose.msra.mxu0 %v2959
      %2969 = vmatprep.subr.bf16.mxu0 0
      %2970 = vmatpush1.bf16.xpose.msra.mxu0 0
      %2971 = vmatprep.subr.bf16.mxu0 0
      %2972 = vmatpush1.bf16.xpose.msra.mxu0 0
      %2973 = vmatprep.subr.bf16.mxu0 0
      %2974 = vmatpush1.bf16.xpose.msra.mxu0 0
      %2975 = vmatprep.subr.bf16.mxu0 0
      %2976 = vmatpush1.bf16.xpose.msra.mxu0 0
      %2977 = vmatprep.subr.bf16.mxu0 0
      %2978 = vmatpush1.bf16.xpose.msra.mxu0 0
      %2979 = vmatprep.subr.bf16.mxu0 0
      %2980 = vmatpush1.bf16.xpose.msra.mxu0 0
      %2981 = vmatprep.subr.bf16.mxu0 0
      %2982 = vmatpush1.bf16.xpose.msra.mxu0 0
      %2983 = vmatprep.subr.bf16.mxu0 0
      %2984 = vmatpush1.bf16.xpose.msra.mxu0 0
      %2985 = vmatprep.subr.bf16.mxu0 0
      %2986 = vmatpush1.bf16.xpose.msra.mxu0 0
      %2987 = vmatprep.subr.bf16.mxu0 0
      %2988 = vmatpush1.bf16.xpose.msra.mxu0 0
      %2989 = vmatprep.subr.bf16.mxu0 0
      %2990 = vmatpush1.bf16.xpose.msra.mxu0 0
      %2991 = vmatprep.subr.bf16.mxu0 0
      %2992 = vmatpush1.bf16.xpose.msra.mxu0 0
      %2993 = vmatprep.mubr.bf16.mxu0 0
      %2994 = vmatmul.mubr.bf16.gmra.mrb[0].mxu0 %v2938
      %v2995 = vpop.f32.mrb[0].mxu0
      %v2996 = vadd.f32 %v912, %v2995
      %v2997 = vpop.f32.mrb[0].mxu0
      %v2998 = vpop.f32.mrb[0].mxu0
      %v2999 = vadd.f32 %v912, %v2998
      %v3000 = vpop.f32.mrb[0].mxu0
      %3001 = vmatprep.mubr.bf16.mxu0 0
      %3002 = vmatmul.mubr.bf16.gmra.mrb[0].mxu0 %v2941
      %v3003 = vpop.f32.mrb[0].mxu0
      %v3004 = vadd.f32 %v912, %v3003
      %v3005 = vpop.f32.mrb[0].mxu0
      %v3006 = vpop.f32.mrb[0].mxu0
      %v3007 = vadd.f32 %v912, %v3006
      %v3008 = vpop.f32.mrb[0].mxu0
      %3009 = vmatprep.mubr.bf16.mxu0 0
      %3010 = vmatmul.mubr.bf16.gmra.mrb[0].mxu0 %v2944
      %v3011 = vpop.f32.mrb[0].mxu0
      %v3012 = vadd.f32 %v912, %v3011
      %v3013 = vpop.f32.mrb[0].mxu0
      %v3014 = vpop.f32.mrb[0].mxu0
      %v3015 = vadd.f32 %v912, %v3014
      %v3016 = vpop.f32.mrb[0].mxu0
      %3017 = vmatprep.mubr.bf16.mxu0 0
      %3018 = vmatmul.mubr.bf16.gmra.mrb[0].mxu0 %v2947
      %v3019 = vpop.f32.mrb[0].mxu0
      %v3020 = vadd.f32 %v912, %v3019
      %v3021 = vpop.f32.mrb[0].mxu0
      %v3022 = vpop.f32.mrb[0].mxu0
      %v3023 = vadd.f32 %v912, %v3022
      %v3024 = vpop.f32.mrb[0].mxu0
      %3025 = vdwg.mxu0
      %v3026 = vsel %vm1107, %v2996, -inf
      %3027 = vmax.xlane.f32.xlu0 %v3026
      %v3028 = vpop.xlane.xlu0 %3027
      %v3029 = vsel %vm1107, %v2999, -inf
      %3030 = vmax.xlane.f32.xlu0 %v3029
      %v3031 = vpop.xlane.xlu0 %3030
      %v3032 = vsel %vm1107, %v3004, -inf
      %3033 = vmax.xlane.f32.xlu0 %v3032
      %v3034 = vpop.xlane.xlu0 %3033
      %v3035 = vsel %vm1107, %v3007, -inf
      %3036 = vmax.xlane.f32.xlu0 %v3035
      %v3037 = vpop.xlane.xlu0 %3036
      %v3038 = vsel %vm1107, %v3012, -inf
      %3039 = vmax.xlane.f32.xlu0 %v3038
      %v3040 = vpop.xlane.xlu0 %3039
      %v3041 = vsel %vm1107, %v3015, -inf
      %3042 = vmax.xlane.f32.xlu0 %v3041
      %v3043 = vpop.xlane.xlu0 %3042
      %v3044 = vsel %vm1107, %v3020, -inf
      %3045 = vmax.xlane.f32.xlu0 %v3044
      %v3046 = vpop.xlane.xlu0 %3045
      %v3047 = vsel %vm1107, %v3023, -inf
      %3048 = vmax.xlane.f32.xlu0 %v3047
      %v3049 = vpop.xlane.xlu0 %3048
      %v3050 = vsub.f32 %v2996, %v3028
      %v3051 = vsub.f32 %v2999, %v3031
      %v3052 = vsub.f32 %v3004, %v3034
      %v3053 = vsub.f32 %v3007, %v3037
      %v3054 = vsub.f32 %v3012, %v3040
      %v3055 = vsub.f32 %v3015, %v3043
      %v3056 = vsub.f32 %v3020, %v3046
      %v3057 = vsub.f32 %v3023, %v3049
      %v3058 = vmul.f32 %v3050, 1.442695
      %v3059 = vpow.pop %v3058
      %v3060 = vmul.f32 %v3051, 1.442695
      %v3061 = vpow.pop %v3060
      %v3062 = vmul.f32 %v3052, 1.442695
      %v3063 = vpow.pop %v3062
      %v3064 = vmul.f32 %v3053, 1.442695
      %v3065 = vpow.pop %v3064
      %v3066 = vmul.f32 %v3054, 1.442695
      %v3067 = vpow.pop %v3066
      %v3068 = vmul.f32 %v3055, 1.442695
      %v3069 = vpow.pop %v3068
      %v3070 = vmul.f32 %v3056, 1.442695
      %v3071 = vpow.pop %v3070
      %v3072 = vmul.f32 %v3057, 1.442695
      %v3073 = vpow.pop %v3072
      %v3074 = vsel %vm1107, %v3059, 0.0
      %3075 = vadd.xlane.f32.xlu0 %v3074
      %v3076 = vpop.xlane.xlu0 %3075
      %v3077 = vsel %vm1107, %v3061, 0.0
      %3078 = vadd.xlane.f32.xlu0 %v3077
      %v3079 = vpop.xlane.xlu0 %3078
      %v3080 = vsel %vm1107, %v3063, 0.0
      %3081 = vadd.xlane.f32.xlu0 %v3080
      %v3082 = vpop.xlane.xlu0 %3081
      %v3083 = vsel %vm1107, %v3065, 0.0
      %3084 = vadd.xlane.f32.xlu0 %v3083
      %v3085 = vpop.xlane.xlu0 %3084
      %v3086 = vsel %vm1107, %v3067, 0.0
      %3087 = vadd.xlane.f32.xlu0 %v3086
      %v3088 = vpop.xlane.xlu0 %3087
      %v3089 = vsel %vm1107, %v3069, 0.0
      %3090 = vadd.xlane.f32.xlu0 %v3089
      %v3091 = vpop.xlane.xlu0 %3090
      %v3092 = vsel %vm1107, %v3071, 0.0
      %3093 = vadd.xlane.f32.xlu0 %v3092
      %v3094 = vpop.xlane.xlu0 %3093
      %v3095 = vsel %vm1107, %v3073, 0.0
      %3096 = vadd.xlane.f32.xlu0 %v3095
      %v3097 = vpop.xlane.xlu0 %3096
      %v3098 = vrcp.pop %v3076
      %v3099 = vrcp.pop %v3079
      %v3100 = vrcp.pop %v3082
      %v3101 = vrcp.pop %v3085
      %v3102 = vrcp.pop %v3088
      %v3103 = vrcp.pop %v3091
      %v3104 = vrcp.pop %v3094
      %v3105 = vrcp.pop %v3097
      %v3106 = vmul.f32 %v3059, %v3098
      %v3107 = vmul.f32 %v3061, %v3099
      %v3108 = vmul.f32 %v3063, %v3100
      %v3109 = vmul.f32 %v3065, %v3101
      %v3110 = vmul.f32 %v3067, %v3102
      %v3111 = vmul.f32 %v3069, %v3103
      %v3112 = vmul.f32 %v3071, %v3104
      %v3113 = vmul.f32 %v3073, %v3105
      %v3114 = vpack.c.bf16 %v3107, %v3106
      %v3115 = vpack.c.bf16 %v3109, %v3108
      %v3116 = vpack.c.bf16 %v3111, %v3110
      %v3117 = vpack.c.bf16 %v3113, %v3112
      %3122 = vrot.lane.b32.xlu0 %v2016, 64
      %v3123 = vpop.permute.xlu0 %3122
      %3124 = vrot.lane.b32.xlu0 %v2020, 64
      %v3125 = vpop.permute.xlu0 %3124
      %3126 = vrot.lane.b32.xlu0 %v2024, 64
      %v3127 = vpop.permute.xlu0 %3126
      %3128 = vrot.lane.b32.xlu0 %v2028, 64
      %v3129 = vpop.permute.xlu0 %3128
      %v3135 = vsel %vm1107, %v3114, 0
      %v3138 = vsel %vm1107, %v3115, 0
      %v3141 = vsel %vm1107, %v3116, 0
      %v3144 = vsel %vm1107, %v3117, 0
      %3146 = vmatprep.subr.bf16.mxu0 0
      %3147 = vmatpush1.bf16.msra.mxu0 %v3123
      %3148 = vmatprep.subr.bf16.mxu0 0
      %3149 = vmatpush1.bf16.msra.mxu0 %v3125
      %3150 = vmatprep.subr.bf16.mxu0 0
      %3151 = vmatpush1.bf16.msra.mxu0 %v3127
      %3152 = vmatprep.subr.bf16.mxu0 0
      %3153 = vmatpush1.bf16.msra.mxu0 %v3129
      %3154 = vmatprep.subr.bf16.mxu0 0
      %3155 = vmatpush1.bf16.msra.mxu0 0
      %3156 = vmatprep.subr.bf16.mxu0 0
      %3157 = vmatpush1.bf16.msra.mxu0 0
      %3158 = vmatprep.subr.bf16.mxu0 0
      %3159 = vmatpush1.bf16.msra.mxu0 0
      %3160 = vmatprep.subr.bf16.mxu0 0
      %3161 = vmatpush1.bf16.msra.mxu0 0
      %3162 = vmatprep.subr.bf16.mxu0 0
      %3163 = vmatpush1.bf16.msra.mxu0 0
      %3164 = vmatprep.subr.bf16.mxu0 0
      %3165 = vmatpush1.bf16.msra.mxu0 0
      %3166 = vmatprep.subr.bf16.mxu0 0
      %3167 = vmatpush1.bf16.msra.mxu0 0
      %3168 = vmatprep.subr.bf16.mxu0 0
      %3169 = vmatpush1.bf16.msra.mxu0 0
      %3170 = vmatprep.subr.bf16.mxu0 0
      %3171 = vmatpush1.bf16.msra.mxu0 0
      %3172 = vmatprep.subr.bf16.mxu0 0
      %3173 = vmatpush1.bf16.msra.mxu0 0
      %3174 = vmatprep.subr.bf16.mxu0 0
      %3175 = vmatpush1.bf16.msra.mxu0 0
      %3176 = vmatprep.subr.bf16.mxu0 0
      %3177 = vmatpush1.bf16.msra.mxu0 0
      %3178 = vmatprep.mubr.bf16.mxu0 0
      %3179 = vmatmul.mubr.bf16.gmra.mrb[0].mxu0 %v3135
      %v3180 = vpop.f32.mrb[0].mxu0
      %v3181 = vadd.f32 0.0, %v3180
      %v3182 = vpop.f32.mrb[0].mxu0
      %v3183 = vpop.f32.mrb[0].mxu0
      %v3184 = vadd.f32 0.0, %v3183
      %v3185 = vpop.f32.mrb[0].mxu0
      %3186 = vmatprep.mubr.bf16.mxu0 0
      %3187 = vmatmul.mubr.bf16.gmra.mrb[0].mxu0 %v3138
      %v3188 = vpop.f32.mrb[0].mxu0
      %v3189 = vadd.f32 0.0, %v3188
      %v3190 = vpop.f32.mrb[0].mxu0
      %v3191 = vpop.f32.mrb[0].mxu0
      %v3192 = vadd.f32 0.0, %v3191
      %v3193 = vpop.f32.mrb[0].mxu0
      %3194 = vmatprep.mubr.bf16.mxu0 0
      %3195 = vmatmul.mubr.bf16.gmra.mrb[0].mxu0 %v3141
      %v3196 = vpop.f32.mrb[0].mxu0
      %v3197 = vadd.f32 0.0, %v3196
      %v3198 = vpop.f32.mrb[0].mxu0
      %v3199 = vpop.f32.mrb[0].mxu0
      %v3200 = vadd.f32 0.0, %v3199
      %v3201 = vpop.f32.mrb[0].mxu0
      %3202 = vmatprep.mubr.bf16.mxu0 0
      %3203 = vmatmul.mubr.bf16.gmra.mrb[0].mxu0 %v3144
      %v3204 = vpop.f32.mrb[0].mxu0
      %v3205 = vadd.f32 0.0, %v3204
      %v3206 = vpop.f32.mrb[0].mxu0
      %v3207 = vpop.f32.mrb[0].mxu0
      %v3208 = vadd.f32 0.0, %v3207
      %v3209 = vpop.f32.mrb[0].mxu0
      %3210 = vdwg.mxu0
      %v3211 = vpack.c.bf16 %v3184, %v3181
      %v3212 = vpack.c.bf16 %v3192, %v3189
      %v3213 = vpack.c.bf16 %v3200, %v3197
      %v3214 = vpack.c.bf16 %v3208, %v3205
      %3219 = vrot.lane.b32.xlu0 %v3114, 64
      %v3220 = vpop.permute.xlu0 %3219
      %3221 = vrot.lane.b32.xlu0 %v3115, 64
      %v3222 = vpop.permute.xlu0 %3221
      %3223 = vrot.lane.b32.xlu0 %v3116, 64
      %v3224 = vpop.permute.xlu0 %3223
      %3225 = vrot.lane.b32.xlu0 %v3117, 64
      %v3226 = vpop.permute.xlu0 %3225
      %v3228 = vsel %vm1107, %v2828, %v3220
      %v3230 = vsel %vm1107, %v2829, %v3222
      %v3232 = vsel %vm1107, %v2830, %v3224
      %v3234 = vsel %vm1107, %v2831, %v3226
      %v3239 = vunpack.c.l.b16 %v3228
      %v3240 = vunpack.c.h.b16 %v3228
      %v3241 = vunpack.c.l.b16 %v3230
      %v3242 = vunpack.c.h.b16 %v3230
      %v3243 = vunpack.c.l.b16 %v3232
      %v3244 = vunpack.c.h.b16 %v3232
      %v3245 = vunpack.c.l.b16 %v3234
      %v3246 = vunpack.c.h.b16 %v3234
      %v3247 = vpack.c.b16 %v3239, %v3239
      %v3248 = vpack.c.b16 %v3240, %v3240
      %v3249 = vpack.c.b16 %v3241, %v3241
      %v3250 = vpack.c.b16 %v3242, %v3242
      %v3251 = vpack.c.b16 %v3243, %v3243
      %v3252 = vpack.c.b16 %v3244, %v3244
      %v3253 = vpack.c.b16 %v3245, %v3245
      %v3254 = vpack.c.b16 %v3246, %v3246
      %s3263 = scalar_lea.vmem %s907, 32
      %3264 = vst [vmem:[%s3263] sm:$0xf] %v3247
      %3265 = vst [vmem:[%s3263 + $0x4] sm:$0xf] %v3248
      %3266 = vst [vmem:[%s3263 + $0x8] sm:$0xf] %v3249
      %3267 = vst [vmem:[%s3263 + $0xc] sm:$0xf] %v3250
      %3268 = vst [vmem:[%s3263 + $0x10] sm:$0xf] %v3251
      %3269 = vst [vmem:[%s3263 + $0x14] sm:$0xf] %v3252
      %3270 = vst [vmem:[%s3263 + $0x18] sm:$0xf] %v3253
      %3271 = vst [vmem:[%s3263 + $0x1c] sm:$0xf] %v3254
      %v3273 = vsel %vm1107, %v1501, 0
      %v3276 = vsel %vm1107, %v1505, 0
      %v3279 = vsel %vm1107, %v1509, 0
      %v3282 = vsel %vm1107, %v1513, 0
      %v3285 = vsel %vm1107, %v1759, 0
      %v3288 = vsel %vm1107, %v1763, 0
      %v3291 = vsel %vm1107, %v1767, 0
      %v3294 = vsel %vm1107, %v1771, 0
      %3296 = vmatprep.subr.bf16.mxu0 0
      %3297 = vmatpush1.bf16.xpose.msra.mxu0 %v3285
      %3298 = vmatprep.subr.bf16.mxu0 0
      %3299 = vmatpush1.bf16.xpose.msra.mxu0 %v3288
      %3300 = vmatprep.subr.bf16.mxu0 0
      %3301 = vmatpush1.bf16.xpose.msra.mxu0 %v3291
      %3302 = vmatprep.subr.bf16.mxu0 0
      %3303 = vmatpush1.bf16.xpose.msra.mxu0 %v3294
      %3304 = vmatprep.subr.bf16.mxu0 0
      %3305 = vmatpush1.bf16.xpose.msra.mxu0 0
      %3306 = vmatprep.subr.bf16.mxu0 0
      %3307 = vmatpush1.bf16.xpose.msra.mxu0 0
      %3308 = vmatprep.subr.bf16.mxu0 0
      %3309 = vmatpush1.bf16.xpose.msra.mxu0 0
      %3310 = vmatprep.subr.bf16.mxu0 0
      %3311 = vmatpush1.bf16.xpose.msra.mxu0 0
      %3312 = vmatprep.subr.bf16.mxu0 0
      %3313 = vmatpush1.bf16.xpose.msra.mxu0 0
      %3314 = vmatprep.subr.bf16.mxu0 0
      %3315 = vmatpush1.bf16.xpose.msra.mxu0 0
      %3316 = vmatprep.subr.bf16.mxu0 0
      %3317 = vmatpush1.bf16.xpose.msra.mxu0 0
      %3318 = vmatprep.subr.bf16.mxu0 0
      %3319 = vmatpush1.bf16.xpose.msra.mxu0 0
      %3320 = vmatprep.subr.bf16.mxu0 0
      %3321 = vmatpush1.bf16.xpose.msra.mxu0 0
      %3322 = vmatprep.subr.bf16.mxu0 0
      %3323 = vmatpush1.bf16.xpose.msra.mxu0 0
      %3324 = vmatprep.subr.bf16.mxu0 0
      %3325 = vmatpush1.bf16.xpose.msra.mxu0 0
      %3326 = vmatprep.subr.bf16.mxu0 0
      %3327 = vmatpush1.bf16.xpose.msra.mxu0 0
      %3328 = vmatprep.mubr.bf16.mxu0 0
      %3329 = vmatmul.mubr.bf16.gmra.mrb[0].mxu0 %v3273
      %v3330 = vpop.f32.mrb[0].mxu0
      %v3331 = vadd.f32 %v912, %v3330
      %v3332 = vpop.f32.mrb[0].mxu0
      %v3333 = vpop.f32.mrb[0].mxu0
      %v3334 = vadd.f32 %v912, %v3333
      %v3335 = vpop.f32.mrb[0].mxu0
      %3336 = vmatprep.mubr.bf16.mxu0 0
      %3337 = vmatmul.mubr.bf16.gmra.mrb[0].mxu0 %v3276
      %v3338 = vpop.f32.mrb[0].mxu0
      %v3339 = vadd.f32 %v912, %v3338
      %v3340 = vpop.f32.mrb[0].mxu0
      %v3341 = vpop.f32.mrb[0].mxu0
      %v3342 = vadd.f32 %v912, %v3341
      %v3343 = vpop.f32.mrb[0].mxu0
      %3344 = vmatprep.mubr.bf16.mxu0 0
      %3345 = vmatmul.mubr.bf16.gmra.mrb[0].mxu0 %v3279
      %v3346 = vpop.f32.mrb[0].mxu0
      %v3347 = vadd.f32 %v912, %v3346
      %v3348 = vpop.f32.mrb[0].mxu0
      %v3349 = vpop.f32.mrb[0].mxu0
      %v3350 = vadd.f32 %v912, %v3349
      %v3351 = vpop.f32.mrb[0].mxu0
      %3352 = vmatprep.mubr.bf16.mxu0 0
      %3353 = vmatmul.mubr.bf16.gmra.mrb[0].mxu0 %v3282
      %v3354 = vpop.f32.mrb[0].mxu0
      %v3355 = vadd.f32 %v912, %v3354
      %v3356 = vpop.f32.mrb[0].mxu0
      %v3357 = vpop.f32.mrb[0].mxu0
      %v3358 = vadd.f32 %v912, %v3357
      %v3359 = vpop.f32.mrb[0].mxu0
      %3360 = vdwg.mxu0
      %v3361 = vsel %vm1107, %v3331, -inf
      %3362 = vmax.xlane.f32.xlu0 %v3361
      %v3363 = vpop.xlane.xlu0 %3362
      %v3364 = vsel %vm1107, %v3334, -inf
      %3365 = vmax.xlane.f32.xlu0 %v3364
      %v3366 = vpop.xlane.xlu0 %3365
      %v3367 = vsel %vm1107, %v3339, -inf
      %3368 = vmax.xlane.f32.xlu0 %v3367
      %v3369 = vpop.xlane.xlu0 %3368
      %v3370 = vsel %vm1107, %v3342, -inf
      %3371 = vmax.xlane.f32.xlu0 %v3370
      %v3372 = vpop.xlane.xlu0 %3371
      %v3373 = vsel %vm1107, %v3347, -inf
      %3374 = vmax.xlane.f32.xlu0 %v3373
      %v3375 = vpop.xlane.xlu0 %3374
      %v3376 = vsel %vm1107, %v3350, -inf
      %3377 = vmax.xlane.f32.xlu0 %v3376
      %v3378 = vpop.xlane.xlu0 %3377
      %v3379 = vsel %vm1107, %v3355, -inf
      %3380 = vmax.xlane.f32.xlu0 %v3379
      %v3381 = vpop.xlane.xlu0 %3380
      %v3382 = vsel %vm1107, %v3358, -inf
      %3383 = vmax.xlane.f32.xlu0 %v3382
      %v3384 = vpop.xlane.xlu0 %3383
      %v3385 = vsub.f32 %v3331, %v3363
      %v3386 = vsub.f32 %v3334, %v3366
      %v3387 = vsub.f32 %v3339, %v3369
      %v3388 = vsub.f32 %v3342, %v3372
      %v3389 = vsub.f32 %v3347, %v3375
      %v3390 = vsub.f32 %v3350, %v3378
      %v3391 = vsub.f32 %v3355, %v3381
      %v3392 = vsub.f32 %v3358, %v3384
      %v3393 = vmul.f32 %v3385, 1.442695
      %v3394 = vpow.pop %v3393
      %v3395 = vmul.f32 %v3386, 1.442695
      %v3396 = vpow.pop %v3395
      %v3397 = vmul.f32 %v3387, 1.442695
      %v3398 = vpow.pop %v3397
      %v3399 = vmul.f32 %v3388, 1.442695
      %v3400 = vpow.pop %v3399
      %v3401 = vmul.f32 %v3389, 1.442695
      %v3402 = vpow.pop %v3401
      %v3403 = vmul.f32 %v3390, 1.442695
      %v3404 = vpow.pop %v3403
      %v3405 = vmul.f32 %v3391, 1.442695
      %v3406 = vpow.pop %v3405
      %v3407 = vmul.f32 %v3392, 1.442695
      %v3408 = vpow.pop %v3407
      %v3409 = vsel %vm1107, %v3394, 0.0
      %3410 = vadd.xlane.f32.xlu0 %v3409
      %v3411 = vpop.xlane.xlu0 %3410
      %v3412 = vsel %vm1107, %v3396, 0.0
      %3413 = vadd.xlane.f32.xlu0 %v3412
      %v3414 = vpop.xlane.xlu0 %3413
      %v3415 = vsel %vm1107, %v3398, 0.0
      %3416 = vadd.xlane.f32.xlu0 %v3415
      %v3417 = vpop.xlane.xlu0 %3416
      %v3418 = vsel %vm1107, %v3400, 0.0
      %3419 = vadd.xlane.f32.xlu0 %v3418
      %v3420 = vpop.xlane.xlu0 %3419
      %v3421 = vsel %vm1107, %v3402, 0.0
      %3422 = vadd.xlane.f32.xlu0 %v3421
      %v3423 = vpop.xlane.xlu0 %3422
      %v3424 = vsel %vm1107, %v3404, 0.0
      %3425 = vadd.xlane.f32.xlu0 %v3424
      %v3426 = vpop.xlane.xlu0 %3425
      %v3427 = vsel %vm1107, %v3406, 0.0
      %3428 = vadd.xlane.f32.xlu0 %v3427
      %v3429 = vpop.xlane.xlu0 %3428
      %v3430 = vsel %vm1107, %v3408, 0.0
      %3431 = vadd.xlane.f32.xlu0 %v3430
      %v3432 = vpop.xlane.xlu0 %3431
      %v3433 = vrcp.pop %v3411
      %v3434 = vrcp.pop %v3414
      %v3435 = vrcp.pop %v3417
      %v3436 = vrcp.pop %v3420
      %v3437 = vrcp.pop %v3423
      %v3438 = vrcp.pop %v3426
      %v3439 = vrcp.pop %v3429
      %v3440 = vrcp.pop %v3432
      %v3441 = vmul.f32 %v3394, %v3433
      %v3442 = vmul.f32 %v3396, %v3434
      %v3443 = vmul.f32 %v3398, %v3435
      %v3444 = vmul.f32 %v3400, %v3436
      %v3445 = vmul.f32 %v3402, %v3437
      %v3446 = vmul.f32 %v3404, %v3438
      %v3447 = vmul.f32 %v3406, %v3439
      %v3448 = vmul.f32 %v3408, %v3440
      %v3449 = vpack.c.bf16 %v3442, %v3441
      %v3450 = vpack.c.bf16 %v3444, %v3443
      %v3451 = vpack.c.bf16 %v3446, %v3445
      %v3452 = vpack.c.bf16 %v3448, %v3447
      %v3454 = vsel %vm1107, %v3449, 0
      %v3457 = vsel %vm1107, %v3450, 0
      %v3460 = vsel %vm1107, %v3451, 0
      %v3463 = vsel %vm1107, %v3452, 0
      %3465 = vmatprep.subr.bf16.mxu0 0
      %3466 = vmatpush1.bf16.msra.mxu0 %v2017
      %3467 = vmatprep.subr.bf16.mxu0 0
      %3468 = vmatpush1.bf16.msra.mxu0 %v2021
      %3469 = vmatprep.subr.bf16.mxu0 0
      %3470 = vmatpush1.bf16.msra.mxu0 %v2025
      %3471 = vmatprep.subr.bf16.mxu0 0
      %3472 = vmatpush1.bf16.msra.mxu0 %v2029
      %3473 = vmatprep.subr.bf16.mxu0 0
      %3474 = vmatpush1.bf16.msra.mxu0 0
      %3475 = vmatprep.subr.bf16.mxu0 0
      %3476 = vmatpush1.bf16.msra.mxu0 0
      %3477 = vmatprep.subr.bf16.mxu0 0
      %3478 = vmatpush1.bf16.msra.mxu0 0
      %3479 = vmatprep.subr.bf16.mxu0 0
      %3480 = vmatpush1.bf16.msra.mxu0 0
      %3481 = vmatprep.subr.bf16.mxu0 0
      %3482 = vmatpush1.bf16.msra.mxu0 0
      %3483 = vmatprep.subr.bf16.mxu0 0
      %3484 = vmatpush1.bf16.msra.mxu0 0
      %3485 = vmatprep.subr.bf16.mxu0 0
      %3486 = vmatpush1.bf16.msra.mxu0 0
      %3487 = vmatprep.subr.bf16.mxu0 0
      %3488 = vmatpush1.bf16.msra.mxu0 0
      %3489 = vmatprep.subr.bf16.mxu0 0
      %3490 = vmatpush1.bf16.msra.mxu0 0
      %3491 = vmatprep.subr.bf16.mxu0 0
      %3492 = vmatpush1.bf16.msra.mxu0 0
      %3493 = vmatprep.subr.bf16.mxu0 0
      %3494 = vmatpush1.bf16.msra.mxu0 0
      %3495 = vmatprep.subr.bf16.mxu0 0
      %3496 = vmatpush1.bf16.msra.mxu0 0
      %3497 = vmatprep.mubr.bf16.mxu0 0
      %3498 = vmatmul.mubr.bf16.gmra.mrb[0].mxu0 %v3454
      %v3499 = vpop.f32.mrb[0].mxu0
      %v3500 = vadd.f32 0.0, %v3499
      %v3501 = vpop.f32.mrb[0].mxu0
      %v3502 = vpop.f32.mrb[0].mxu0
      %v3503 = vadd.f32 0.0, %v3502
      %v3504 = vpop.f32.mrb[0].mxu0
      %3505 = vmatprep.mubr.bf16.mxu0 0
      %3506 = vmatmul.mubr.bf16.gmra.mrb[0].mxu0 %v3457
      %v3507 = vpop.f32.mrb[0].mxu0
      %v3508 = vadd.f32 0.0, %v3507
      %v3509 = vpop.f32.mrb[0].mxu0
      %v3510 = vpop.f32.mrb[0].mxu0
      %v3511 = vadd.f32 0.0, %v3510
      %v3512 = vpop.f32.mrb[0].mxu0
      %3513 = vmatprep.mubr.bf16.mxu0 0
      %3514 = vmatmul.mubr.bf16.gmra.mrb[0].mxu0 %v3460
      %v3515 = vpop.f32.mrb[0].mxu0
      %v3516 = vadd.f32 0.0, %v3515
      %v3517 = vpop.f32.mrb[0].mxu0
      %v3518 = vpop.f32.mrb[0].mxu0
      %v3519 = vadd.f32 0.0, %v3518
      %v3520 = vpop.f32.mrb[0].mxu0
      %3521 = vmatprep.mubr.bf16.mxu0 0
      %3522 = vmatmul.mubr.bf16.gmra.mrb[0].mxu0 %v3463
      %v3523 = vpop.f32.mrb[0].mxu0
      %v3524 = vadd.f32 0.0, %v3523
      %v3525 = vpop.f32.mrb[0].mxu0
      %v3526 = vpop.f32.mrb[0].mxu0
      %v3527 = vadd.f32 0.0, %v3526
      %v3528 = vpop.f32.mrb[0].mxu0
      %3529 = vdwg.mxu0
      %v3530 = vpack.c.bf16 %v3503, %v3500
      %v3531 = vpack.c.bf16 %v3511, %v3508
      %v3532 = vpack.c.bf16 %v3519, %v3516
      %v3533 = vpack.c.bf16 %v3527, %v3524
      %3538 = vrot.lane.b32.xlu0 %v1501, 64
      %v3539 = vpop.permute.xlu0 %3538
      %3540 = vrot.lane.b32.xlu0 %v1505, 64
      %v3541 = vpop.permute.xlu0 %3540
      %3542 = vrot.lane.b32.xlu0 %v1509, 64
      %v3543 = vpop.permute.xlu0 %3542
      %3544 = vrot.lane.b32.xlu0 %v1513, 64
      %v3545 = vpop.permute.xlu0 %3544
      %3550 = vrot.lane.b32.xlu0 %v1759, 64
      %v3551 = vpop.permute.xlu0 %3550
      %3552 = vrot.lane.b32.xlu0 %v1763, 64
      %v3553 = vpop.permute.xlu0 %3552
      %3554 = vrot.lane.b32.xlu0 %v1767, 64
      %v3555 = vpop.permute.xlu0 %3554
      %3556 = vrot.lane.b32.xlu0 %v1771, 64
      %v3557 = vpop.permute.xlu0 %3556
      %v3559 = vsel %vm1107, %v3539, 0
      %v3562 = vsel %vm1107, %v3541, 0
      %v3565 = vsel %vm1107, %v3543, 0
      %v3568 = vsel %vm1107, %v3545, 0
      %v3571 = vsel %vm1107, %v3551, 0
      %v3574 = vsel %vm1107, %v3553, 0
      %v3577 = vsel %vm1107, %v3555, 0
      %v3580 = vsel %vm1107, %v3557, 0
      %3582 = vmatprep.subr.bf16.mxu0 0
      %3583 = vmatpush1.bf16.xpose.msra.mxu0 %v3571
      %3584 = vmatprep.subr.bf16.mxu0 0
      %3585 = vmatpush1.bf16.xpose.msra.mxu0 %v3574
      %3586 = vmatprep.subr.bf16.mxu0 0
      %3587 = vmatpush1.bf16.xpose.msra.mxu0 %v3577
      %3588 = vmatprep.subr.bf16.mxu0 0
      %3589 = vmatpush1.bf16.xpose.msra.mxu0 %v3580
      %3590 = vmatprep.subr.bf16.mxu0 0
      %3591 = vmatpush1.bf16.xpose.msra.mxu0 0
      %3592 = vmatprep.subr.bf16.mxu0 0
      %3593 = vmatpush1.bf16.xpose.msra.mxu0 0
      %3594 = vmatprep.subr.bf16.mxu0 0
      %3595 = vmatpush1.bf16.xpose.msra.mxu0 0
      %3596 = vmatprep.subr.bf16.mxu0 0
      %3597 = vmatpush1.bf16.xpose.msra.mxu0 0
      %3598 = vmatprep.subr.bf16.mxu0 0
      %3599 = vmatpush1.bf16.xpose.msra.mxu0 0
      %3600 = vmatprep.subr.bf16.mxu0 0
      %3601 = vmatpush1.bf16.xpose.msra.mxu0 0
      %3602 = vmatprep.subr.bf16.mxu0 0
      %3603 = vmatpush1.bf16.xpose.msra.mxu0 0
      %3604 = vmatprep.subr.bf16.mxu0 0
      %3605 = vmatpush1.bf16.xpose.msra.mxu0 0
      %3606 = vmatprep.subr.bf16.mxu0 0
      %3607 = vmatpush1.bf16.xpose.msra.mxu0 0
      %3608 = vmatprep.subr.bf16.mxu0 0
      %3609 = vmatpush1.bf16.xpose.msra.mxu0 0
      %3610 = vmatprep.subr.bf16.mxu0 0
      %3611 = vmatpush1.bf16.xpose.msra.mxu0 0
      %3612 = vmatprep.subr.bf16.mxu0 0
      %3613 = vmatpush1.bf16.xpose.msra.mxu0 0
      %3614 = vmatprep.mubr.bf16.mxu0 0
      %3615 = vmatmul.mubr.bf16.gmra.mrb[0].mxu0 %v3559
      %v3616 = vpop.f32.mrb[0].mxu0
      %v3617 = vadd.f32 %v912, %v3616
      %v3618 = vpop.f32.mrb[0].mxu0
      %v3619 = vpop.f32.mrb[0].mxu0
      %v3620 = vadd.f32 %v912, %v3619
      %v3621 = vpop.f32.mrb[0].mxu0
      %3622 = vmatprep.mubr.bf16.mxu0 0
      %3623 = vmatmul.mubr.bf16.gmra.mrb[0].mxu0 %v3562
      %v3624 = vpop.f32.mrb[0].mxu0
      %v3625 = vadd.f32 %v912, %v3624
      %v3626 = vpop.f32.mrb[0].mxu0
      %v3627 = vpop.f32.mrb[0].mxu0
      %v3628 = vadd.f32 %v912, %v3627
      %v3629 = vpop.f32.mrb[0].mxu0
      %3630 = vmatprep.mubr.bf16.mxu0 0
      %3631 = vmatmul.mubr.bf16.gmra.mrb[0].mxu0 %v3565
      %v3632 = vpop.f32.mrb[0].mxu0
      %v3633 = vadd.f32 %v912, %v3632
      %v3634 = vpop.f32.mrb[0].mxu0
      %v3635 = vpop.f32.mrb[0].mxu0
      %v3636 = vadd.f32 %v912, %v3635
      %v3637 = vpop.f32.mrb[0].mxu0
      %3638 = vmatprep.mubr.bf16.mxu0 0
      %3639 = vmatmul.mubr.bf16.gmra.mrb[0].mxu0 %v3568
      %v3640 = vpop.f32.mrb[0].mxu0
      %v3641 = vadd.f32 %v912, %v3640
      %v3642 = vpop.f32.mrb[0].mxu0
      %v3643 = vpop.f32.mrb[0].mxu0
      %v3644 = vadd.f32 %v912, %v3643
      %v3645 = vpop.f32.mrb[0].mxu0
      %3646 = vdwg.mxu0
      %v3647 = vsel %vm1107, %v3617, -inf
      %3648 = vmax.xlane.f32.xlu0 %v3647
      %v3649 = vpop.xlane.xlu0 %3648
      %v3650 = vsel %vm1107, %v3620, -inf
      %3651 = vmax.xlane.f32.xlu0 %v3650
      %v3652 = vpop.xlane.xlu0 %3651
      %v3653 = vsel %vm1107, %v3625, -inf
      %3654 = vmax.xlane.f32.xlu0 %v3653
      %v3655 = vpop.xlane.xlu0 %3654
      %v3656 = vsel %vm1107, %v3628, -inf
      %3657 = vmax.xlane.f32.xlu0 %v3656
      %v3658 = vpop.xlane.xlu0 %3657
      %v3659 = vsel %vm1107, %v3633, -inf
      %3660 = vmax.xlane.f32.xlu0 %v3659
      %v3661 = vpop.xlane.xlu0 %3660
      %v3662 = vsel %vm1107, %v3636, -inf
      %3663 = vmax.xlane.f32.xlu0 %v3662
      %v3664 = vpop.xlane.xlu0 %3663
      %v3665 = vsel %vm1107, %v3641, -inf
      %3666 = vmax.xlane.f32.xlu0 %v3665
      %v3667 = vpop.xlane.xlu0 %3666
      %v3668 = vsel %vm1107, %v3644, -inf
      %3669 = vmax.xlane.f32.xlu0 %v3668
      %v3670 = vpop.xlane.xlu0 %3669
      %v3671 = vsub.f32 %v3617, %v3649
      %v3672 = vsub.f32 %v3620, %v3652
      %v3673 = vsub.f32 %v3625, %v3655
      %v3674 = vsub.f32 %v3628, %v3658
      %v3675 = vsub.f32 %v3633, %v3661
      %v3676 = vsub.f32 %v3636, %v3664
      %v3677 = vsub.f32 %v3641, %v3667
      %v3678 = vsub.f32 %v3644, %v3670
      %v3679 = vmul.f32 %v3671, 1.442695
      %v3680 = vpow.pop %v3679
      %v3681 = vmul.f32 %v3672, 1.442695
      %v3682 = vpow.pop %v3681
      %v3683 = vmul.f32 %v3673, 1.442695
      %v3684 = vpow.pop %v3683
      %v3685 = vmul.f32 %v3674, 1.442695
      %v3686 = vpow.pop %v3685
      %v3687 = vmul.f32 %v3675, 1.442695
      %v3688 = vpow.pop %v3687
      %v3689 = vmul.f32 %v3676, 1.442695
      %v3690 = vpow.pop %v3689
      %v3691 = vmul.f32 %v3677, 1.442695
      %v3692 = vpow.pop %v3691
      %v3693 = vmul.f32 %v3678, 1.442695
      %v3694 = vpow.pop %v3693
      %v3695 = vsel %vm1107, %v3680, 0.0
      %3696 = vadd.xlane.f32.xlu0 %v3695
      %v3697 = vpop.xlane.xlu0 %3696
      %v3698 = vsel %vm1107, %v3682, 0.0
      %3699 = vadd.xlane.f32.xlu0 %v3698
      %v3700 = vpop.xlane.xlu0 %3699
      %v3701 = vsel %vm1107, %v3684, 0.0
      %3702 = vadd.xlane.f32.xlu0 %v3701
      %v3703 = vpop.xlane.xlu0 %3702
      %v3704 = vsel %vm1107, %v3686, 0.0
      %3705 = vadd.xlane.f32.xlu0 %v3704
      %v3706 = vpop.xlane.xlu0 %3705
      %v3707 = vsel %vm1107, %v3688, 0.0
      %3708 = vadd.xlane.f32.xlu0 %v3707
      %v3709 = vpop.xlane.xlu0 %3708
      %v3710 = vsel %vm1107, %v3690, 0.0
      %3711 = vadd.xlane.f32.xlu0 %v3710
      %v3712 = vpop.xlane.xlu0 %3711
      %v3713 = vsel %vm1107, %v3692, 0.0
      %3714 = vadd.xlane.f32.xlu0 %v3713
      %v3715 = vpop.xlane.xlu0 %3714
      %v3716 = vsel %vm1107, %v3694, 0.0
      %3717 = vadd.xlane.f32.xlu0 %v3716
      %v3718 = vpop.xlane.xlu0 %3717
      %v3719 = vrcp.pop %v3697
      %v3720 = vrcp.pop %v3700
      %v3721 = vrcp.pop %v3703
      %v3722 = vrcp.pop %v3706
      %v3723 = vrcp.pop %v3709
      %v3724 = vrcp.pop %v3712
      %v3725 = vrcp.pop %v3715
      %v3726 = vrcp.pop %v3718
      %v3727 = vmul.f32 %v3680, %v3719
      %v3728 = vmul.f32 %v3682, %v3720
      %v3729 = vmul.f32 %v3684, %v3721
      %v3730 = vmul.f32 %v3686, %v3722
      %v3731 = vmul.f32 %v3688, %v3723
      %v3732 = vmul.f32 %v3690, %v3724
      %v3733 = vmul.f32 %v3692, %v3725
      %v3734 = vmul.f32 %v3694, %v3726
      %v3735 = vpack.c.bf16 %v3728, %v3727
      %v3736 = vpack.c.bf16 %v3730, %v3729
      %v3737 = vpack.c.bf16 %v3732, %v3731
      %v3738 = vpack.c.bf16 %v3734, %v3733
      %3743 = vrot.lane.b32.xlu0 %v2017, 64
      %v3744 = vpop.permute.xlu0 %3743
      %3745 = vrot.lane.b32.xlu0 %v2021, 64
      %v3746 = vpop.permute.xlu0 %3745
      %3747 = vrot.lane.b32.xlu0 %v2025, 64
      %v3748 = vpop.permute.xlu0 %3747
      %3749 = vrot.lane.b32.xlu0 %v2029, 64
      %v3750 = vpop.permute.xlu0 %3749
      %v3756 = vsel %vm1107, %v3735, 0
      %v3759 = vsel %vm1107, %v3736, 0
      %v3762 = vsel %vm1107, %v3737, 0
      %v3765 = vsel %vm1107, %v3738, 0
      %3767 = vmatprep.subr.bf16.mxu0 0
      %3768 = vmatpush1.bf16.msra.mxu0 %v3744
      %3769 = vmatprep.subr.bf16.mxu0 0
      %3770 = vmatpush1.bf16.msra.mxu0 %v3746
      %3771 = vmatprep.subr.bf16.mxu0 0
      %3772 = vmatpush1.bf16.msra.mxu0 %v3748
      %3773 = vmatprep.subr.bf16.mxu0 0
      %3774 = vmatpush1.bf16.msra.mxu0 %v3750
      %3775 = vmatprep.subr.bf16.mxu0 0
      %3776 = vmatpush1.bf16.msra.mxu0 0
      %3777 = vmatprep.subr.bf16.mxu0 0
      %3778 = vmatpush1.bf16.msra.mxu0 0
      %3779 = vmatprep.subr.bf16.mxu0 0
      %3780 = vmatpush1.bf16.msra.mxu0 0
      %3781 = vmatprep.subr.bf16.mxu0 0
      %3782 = vmatpush1.bf16.msra.mxu0 0
      %3783 = vmatprep.subr.bf16.mxu0 0
      %3784 = vmatpush1.bf16.msra.mxu0 0
      %3785 = vmatprep.subr.bf16.mxu0 0
      %3786 = vmatpush1.bf16.msra.mxu0 0
      %3787 = vmatprep.subr.bf16.mxu0 0
      %3788 = vmatpush1.bf16.msra.mxu0 0
      %3789 = vmatprep.subr.bf16.mxu0 0
      %3790 = vmatpush1.bf16.msra.mxu0 0
      %3791 = vmatprep.subr.bf16.mxu0 0
      %3792 = vmatpush1.bf16.msra.mxu0 0
      %3793 = vmatprep.subr.bf16.mxu0 0
      %3794 = vmatpush1.bf16.msra.mxu0 0
      %3795 = vmatprep.subr.bf16.mxu0 0
      %3796 = vmatpush1.bf16.msra.mxu0 0
      %3797 = vmatprep.subr.bf16.mxu0 0
      %3798 = vmatpush1.bf16.msra.mxu0 0
      %3799 = vmatprep.mubr.bf16.mxu0 0
      %3800 = vmatmul.mubr.bf16.gmra.mrb[0].mxu0 %v3756
      %v3801 = vpop.f32.mrb[0].mxu0
      %v3802 = vadd.f32 0.0, %v3801
      %v3803 = vpop.f32.mrb[0].mxu0
      %v3804 = vpop.f32.mrb[0].mxu0
      %v3805 = vadd.f32 0.0, %v3804
      %v3806 = vpop.f32.mrb[0].mxu0
      %3807 = vmatprep.mubr.bf16.mxu0 0
      %3808 = vmatmul.mubr.bf16.gmra.mrb[0].mxu0 %v3759
      %v3809 = vpop.f32.mrb[0].mxu0
      %v3810 = vadd.f32 0.0, %v3809
      %v3811 = vpop.f32.mrb[0].mxu0
      %v3812 = vpop.f32.mrb[0].mxu0
      %v3813 = vadd.f32 0.0, %v3812
      %v3814 = vpop.f32.mrb[0].mxu0
      %3815 = vmatprep.mubr.bf16.mxu0 0
      %3816 = vmatmul.mubr.bf16.gmra.mrb[0].mxu0 %v3762
      %v3817 = vpop.f32.mrb[0].mxu0
      %v3818 = vadd.f32 0.0, %v3817
      %v3819 = vpop.f32.mrb[0].mxu0
      %v3820 = vpop.f32.mrb[0].mxu0
      %v3821 = vadd.f32 0.0, %v3820
      %v3822 = vpop.f32.mrb[0].mxu0
      %3823 = vmatprep.mubr.bf16.mxu0 0
      %3824 = vmatmul.mubr.bf16.gmra.mrb[0].mxu0 %v3765
      %v3825 = vpop.f32.mrb[0].mxu0
      %v3826 = vadd.f32 0.0, %v3825
      %v3827 = vpop.f32.mrb[0].mxu0
      %v3828 = vpop.f32.mrb[0].mxu0
      %v3829 = vadd.f32 0.0, %v3828
      %v3830 = vpop.f32.mrb[0].mxu0
      %3831 = vdwg.mxu0
      %v3832 = vpack.c.bf16 %v3805, %v3802
      %v3833 = vpack.c.bf16 %v3813, %v3810
      %v3834 = vpack.c.bf16 %v3821, %v3818
      %v3835 = vpack.c.bf16 %v3829, %v3826
      %3840 = vrot.lane.b32.xlu0 %v3735, 64
      %v3841 = vpop.permute.xlu0 %3840
      %3842 = vrot.lane.b32.xlu0 %v3736, 64
      %v3843 = vpop.permute.xlu0 %3842
      %3844 = vrot.lane.b32.xlu0 %v3737, 64
      %v3845 = vpop.permute.xlu0 %3844
      %3846 = vrot.lane.b32.xlu0 %v3738, 64
      %v3847 = vpop.permute.xlu0 %3846
      %v3849 = vsel %vm1107, %v3449, %v3841
      %v3851 = vsel %vm1107, %v3450, %v3843
      %v3853 = vsel %vm1107, %v3451, %v3845
      %v3855 = vsel %vm1107, %v3452, %v3847
      %v3860 = vunpack.c.l.b16 %v3849
      %v3861 = vunpack.c.h.b16 %v3849
      %v3862 = vunpack.c.l.b16 %v3851
      %v3863 = vunpack.c.h.b16 %v3851
      %v3864 = vunpack.c.l.b16 %v3853
      %v3865 = vunpack.c.h.b16 %v3853
      %v3866 = vunpack.c.l.b16 %v3855
      %v3867 = vunpack.c.h.b16 %v3855
      %v3868 = vpack.c.b16 %v3860, %v3860
      %v3869 = vpack.c.b16 %v3861, %v3861
      %v3870 = vpack.c.b16 %v3862, %v3862
      %v3871 = vpack.c.b16 %v3863, %v3863
      %v3872 = vpack.c.b16 %v3864, %v3864
      %v3873 = vpack.c.b16 %v3865, %v3865
      %v3874 = vpack.c.b16 %v3866, %v3866
      %v3875 = vpack.c.b16 %v3867, %v3867
      %s3884 = scalar_lea.vmem %s907, 64
      %3885 = vst [vmem:[%s3884] sm:$0xf] %v3868
      %3886 = vst [vmem:[%s3884 + $0x4] sm:$0xf] %v3869
      %3887 = vst [vmem:[%s3884 + $0x8] sm:$0xf] %v3870
      %3888 = vst [vmem:[%s3884 + $0xc] sm:$0xf] %v3871
      %3889 = vst [vmem:[%s3884 + $0x10] sm:$0xf] %v3872
      %3890 = vst [vmem:[%s3884 + $0x14] sm:$0xf] %v3873
      %3891 = vst [vmem:[%s3884 + $0x18] sm:$0xf] %v3874
      %3892 = vst [vmem:[%s3884 + $0x1c] sm:$0xf] %v3875
      %v3894 = vsel %vm1107, %v1502, 0
      %v3897 = vsel %vm1107, %v1506, 0
      %v3900 = vsel %vm1107, %v1510, 0
      %v3903 = vsel %vm1107, %v1514, 0
      %v3906 = vsel %vm1107, %v1760, 0
      %v3909 = vsel %vm1107, %v1764, 0
      %v3912 = vsel %vm1107, %v1768, 0
      %v3915 = vsel %vm1107, %v1772, 0
      %3917 = vmatprep.subr.bf16.mxu0 0
      %3918 = vmatpush1.bf16.xpose.msra.mxu0 %v3906
      %3919 = vmatprep.subr.bf16.mxu0 0
      %3920 = vmatpush1.bf16.xpose.msra.mxu0 %v3909
      %3921 = vmatprep.subr.bf16.mxu0 0
      %3922 = vmatpush1.bf16.xpose.msra.mxu0 %v3912
      %3923 = vmatprep.subr.bf16.mxu0 0
      %3924 = vmatpush1.bf16.xpose.msra.mxu0 %v3915
      %3925 = vmatprep.subr.bf16.mxu0 0
      %3926 = vmatpush1.bf16.xpose.msra.mxu0 0
      %3927 = vmatprep.subr.bf16.mxu0 0
      %3928 = vmatpush1.bf16.xpose.msra.mxu0 0
      %3929 = vmatprep.subr.bf16.mxu0 0
      %3930 = vmatpush1.bf16.xpose.msra.mxu0 0
      %3931 = vmatprep.subr.bf16.mxu0 0
      %3932 = vmatpush1.bf16.xpose.msra.mxu0 0
      %3933 = vmatprep.subr.bf16.mxu0 0
      %3934 = vmatpush1.bf16.xpose.msra.mxu0 0
      %3935 = vmatprep.subr.bf16.mxu0 0
      %3936 = vmatpush1.bf16.xpose.msra.mxu0 0
      %3937 = vmatprep.subr.bf16.mxu0 0
      %3938 = vmatpush1.bf16.xpose.msra.mxu0 0
      %3939 = vmatprep.subr.bf16.mxu0 0
      %3940 = vmatpush1.bf16.xpose.msra.mxu0 0
      %3941 = vmatprep.subr.bf16.mxu0 0
      %3942 = vmatpush1.bf16.xpose.msra.mxu0 0
      %3943 = vmatprep.subr.bf16.mxu0 0
      %3944 = vmatpush1.bf16.xpose.msra.mxu0 0
      %3945 = vmatprep.subr.bf16.mxu0 0
      %3946 = vmatpush1.bf16.xpose.msra.mxu0 0
      %3947 = vmatprep.subr.bf16.mxu0 0
      %3948 = vmatpush1.bf16.xpose.msra.mxu0 0
      %3949 = vmatprep.mubr.bf16.mxu0 0
      %3950 = vmatmul.mubr.bf16.gmra.mrb[0].mxu0 %v3894
      %v3951 = vpop.f32.mrb[0].mxu0
      %v3952 = vadd.f32 %v912, %v3951
      %v3953 = vpop.f32.mrb[0].mxu0
      %v3954 = vpop.f32.mrb[0].mxu0
      %v3955 = vadd.f32 %v912, %v3954
      %v3956 = vpop.f32.mrb[0].mxu0
      %3957 = vmatprep.mubr.bf16.mxu0 0
      %3958 = vmatmul.mubr.bf16.gmra.mrb[0].mxu0 %v3897
      %v3959 = vpop.f32.mrb[0].mxu0
      %v3960 = vadd.f32 %v912, %v3959
      %v3961 = vpop.f32.mrb[0].mxu0
      %v3962 = vpop.f32.mrb[0].mxu0
      %v3963 = vadd.f32 %v912, %v3962
      %v3964 = vpop.f32.mrb[0].mxu0
      %3965 = vmatprep.mubr.bf16.mxu0 0
      %3966 = vmatmul.mubr.bf16.gmra.mrb[0].mxu0 %v3900
      %v3967 = vpop.f32.mrb[0].mxu0
      %v3968 = vadd.f32 %v912, %v3967
      %v3969 = vpop.f32.mrb[0].mxu0
      %v3970 = vpop.f32.mrb[0].mxu0
      %v3971 = vadd.f32 %v912, %v3970
      %v3972 = vpop.f32.mrb[0].mxu0
      %3973 = vmatprep.mubr.bf16.mxu0 0
      %3974 = vmatmul.mubr.bf16.gmra.mrb[0].mxu0 %v3903
      %v3975 = vpop.f32.mrb[0].mxu0
      %v3976 = vadd.f32 %v912, %v3975
      %v3977 = vpop.f32.mrb[0].mxu0
      %v3978 = vpop.f32.mrb[0].mxu0
      %v3979 = vadd.f32 %v912, %v3978
      %v3980 = vpop.f32.mrb[0].mxu0
      %3981 = vdwg.mxu0
      %v3982 = vsel %vm1107, %v3952, -inf
      %3983 = vmax.xlane.f32.xlu0 %v3982
      %v3984 = vpop.xlane.xlu0 %3983
      %v3985 = vsel %vm1107, %v3955, -inf
      %3986 = vmax.xlane.f32.xlu0 %v3985
      %v3987 = vpop.xlane.xlu0 %3986
      %v3988 = vsel %vm1107, %v3960, -inf
      %3989 = vmax.xlane.f32.xlu0 %v3988
      %v3990 = vpop.xlane.xlu0 %3989
      %v3991 = vsel %vm1107, %v3963, -inf
      %3992 = vmax.xlane.f32.xlu0 %v3991
      %v3993 = vpop.xlane.xlu0 %3992
      %v3994 = vsel %vm1107, %v3968, -inf
      %3995 = vmax.xlane.f32.xlu0 %v3994
      %v3996 = vpop.xlane.xlu0 %3995
      %v3997 = vsel %vm1107, %v3971, -inf
      %3998 = vmax.xlane.f32.xlu0 %v3997
      %v3999 = vpop.xlane.xlu0 %3998
      %v4000 = vsel %vm1107, %v3976, -inf
      %4001 = vmax.xlane.f32.xlu0 %v4000
      %v4002 = vpop.xlane.xlu0 %4001
      %v4003 = vsel %vm1107, %v3979, -inf
      %4004 = vmax.xlane.f32.xlu0 %v4003
      %v4005 = vpop.xlane.xlu0 %4004
      %v4006 = vsub.f32 %v3952, %v3984
      %v4007 = vsub.f32 %v3955, %v3987
      %v4008 = vsub.f32 %v3960, %v3990
      %v4009 = vsub.f32 %v3963, %v3993
      %v4010 = vsub.f32 %v3968, %v3996
      %v4011 = vsub.f32 %v3971, %v3999
      %v4012 = vsub.f32 %v3976, %v4002
      %v4013 = vsub.f32 %v3979, %v4005
      %v4014 = vmul.f32 %v4006, 1.442695
      %v4015 = vpow.pop %v4014
      %v4016 = vmul.f32 %v4007, 1.442695
      %v4017 = vpow.pop %v4016
      %v4018 = vmul.f32 %v4008, 1.442695
      %v4019 = vpow.pop %v4018
      %v4020 = vmul.f32 %v4009, 1.442695
      %v4021 = vpow.pop %v4020
      %v4022 = vmul.f32 %v4010, 1.442695
      %v4023 = vpow.pop %v4022
      %v4024 = vmul.f32 %v4011, 1.442695
      %v4025 = vpow.pop %v4024
      %v4026 = vmul.f32 %v4012, 1.442695
      %v4027 = vpow.pop %v4026
      %v4028 = vmul.f32 %v4013, 1.442695
      %v4029 = vpow.pop %v4028
      %v4030 = vsel %vm1107, %v4015, 0.0
      %4031 = vadd.xlane.f32.xlu0 %v4030
      %v4032 = vpop.xlane.xlu0 %4031
      %v4033 = vsel %vm1107, %v4017, 0.0
      %4034 = vadd.xlane.f32.xlu0 %v4033
      %v4035 = vpop.xlane.xlu0 %4034
      %v4036 = vsel %vm1107, %v4019, 0.0
      %4037 = vadd.xlane.f32.xlu0 %v4036
      %v4038 = vpop.xlane.xlu0 %4037
      %v4039 = vsel %vm1107, %v4021, 0.0
      %4040 = vadd.xlane.f32.xlu0 %v4039
      %v4041 = vpop.xlane.xlu0 %4040
      %v4042 = vsel %vm1107, %v4023, 0.0
      %4043 = vadd.xlane.f32.xlu0 %v4042
      %v4044 = vpop.xlane.xlu0 %4043
      %v4045 = vsel %vm1107, %v4025, 0.0
      %4046 = vadd.xlane.f32.xlu0 %v4045
      %v4047 = vpop.xlane.xlu0 %4046
      %v4048 = vsel %vm1107, %v4027, 0.0
      %4049 = vadd.xlane.f32.xlu0 %v4048
      %v4050 = vpop.xlane.xlu0 %4049
      %v4051 = vsel %vm1107, %v4029, 0.0
      %4052 = vadd.xlane.f32.xlu0 %v4051
      %v4053 = vpop.xlane.xlu0 %4052
      %v4054 = vrcp.pop %v4032
      %v4055 = vrcp.pop %v4035
      %v4056 = vrcp.pop %v4038
      %v4057 = vrcp.pop %v4041
      %v4058 = vrcp.pop %v4044
      %v4059 = vrcp.pop %v4047
      %v4060 = vrcp.pop %v4050
      %v4061 = vrcp.pop %v4053
      %v4062 = vmul.f32 %v4015, %v4054
      %v4063 = vmul.f32 %v4017, %v4055
      %v4064 = vmul.f32 %v4019, %v4056
      %v4065 = vmul.f32 %v4021, %v4057
      %v4066 = vmul.f32 %v4023, %v4058
      %v4067 = vmul.f32 %v4025, %v4059
      %v4068 = vmul.f32 %v4027, %v4060
      %v4069 = vmul.f32 %v4029, %v4061
      %v4070 = vpack.c.bf16 %v4063, %v4062
      %v4071 = vpack.c.bf16 %v4065, %v4064
      %v4072 = vpack.c.bf16 %v4067, %v4066
      %v4073 = vpack.c.bf16 %v4069, %v4068
      %v4075 = vsel %vm1107, %v4070, 0
      %v4078 = vsel %vm1107, %v4071, 0
      %v4081 = vsel %vm1107, %v4072, 0
      %v4084 = vsel %vm1107, %v4073, 0
      %4086 = vmatprep.subr.bf16.mxu0 0
      %4087 = vmatpush1.bf16.msra.mxu0 %v2018
      %4088 = vmatprep.subr.bf16.mxu0 0
      %4089 = vmatpush1.bf16.msra.mxu0 %v2022
      %4090 = vmatprep.subr.bf16.mxu0 0
      %4091 = vmatpush1.bf16.msra.mxu0 %v2026
      %4092 = vmatprep.subr.bf16.mxu0 0
      %4093 = vmatpush1.bf16.msra.mxu0 %v2030
      %4094 = vmatprep.subr.bf16.mxu0 0
      %4095 = vmatpush1.bf16.msra.mxu0 0
      %4096 = vmatprep.subr.bf16.mxu0 0
      %4097 = vmatpush1.bf16.msra.mxu0 0
      %4098 = vmatprep.subr.bf16.mxu0 0
      %4099 = vmatpush1.bf16.msra.mxu0 0
      %4100 = vmatprep.subr.bf16.mxu0 0
      %4101 = vmatpush1.bf16.msra.mxu0 0
      %4102 = vmatprep.subr.bf16.mxu0 0
      %4103 = vmatpush1.bf16.msra.mxu0 0
      %4104 = vmatprep.subr.bf16.mxu0 0
      %4105 = vmatpush1.bf16.msra.mxu0 0
      %4106 = vmatprep.subr.bf16.mxu0 0
      %4107 = vmatpush1.bf16.msra.mxu0 0
      %4108 = vmatprep.subr.bf16.mxu0 0
      %4109 = vmatpush1.bf16.msra.mxu0 0
      %4110 = vmatprep.subr.bf16.mxu0 0
      %4111 = vmatpush1.bf16.msra.mxu0 0
      %4112 = vmatprep.subr.bf16.mxu0 0
      %4113 = vmatpush1.bf16.msra.mxu0 0
      %4114 = vmatprep.subr.bf16.mxu0 0
      %4115 = vmatpush1.bf16.msra.mxu0 0
      %4116 = vmatprep.subr.bf16.mxu0 0
      %4117 = vmatpush1.bf16.msra.mxu0 0
      %4118 = vmatprep.mubr.bf16.mxu0 0
      %4119 = vmatmul.mubr.bf16.gmra.mrb[0].mxu0 %v4075
      %v4120 = vpop.f32.mrb[0].mxu0
      %v4121 = vadd.f32 0.0, %v4120
      %v4122 = vpop.f32.mrb[0].mxu0
      %v4123 = vpop.f32.mrb[0].mxu0
      %v4124 = vadd.f32 0.0, %v4123
      %v4125 = vpop.f32.mrb[0].mxu0
      %4126 = vmatprep.mubr.bf16.mxu0 0
      %4127 = vmatmul.mubr.bf16.gmra.mrb[0].mxu0 %v4078
      %v4128 = vpop.f32.mrb[0].mxu0
      %v4129 = vadd.f32 0.0, %v4128
      %v4130 = vpop.f32.mrb[0].mxu0
      %v4131 = vpop.f32.mrb[0].mxu0
      %v4132 = vadd.f32 0.0, %v4131
      %v4133 = vpop.f32.mrb[0].mxu0
      %4134 = vmatprep.mubr.bf16.mxu0 0
      %4135 = vmatmul.mubr.bf16.gmra.mrb[0].mxu0 %v4081
      %v4136 = vpop.f32.mrb[0].mxu0
      %v4137 = vadd.f32 0.0, %v4136
      %v4138 = vpop.f32.mrb[0].mxu0
      %v4139 = vpop.f32.mrb[0].mxu0
      %v4140 = vadd.f32 0.0, %v4139
      %v4141 = vpop.f32.mrb[0].mxu0
      %4142 = vmatprep.mubr.bf16.mxu0 0
      %4143 = vmatmul.mubr.bf16.gmra.mrb[0].mxu0 %v4084
      %v4144 = vpop.f32.mrb[0].mxu0
      %v4145 = vadd.f32 0.0, %v4144
      %v4146 = vpop.f32.mrb[0].mxu0
      %v4147 = vpop.f32.mrb[0].mxu0
      %v4148 = vadd.f32 0.0, %v4147
      %v4149 = vpop.f32.mrb[0].mxu0
      %4150 = vdwg.mxu0
      %v4151 = vpack.c.bf16 %v4124, %v4121
      %v4152 = vpack.c.bf16 %v4132, %v4129
      %v4153 = vpack.c.bf16 %v4140, %v4137
      %v4154 = vpack.c.bf16 %v4148, %v4145
      %4159 = vrot.lane.b32.xlu0 %v1502, 64
      %v4160 = vpop.permute.xlu0 %4159
      %4161 = vrot.lane.b32.xlu0 %v1506, 64
      %v4162 = vpop.permute.xlu0 %4161
      %4163 = vrot.lane.b32.xlu0 %v1510, 64
      %v4164 = vpop.permute.xlu0 %4163
      %4165 = vrot.lane.b32.xlu0 %v1514, 64
      %v4166 = vpop.permute.xlu0 %4165
      %4171 = vrot.lane.b32.xlu0 %v1760, 64
      %v4172 = vpop.permute.xlu0 %4171
      %4173 = vrot.lane.b32.xlu0 %v1764, 64
      %v4174 = vpop.permute.xlu0 %4173
      %4175 = vrot.lane.b32.xlu0 %v1768, 64
      %v4176 = vpop.permute.xlu0 %4175
      %4177 = vrot.lane.b32.xlu0 %v1772, 64
      %v4178 = vpop.permute.xlu0 %4177
      %v4180 = vsel %vm1107, %v4160, 0
      %v4183 = vsel %vm1107, %v4162, 0
      %v4186 = vsel %vm1107, %v4164, 0
      %v4189 = vsel %vm1107, %v4166, 0
      %v4192 = vsel %vm1107, %v4172, 0
      %v4195 = vsel %vm1107, %v4174, 0
      %v4198 = vsel %vm1107, %v4176, 0
      %v4201 = vsel %vm1107, %v4178, 0
      %4203 = vmatprep.subr.bf16.mxu0 0
      %4204 = vmatpush1.bf16.xpose.msra.mxu0 %v4192
      %4205 = vmatprep.subr.bf16.mxu0 0
      %4206 = vmatpush1.bf16.xpose.msra.mxu0 %v4195
      %4207 = vmatprep.subr.bf16.mxu0 0
      %4208 = vmatpush1.bf16.xpose.msra.mxu0 %v4198
      %4209 = vmatprep.subr.bf16.mxu0 0
      %4210 = vmatpush1.bf16.xpose.msra.mxu0 %v4201
      %4211 = vmatprep.subr.bf16.mxu0 0
      %4212 = vmatpush1.bf16.xpose.msra.mxu0 0
      %4213 = vmatprep.subr.bf16.mxu0 0
      %4214 = vmatpush1.bf16.xpose.msra.mxu0 0
      %4215 = vmatprep.subr.bf16.mxu0 0
      %4216 = vmatpush1.bf16.xpose.msra.mxu0 0
      %4217 = vmatprep.subr.bf16.mxu0 0
      %4218 = vmatpush1.bf16.xpose.msra.mxu0 0
      %4219 = vmatprep.subr.bf16.mxu0 0
      %4220 = vmatpush1.bf16.xpose.msra.mxu0 0
      %4221 = vmatprep.subr.bf16.mxu0 0
      %4222 = vmatpush1.bf16.xpose.msra.mxu0 0
      %4223 = vmatprep.subr.bf16.mxu0 0
      %4224 = vmatpush1.bf16.xpose.msra.mxu0 0
      %4225 = vmatprep.subr.bf16.mxu0 0
      %4226 = vmatpush1.bf16.xpose.msra.mxu0 0
      %4227 = vmatprep.subr.bf16.mxu0 0
      %4228 = vmatpush1.bf16.xpose.msra.mxu0 0
      %4229 = vmatprep.subr.bf16.mxu0 0
      %4230 = vmatpush1.bf16.xpose.msra.mxu0 0
      %4231 = vmatprep.subr.bf16.mxu0 0
      %4232 = vmatpush1.bf16.xpose.msra.mxu0 0
      %4233 = vmatprep.subr.bf16.mxu0 0
      %4234 = vmatpush1.bf16.xpose.msra.mxu0 0
      %4235 = vmatprep.mubr.bf16.mxu0 0
      %4236 = vmatmul.mubr.bf16.gmra.mrb[0].mxu0 %v4180
      %v4237 = vpop.f32.mrb[0].mxu0
      %v4238 = vadd.f32 %v912, %v4237
      %v4239 = vpop.f32.mrb[0].mxu0
      %v4240 = vpop.f32.mrb[0].mxu0
      %v4241 = vadd.f32 %v912, %v4240
      %v4242 = vpop.f32.mrb[0].mxu0
      %4243 = vmatprep.mubr.bf16.mxu0 0
      %4244 = vmatmul.mubr.bf16.gmra.mrb[0].mxu0 %v4183
      %v4245 = vpop.f32.mrb[0].mxu0
      %v4246 = vadd.f32 %v912, %v4245
      %v4247 = vpop.f32.mrb[0].mxu0
      %v4248 = vpop.f32.mrb[0].mxu0
      %v4249 = vadd.f32 %v912, %v4248
      %v4250 = vpop.f32.mrb[0].mxu0
      %4251 = vmatprep.mubr.bf16.mxu0 0
      %4252 = vmatmul.mubr.bf16.gmra.mrb[0].mxu0 %v4186
      %v4253 = vpop.f32.mrb[0].mxu0
      %v4254 = vadd.f32 %v912, %v4253
      %v4255 = vpop.f32.mrb[0].mxu0
      %v4256 = vpop.f32.mrb[0].mxu0
      %v4257 = vadd.f32 %v912, %v4256
      %v4258 = vpop.f32.mrb[0].mxu0
      %4259 = vmatprep.mubr.bf16.mxu0 0
      %4260 = vmatmul.mubr.bf16.gmra.mrb[0].mxu0 %v4189
      %v4261 = vpop.f32.mrb[0].mxu0
      %v4262 = vadd.f32 %v912, %v4261
      %v4263 = vpop.f32.mrb[0].mxu0
      %v4264 = vpop.f32.mrb[0].mxu0
      %v4265 = vadd.f32 %v912, %v4264
      %v4266 = vpop.f32.mrb[0].mxu0
      %4267 = vdwg.mxu0
      %v4268 = vsel %vm1107, %v4238, -inf
      %4269 = vmax.xlane.f32.xlu0 %v4268
      %v4270 = vpop.xlane.xlu0 %4269
      %v4271 = vsel %vm1107, %v4241, -inf
      %4272 = vmax.xlane.f32.xlu0 %v4271
      %v4273 = vpop.xlane.xlu0 %4272
      %v4274 = vsel %vm1107, %v4246, -inf
      %4275 = vmax.xlane.f32.xlu0 %v4274
      %v4276 = vpop.xlane.xlu0 %4275
      %v4277 = vsel %vm1107, %v4249, -inf
      %4278 = vmax.xlane.f32.xlu0 %v4277
      %v4279 = vpop.xlane.xlu0 %4278
      %v4280 = vsel %vm1107, %v4254, -inf
      %4281 = vmax.xlane.f32.xlu0 %v4280
      %v4282 = vpop.xlane.xlu0 %4281
      %v4283 = vsel %vm1107, %v4257, -inf
      %4284 = vmax.xlane.f32.xlu0 %v4283
      %v4285 = vpop.xlane.xlu0 %4284
      %v4286 = vsel %vm1107, %v4262, -inf
      %4287 = vmax.xlane.f32.xlu0 %v4286
      %v4288 = vpop.xlane.xlu0 %4287
      %v4289 = vsel %vm1107, %v4265, -inf
      %4290 = vmax.xlane.f32.xlu0 %v4289
      %v4291 = vpop.xlane.xlu0 %4290
      %v4292 = vsub.f32 %v4238, %v4270
      %v4293 = vsub.f32 %v4241, %v4273
      %v4294 = vsub.f32 %v4246, %v4276
      %v4295 = vsub.f32 %v4249, %v4279
      %v4296 = vsub.f32 %v4254, %v4282
      %v4297 = vsub.f32 %v4257, %v4285
      %v4298 = vsub.f32 %v4262, %v4288
      %v4299 = vsub.f32 %v4265, %v4291
      %v4300 = vmul.f32 %v4292, 1.442695
      %v4301 = vpow.pop %v4300
      %v4302 = vmul.f32 %v4293, 1.442695
      %v4303 = vpow.pop %v4302
      %v4304 = vmul.f32 %v4294, 1.442695
      %v4305 = vpow.pop %v4304
      %v4306 = vmul.f32 %v4295, 1.442695
      %v4307 = vpow.pop %v4306
      %v4308 = vmul.f32 %v4296, 1.442695
      %v4309 = vpow.pop %v4308
      %v4310 = vmul.f32 %v4297, 1.442695
      %v4311 = vpow.pop %v4310
      %v4312 = vmul.f32 %v4298, 1.442695
      %v4313 = vpow.pop %v4312
      %v4314 = vmul.f32 %v4299, 1.442695
      %v4315 = vpow.pop %v4314
      %v4316 = vsel %vm1107, %v4301, 0.0
      %4317 = vadd.xlane.f32.xlu0 %v4316
      %v4318 = vpop.xlane.xlu0 %4317
      %v4319 = vsel %vm1107, %v4303, 0.0
      %4320 = vadd.xlane.f32.xlu0 %v4319
      %v4321 = vpop.xlane.xlu0 %4320
      %v4322 = vsel %vm1107, %v4305, 0.0
      %4323 = vadd.xlane.f32.xlu0 %v4322
      %v4324 = vpop.xlane.xlu0 %4323
      %v4325 = vsel %vm1107, %v4307, 0.0
      %4326 = vadd.xlane.f32.xlu0 %v4325
      %v4327 = vpop.xlane.xlu0 %4326
      %v4328 = vsel %vm1107, %v4309, 0.0
      %4329 = vadd.xlane.f32.xlu0 %v4328
      %v4330 = vpop.xlane.xlu0 %4329
      %v4331 = vsel %vm1107, %v4311, 0.0
      %4332 = vadd.xlane.f32.xlu0 %v4331
      %v4333 = vpop.xlane.xlu0 %4332
      %v4334 = vsel %vm1107, %v4313, 0.0
      %4335 = vadd.xlane.f32.xlu0 %v4334
      %v4336 = vpop.xlane.xlu0 %4335
      %v4337 = vsel %vm1107, %v4315, 0.0
      %4338 = vadd.xlane.f32.xlu0 %v4337
      %v4339 = vpop.xlane.xlu0 %4338
      %v4340 = vrcp.pop %v4318
      %v4341 = vrcp.pop %v4321
      %v4342 = vrcp.pop %v4324
      %v4343 = vrcp.pop %v4327
      %v4344 = vrcp.pop %v4330
      %v4345 = vrcp.pop %v4333
      %v4346 = vrcp.pop %v4336
      %v4347 = vrcp.pop %v4339
      %v4348 = vmul.f32 %v4301, %v4340
      %v4349 = vmul.f32 %v4303, %v4341
      %v4350 = vmul.f32 %v4305, %v4342
      %v4351 = vmul.f32 %v4307, %v4343
      %v4352 = vmul.f32 %v4309, %v4344
      %v4353 = vmul.f32 %v4311, %v4345
      %v4354 = vmul.f32 %v4313, %v4346
      %v4355 = vmul.f32 %v4315, %v4347
      %v4356 = vpack.c.bf16 %v4349, %v4348
      %v4357 = vpack.c.bf16 %v4351, %v4350
      %v4358 = vpack.c.bf16 %v4353, %v4352
      %v4359 = vpack.c.bf16 %v4355, %v4354
      %4364 = vrot.lane.b32.xlu0 %v2018, 64
      %v4365 = vpop.permute.xlu0 %4364
      %4366 = vrot.lane.b32.xlu0 %v2022, 64
      %v4367 = vpop.permute.xlu0 %4366
      %4368 = vrot.lane.b32.xlu0 %v2026, 64
      %v4369 = vpop.permute.xlu0 %4368
      %4370 = vrot.lane.b32.xlu0 %v2030, 64
      %v4371 = vpop.permute.xlu0 %4370
      %v4377 = vsel %vm1107, %v4356, 0
      %v4380 = vsel %vm1107, %v4357, 0
      %v4383 = vsel %vm1107, %v4358, 0
      %v4386 = vsel %vm1107, %v4359, 0
      %4388 = vmatprep.subr.bf16.mxu0 0
      %4389 = vmatpush1.bf16.msra.mxu0 %v4365
      %4390 = vmatprep.subr.bf16.mxu0 0
      %4391 = vmatpush1.bf16.msra.mxu0 %v4367
      %4392 = vmatprep.subr.bf16.mxu0 0
      %4393 = vmatpush1.bf16.msra.mxu0 %v4369
      %4394 = vmatprep.subr.bf16.mxu0 0
      %4395 = vmatpush1.bf16.msra.mxu0 %v4371
      %4396 = vmatprep.subr.bf16.mxu0 0
      %4397 = vmatpush1.bf16.msra.mxu0 0
      %4398 = vmatprep.subr.bf16.mxu0 0
      %4399 = vmatpush1.bf16.msra.mxu0 0
      %4400 = vmatprep.subr.bf16.mxu0 0
      %4401 = vmatpush1.bf16.msra.mxu0 0
      %4402 = vmatprep.subr.bf16.mxu0 0
      %4403 = vmatpush1.bf16.msra.mxu0 0
      %4404 = vmatprep.subr.bf16.mxu0 0
      %4405 = vmatpush1.bf16.msra.mxu0 0
      %4406 = vmatprep.subr.bf16.mxu0 0
      %4407 = vmatpush1.bf16.msra.mxu0 0
      %4408 = vmatprep.subr.bf16.mxu0 0
      %4409 = vmatpush1.bf16.msra.mxu0 0
      %4410 = vmatprep.subr.bf16.mxu0 0
      %4411 = vmatpush1.bf16.msra.mxu0 0
      %4412 = vmatprep.subr.bf16.mxu0 0
      %4413 = vmatpush1.bf16.msra.mxu0 0
      %4414 = vmatprep.subr.bf16.mxu0 0
      %4415 = vmatpush1.bf16.msra.mxu0 0
      %4416 = vmatprep.subr.bf16.mxu0 0
      %4417 = vmatpush1.bf16.msra.mxu0 0
      %4418 = vmatprep.subr.bf16.mxu0 0
      %4419 = vmatpush1.bf16.msra.mxu0 0
      %4420 = vmatprep.mubr.bf16.mxu0 0
      %4421 = vmatmul.mubr.bf16.gmra.mrb[0].mxu0 %v4377
      %v4422 = vpop.f32.mrb[0].mxu0
      %v4423 = vadd.f32 0.0, %v4422
      %v4424 = vpop.f32.mrb[0].mxu0
      %v4425 = vpop.f32.mrb[0].mxu0
      %v4426 = vadd.f32 0.0, %v4425
      %v4427 = vpop.f32.mrb[0].mxu0
      %4428 = vmatprep.mubr.bf16.mxu0 0
      %4429 = vmatmul.mubr.bf16.gmra.mrb[0].mxu0 %v4380
      %v4430 = vpop.f32.mrb[0].mxu0
      %v4431 = vadd.f32 0.0, %v4430
      %v4432 = vpop.f32.mrb[0].mxu0
      %v4433 = vpop.f32.mrb[0].mxu0
      %v4434 = vadd.f32 0.0, %v4433
      %v4435 = vpop.f32.mrb[0].mxu0
      %4436 = vmatprep.mubr.bf16.mxu0 0
      %4437 = vmatmul.mubr.bf16.gmra.mrb[0].mxu0 %v4383
      %v4438 = vpop.f32.mrb[0].mxu0
      %v4439 = vadd.f32 0.0, %v4438
      %v4440 = vpop.f32.mrb[0].mxu0
      %v4441 = vpop.f32.mrb[0].mxu0
      %v4442 = vadd.f32 0.0, %v4441
      %v4443 = vpop.f32.mrb[0].mxu0
      %4444 = vmatprep.mubr.bf16.mxu0 0
      %4445 = vmatmul.mubr.bf16.gmra.mrb[0].mxu0 %v4386
      %v4446 = vpop.f32.mrb[0].mxu0
      %v4447 = vadd.f32 0.0, %v4446
      %v4448 = vpop.f32.mrb[0].mxu0
      %v4449 = vpop.f32.mrb[0].mxu0
      %v4450 = vadd.f32 0.0, %v4449
      %v4451 = vpop.f32.mrb[0].mxu0
      %4452 = vdwg.mxu0
      %v4453 = vpack.c.bf16 %v4426, %v4423
      %v4454 = vpack.c.bf16 %v4434, %v4431
      %v4455 = vpack.c.bf16 %v4442, %v4439
      %v4456 = vpack.c.bf16 %v4450, %v4447
      %4461 = vrot.lane.b32.xlu0 %v4356, 64
      %v4462 = vpop.permute.xlu0 %4461
      %4463 = vrot.lane.b32.xlu0 %v4357, 64
      %v4464 = vpop.permute.xlu0 %4463
      %4465 = vrot.lane.b32.xlu0 %v4358, 64
      %v4466 = vpop.permute.xlu0 %4465
      %4467 = vrot.lane.b32.xlu0 %v4359, 64
      %v4468 = vpop.permute.xlu0 %4467
      %v4470 = vsel %vm1107, %v4070, %v4462
      %v4472 = vsel %vm1107, %v4071, %v4464
      %v4474 = vsel %vm1107, %v4072, %v4466
      %v4476 = vsel %vm1107, %v4073, %v4468
      %v4481 = vunpack.c.l.b16 %v4470
      %v4482 = vunpack.c.h.b16 %v4470
      %v4483 = vunpack.c.l.b16 %v4472
      %v4484 = vunpack.c.h.b16 %v4472
      %v4485 = vunpack.c.l.b16 %v4474
      %v4486 = vunpack.c.h.b16 %v4474
      %v4487 = vunpack.c.l.b16 %v4476
      %v4488 = vunpack.c.h.b16 %v4476
      %v4489 = vpack.c.b16 %v4481, %v4481
      %v4490 = vpack.c.b16 %v4482, %v4482
      %v4491 = vpack.c.b16 %v4483, %v4483
      %v4492 = vpack.c.b16 %v4484, %v4484
      %v4493 = vpack.c.b16 %v4485, %v4485
      %v4494 = vpack.c.b16 %v4486, %v4486
      %v4495 = vpack.c.b16 %v4487, %v4487
      %v4496 = vpack.c.b16 %v4488, %v4488
      %s4505 = scalar_lea.vmem %s907, 96
      %4506 = vst [vmem:[%s4505] sm:$0xf] %v4489
      %4507 = vst [vmem:[%s4505 + $0x4] sm:$0xf] %v4490
      %4508 = vst [vmem:[%s4505 + $0x8] sm:$0xf] %v4491
      %4509 = vst [vmem:[%s4505 + $0xc] sm:$0xf] %v4492
      %4510 = vst [vmem:[%s4505 + $0x10] sm:$0xf] %v4493
      %4511 = vst [vmem:[%s4505 + $0x14] sm:$0xf] %v4494
      %4512 = vst [vmem:[%s4505 + $0x18] sm:$0xf] %v4495
      %4513 = vst [vmem:[%s4505 + $0x1c] sm:$0xf] %v4496
      %4518 = vrot.lane.b32.xlu0 %v2591, 64
      %v4519 = vpop.permute.xlu0 %4518
      %4520 = vrot.lane.b32.xlu0 %v2592, 64
      %v4521 = vpop.permute.xlu0 %4520
      %4522 = vrot.lane.b32.xlu0 %v2593, 64
      %v4523 = vpop.permute.xlu0 %4522
      %4524 = vrot.lane.b32.xlu0 %v2594, 64
      %v4525 = vpop.permute.xlu0 %4524
      %4530 = vrot.lane.b32.xlu0 %v3211, 64
      %v4531 = vpop.permute.xlu0 %4530
      %4532 = vrot.lane.b32.xlu0 %v3212, 64
      %v4533 = vpop.permute.xlu0 %4532
      %4534 = vrot.lane.b32.xlu0 %v3213, 64
      %v4535 = vpop.permute.xlu0 %4534
      %4536 = vrot.lane.b32.xlu0 %v3214, 64
      %v4537 = vpop.permute.xlu0 %4536
      %4542 = vrot.lane.b32.xlu0 %v3832, 64
      %v4543 = vpop.permute.xlu0 %4542
      %4544 = vrot.lane.b32.xlu0 %v3833, 64
      %v4545 = vpop.permute.xlu0 %4544
      %4546 = vrot.lane.b32.xlu0 %v3834, 64
      %v4547 = vpop.permute.xlu0 %4546
      %4548 = vrot.lane.b32.xlu0 %v3835, 64
      %v4549 = vpop.permute.xlu0 %4548
      %4554 = vrot.lane.b32.xlu0 %v4453, 64
      %v4555 = vpop.permute.xlu0 %4554
      %4556 = vrot.lane.b32.xlu0 %v4454, 64
      %v4557 = vpop.permute.xlu0 %4556
      %4558 = vrot.lane.b32.xlu0 %v4455, 64
      %v4559 = vpop.permute.xlu0 %4558
      %4560 = vrot.lane.b32.xlu0 %v4456, 64
      %v4561 = vpop.permute.xlu0 %4560
      %v4564 = vsel %vm1107, %v2289, %v4519
      %v4568 = vsel %vm1107, %v2290, %v4521
      %v4572 = vsel %vm1107, %v2291, %v4523
      %v4576 = vsel %vm1107, %v2292, %v4525
      %v4580 = vsel %vm1107, %v2909, %v4531
      %v4584 = vsel %vm1107, %v2910, %v4533
      %v4588 = vsel %vm1107, %v2911, %v4535
      %v4592 = vsel %vm1107, %v2912, %v4537
      %v4596 = vsel %vm1107, %v3530, %v4543
      %v4600 = vsel %vm1107, %v3531, %v4545
      %v4604 = vsel %vm1107, %v3532, %v4547
      %v4608 = vsel %vm1107, %v3533, %v4549
      %v4612 = vsel %vm1107, %v4151, %v4555
      %v4616 = vsel %vm1107, %v4152, %v4557
      %v4620 = vsel %vm1107, %v4153, %v4559
      %v4624 = vsel %vm1107, %v4154, %v4561
      %v4626 = vld [vmem:[%s870] sm:$0xf]
      %v4627 = vld [vmem:[%s870 + $0x4] sm:$0xf]
      %v4628 = vld [vmem:[%s870 + $0x8] sm:$0xf]
      %v4629 = vld [vmem:[%s870 + $0xc] sm:$0xf]
      %v4630 = vld [vmem:[%s870 + $0x10] sm:$0xf]
      %v4631 = vld [vmem:[%s870 + $0x14] sm:$0xf]
      %v4632 = vld [vmem:[%s870 + $0x18] sm:$0xf]
      %v4633 = vld [vmem:[%s870 + $0x1c] sm:$0xf]
      %v4634 = vld [vmem:[%s870 + $0x20] sm:$0xf]
      %v4635 = vld [vmem:[%s870 + $0x24] sm:$0xf]
      %v4636 = vld [vmem:[%s870 + $0x28] sm:$0xf]
      %v4637 = vld [vmem:[%s870 + $0x2c] sm:$0xf]
      %v4638 = vld [vmem:[%s870 + $0x30] sm:$0xf]
      %v4639 = vld [vmem:[%s870 + $0x34] sm:$0xf]
      %v4640 = vld [vmem:[%s870 + $0x38] sm:$0xf]
      %v4641 = vld [vmem:[%s870 + $0x3c] sm:$0xf]
      %v4642 = vld [vmem:[%s870 + $0x40] sm:$0xf]
      %v4643 = vld [vmem:[%s870 + $0x44] sm:$0xf]
      %v4644 = vld [vmem:[%s870 + $0x48] sm:$0xf]
      %v4645 = vld [vmem:[%s870 + $0x4c] sm:$0xf]
      %v4646 = vld [vmem:[%s870 + $0x50] sm:$0xf]
      %v4647 = vld [vmem:[%s870 + $0x54] sm:$0xf]
      %v4648 = vld [vmem:[%s870 + $0x58] sm:$0xf]
      %v4649 = vld [vmem:[%s870 + $0x5c] sm:$0xf]
      %v4650 = vld [vmem:[%s870 + $0x60] sm:$0xf]
      %v4651 = vld [vmem:[%s870 + $0x64] sm:$0xf]
      %v4652 = vld [vmem:[%s870 + $0x68] sm:$0xf]
      %v4653 = vld [vmem:[%s870 + $0x6c] sm:$0xf]
      %v4654 = vld [vmem:[%s870 + $0x70] sm:$0xf]
      %v4655 = vld [vmem:[%s870 + $0x74] sm:$0xf]
      %v4656 = vld [vmem:[%s870 + $0x78] sm:$0xf]
      %v4657 = vld [vmem:[%s870 + $0x7c] sm:$0xf]
      %v4658 = vld [vmem:[%s870 + $0x80] sm:$0xf]
      %v4659 = vld [vmem:[%s870 + $0x84] sm:$0xf]
      %v4660 = vld [vmem:[%s870 + $0x88] sm:$0xf]
      %v4661 = vld [vmem:[%s870 + $0x8c] sm:$0xf]
      %v4662 = vld [vmem:[%s870 + $0x90] sm:$0xf]
      %v4663 = vld [vmem:[%s870 + $0x94] sm:$0xf]
      %v4664 = vld [vmem:[%s870 + $0x98] sm:$0xf]
      %v4665 = vld [vmem:[%s870 + $0x9c] sm:$0xf]
      %v4666 = vld [vmem:[%s870 + $0xa0] sm:$0xf]
      %v4667 = vld [vmem:[%s870 + $0xa4] sm:$0xf]
      %v4668 = vld [vmem:[%s870 + $0xa8] sm:$0xf]
      %v4669 = vld [vmem:[%s870 + $0xac] sm:$0xf]
      %v4670 = vld [vmem:[%s870 + $0xb0] sm:$0xf]
      %v4671 = vld [vmem:[%s870 + $0xb4] sm:$0xf]
      %v4672 = vld [vmem:[%s870 + $0xb8] sm:$0xf]
      %v4673 = vld [vmem:[%s870 + $0xbc] sm:$0xf]
      %v4674 = vld [vmem:[%s870 + $0xc0] sm:$0xf]
      %v4675 = vld [vmem:[%s870 + $0xc4] sm:$0xf]
      %v4676 = vld [vmem:[%s870 + $0xc8] sm:$0xf]
      %v4677 = vld [vmem:[%s870 + $0xcc] sm:$0xf]
      %v4678 = vld [vmem:[%s870 + $0xd0] sm:$0xf]
      %v4679 = vld [vmem:[%s870 + $0xd4] sm:$0xf]
      %v4680 = vld [vmem:[%s870 + $0xd8] sm:$0xf]
      %v4681 = vld [vmem:[%s870 + $0xdc] sm:$0xf]
      %v4682 = vld [vmem:[%s870 + $0xe0] sm:$0xf]
      %v4683 = vld [vmem:[%s870 + $0xe4] sm:$0xf]
      %v4684 = vld [vmem:[%s870 + $0xe8] sm:$0xf]
      %v4685 = vld [vmem:[%s870 + $0xec] sm:$0xf]
      %v4686 = vld [vmem:[%s870 + $0xf0] sm:$0xf]
      %v4687 = vld [vmem:[%s870 + $0xf4] sm:$0xf]
      %v4688 = vld [vmem:[%s870 + $0xf8] sm:$0xf]
      %v4689 = vld [vmem:[%s870 + $0xfc] sm:$0xf]
      %v4754 = vunpack.c.l.b16 %v4626
      %v4755 = vunpack.c.l.b16 %v4627
      %v4756 = vunpack.c.l.b16 %v4628
      %v4757 = vunpack.c.l.b16 %v4629
      %v4758 = vunpack.c.l.b16 %v4630
      %v4759 = vunpack.c.l.b16 %v4631
      %v4760 = vunpack.c.l.b16 %v4632
      %v4761 = vunpack.c.l.b16 %v4633
      %v4762 = vunpack.c.l.b16 %v4634
      %v4763 = vunpack.c.l.b16 %v4635
      %v4764 = vunpack.c.l.b16 %v4636
      %v4765 = vunpack.c.l.b16 %v4637
      %v4766 = vunpack.c.l.b16 %v4638
      %v4767 = vunpack.c.l.b16 %v4639
      %v4768 = vunpack.c.l.b16 %v4640
      %v4769 = vunpack.c.l.b16 %v4641
      %v4770 = vunpack.c.l.b16 %v4642
      %v4771 = vunpack.c.l.b16 %v4643
      %v4772 = vunpack.c.l.b16 %v4644
      %v4773 = vunpack.c.l.b16 %v4645
      %v4774 = vunpack.c.l.b16 %v4646
      %v4775 = vunpack.c.l.b16 %v4647
      %v4776 = vunpack.c.l.b16 %v4648
      %v4777 = vunpack.c.l.b16 %v4649
      %v4778 = vunpack.c.l.b16 %v4650
      %v4779 = vunpack.c.l.b16 %v4651
      %v4780 = vunpack.c.l.b16 %v4652
      %v4781 = vunpack.c.l.b16 %v4653
      %v4782 = vunpack.c.l.b16 %v4654
      %v4783 = vunpack.c.l.b16 %v4655
      %v4784 = vunpack.c.l.b16 %v4656
      %v4785 = vunpack.c.l.b16 %v4657
      %v4786 = vunpack.c.l.b16 %v4658
      %v4787 = vunpack.c.l.b16 %v4659
      %v4788 = vunpack.c.l.b16 %v4660
      %v4789 = vunpack.c.l.b16 %v4661
      %v4790 = vunpack.c.l.b16 %v4662
      %v4791 = vunpack.c.l.b16 %v4663
      %v4792 = vunpack.c.l.b16 %v4664
      %v4793 = vunpack.c.l.b16 %v4665
      %v4794 = vunpack.c.l.b16 %v4666
      %v4795 = vunpack.c.l.b16 %v4667
      %v4796 = vunpack.c.l.b16 %v4668
      %v4797 = vunpack.c.l.b16 %v4669
      %v4798 = vunpack.c.l.b16 %v4670
      %v4799 = vunpack.c.l.b16 %v4671
      %v4800 = vunpack.c.l.b16 %v4672
      %v4801 = vunpack.c.l.b16 %v4673
      %v4802 = vunpack.c.l.b16 %v4674
      %v4803 = vunpack.c.l.b16 %v4675
      %v4804 = vunpack.c.l.b16 %v4676
      %v4805 = vunpack.c.l.b16 %v4677
      %v4806 = vunpack.c.l.b16 %v4678
      %v4807 = vunpack.c.l.b16 %v4679
      %v4808 = vunpack.c.l.b16 %v4680
      %v4809 = vunpack.c.l.b16 %v4681
      %v4810 = vunpack.c.l.b16 %v4682
      %v4811 = vunpack.c.l.b16 %v4683
      %v4812 = vunpack.c.l.b16 %v4684
      %v4813 = vunpack.c.l.b16 %v4685
      %v4814 = vunpack.c.l.b16 %v4686
      %v4815 = vunpack.c.l.b16 %v4687
      %v4816 = vunpack.c.l.b16 %v4688
      %v4817 = vunpack.c.l.b16 %v4689
      %v4818 = vpack.c.b16 %v4755, %v4754
      %v4819 = vpack.c.b16 %v4757, %v4756
      %v4820 = vpack.c.b16 %v4759, %v4758
      %v4821 = vpack.c.b16 %v4761, %v4760
      %v4822 = vpack.c.b16 %v4763, %v4762
      %v4823 = vpack.c.b16 %v4765, %v4764
      %v4824 = vpack.c.b16 %v4767, %v4766
      %v4825 = vpack.c.b16 %v4769, %v4768
      %v4826 = vpack.c.b16 %v4771, %v4770
      %v4827 = vpack.c.b16 %v4773, %v4772
      %v4828 = vpack.c.b16 %v4775, %v4774
      %v4829 = vpack.c.b16 %v4777, %v4776
      %v4830 = vpack.c.b16 %v4779, %v4778
      %v4831 = vpack.c.b16 %v4781, %v4780
      %v4832 = vpack.c.b16 %v4783, %v4782
      %v4833 = vpack.c.b16 %v4785, %v4784
      %v4834 = vpack.c.b16 %v4787, %v4786
      %v4835 = vpack.c.b16 %v4789, %v4788
      %v4836 = vpack.c.b16 %v4791, %v4790
      %v4837 = vpack.c.b16 %v4793, %v4792
      %v4838 = vpack.c.b16 %v4795, %v4794
      %v4839 = vpack.c.b16 %v4797, %v4796
      %v4840 = vpack.c.b16 %v4799, %v4798
      %v4841 = vpack.c.b16 %v4801, %v4800
      %v4842 = vpack.c.b16 %v4803, %v4802
      %v4843 = vpack.c.b16 %v4805, %v4804
      %v4844 = vpack.c.b16 %v4807, %v4806
      %v4845 = vpack.c.b16 %v4809, %v4808
      %v4846 = vpack.c.b16 %v4811, %v4810
      %v4847 = vpack.c.b16 %v4813, %v4812
      %v4848 = vpack.c.b16 %v4815, %v4814
      %v4849 = vpack.c.b16 %v4817, %v4816
      %4882 = vmatprep.subr.bf16.mxu0 0
      %4883 = vmatpush1.bf16.msra.mxu0 %v4818
      %4884 = vmatprep.subr.bf16.mxu0 0
      %4885 = vmatpush1.bf16.msra.mxu0 %v4819
      %4886 = vmatprep.subr.bf16.mxu0 0
      %4887 = vmatpush1.bf16.msra.mxu0 %v4820
      %4888 = vmatprep.subr.bf16.mxu0 0
      %4889 = vmatpush1.bf16.msra.mxu0 %v4821
      %4890 = vmatprep.subr.bf16.mxu0 0
      %4891 = vmatpush1.bf16.msra.mxu0 %v4822
      %4892 = vmatprep.subr.bf16.mxu0 0
      %4893 = vmatpush1.bf16.msra.mxu0 %v4823
      %4894 = vmatprep.subr.bf16.mxu0 0
      %4895 = vmatpush1.bf16.msra.mxu0 %v4824
      %4896 = vmatprep.subr.bf16.mxu0 0
      %4897 = vmatpush1.bf16.msra.mxu0 %v4825
      %4898 = vmatprep.subr.bf16.mxu0 0
      %4899 = vmatpush1.bf16.msra.mxu0 %v4826
      %4900 = vmatprep.subr.bf16.mxu0 0
      %4901 = vmatpush1.bf16.msra.mxu0 %v4827
      %4902 = vmatprep.subr.bf16.mxu0 0
      %4903 = vmatpush1.bf16.msra.mxu0 %v4828
      %4904 = vmatprep.subr.bf16.mxu0 0
      %4905 = vmatpush1.bf16.msra.mxu0 %v4829
      %4906 = vmatprep.subr.bf16.mxu0 0
      %4907 = vmatpush1.bf16.msra.mxu0 %v4830
      %4908 = vmatprep.subr.bf16.mxu0 0
      %4909 = vmatpush1.bf16.msra.mxu0 %v4831
      %4910 = vmatprep.subr.bf16.mxu0 0
      %4911 = vmatpush1.bf16.msra.mxu0 %v4832
      %4912 = vmatprep.subr.bf16.mxu0 0
      %4913 = vmatpush1.bf16.msra.mxu0 %v4833
      %4914 = vmatprep.mubr.bf16.mxu0 %v4580
      %4915 = vmatmul.mubr.bf16.gmra.mrb[0].mxu0 %v4564
      %v4916 = vpop.f32.mrb[0].mxu0
      %v4917 = vadd.f32 0.0, %v4916
      %v4918 = vpop.f32.mrb[0].mxu0
      %v4919 = vpop.f32.mrb[0].mxu0
      %v4920 = vadd.f32 0.0, %v4919
      %v4921 = vpop.f32.mrb[0].mxu0
      %4922 = vmatprep.mubr.bf16.mxu0 %v4584
      %4923 = vmatmul.mubr.bf16.gmra.mrb[0].mxu0 %v4568
      %v4924 = vpop.f32.mrb[0].mxu0
      %v4925 = vadd.f32 0.0, %v4924
      %v4926 = vpop.f32.mrb[0].mxu0
      %v4927 = vpop.f32.mrb[0].mxu0
      %v4928 = vadd.f32 0.0, %v4927
      %v4929 = vpop.f32.mrb[0].mxu0
      %4930 = vmatprep.mubr.bf16.mxu0 %v4588
      %4931 = vmatmul.mubr.bf16.gmra.mrb[0].mxu0 %v4572
      %v4932 = vpop.f32.mrb[0].mxu0
      %v4933 = vadd.f32 0.0, %v4932
      %v4934 = vpop.f32.mrb[0].mxu0
      %v4935 = vpop.f32.mrb[0].mxu0
      %v4936 = vadd.f32 0.0, %v4935
      %v4937 = vpop.f32.mrb[0].mxu0
      %4938 = vmatprep.mubr.bf16.mxu0 %v4592
      %4939 = vmatmul.mubr.bf16.gmra.mrb[0].mxu0 %v4576
      %v4940 = vpop.f32.mrb[0].mxu0
      %v4941 = vadd.f32 0.0, %v4940
      %v4942 = vpop.f32.mrb[0].mxu0
      %v4943 = vpop.f32.mrb[0].mxu0
      %v4944 = vadd.f32 0.0, %v4943
      %v4945 = vpop.f32.mrb[0].mxu0
      %4946 = vdwg.mxu0
      %4947 = vmatprep.subr.bf16.mxu0 0
      %4948 = vmatpush1.bf16.msra.mxu0 %v4834
      %4949 = vmatprep.subr.bf16.mxu0 0
      %4950 = vmatpush1.bf16.msra.mxu0 %v4835
      %4951 = vmatprep.subr.bf16.mxu0 0
      %4952 = vmatpush1.bf16.msra.mxu0 %v4836
      %4953 = vmatprep.subr.bf16.mxu0 0
      %4954 = vmatpush1.bf16.msra.mxu0 %v4837
      %4955 = vmatprep.subr.bf16.mxu0 0
      %4956 = vmatpush1.bf16.msra.mxu0 %v4838
      %4957 = vmatprep.subr.bf16.mxu0 0
      %4958 = vmatpush1.bf16.msra.mxu0 %v4839
      %4959 = vmatprep.subr.bf16.mxu0 0
      %4960 = vmatpush1.bf16.msra.mxu0 %v4840
      %4961 = vmatprep.subr.bf16.mxu0 0
      %4962 = vmatpush1.bf16.msra.mxu0 %v4841
      %4963 = vmatprep.subr.bf16.mxu0 0
      %4964 = vmatpush1.bf16.msra.mxu0 %v4842
      %4965 = vmatprep.subr.bf16.mxu0 0
      %4966 = vmatpush1.bf16.msra.mxu0 %v4843
      %4967 = vmatprep.subr.bf16.mxu0 0
      %4968 = vmatpush1.bf16.msra.mxu0 %v4844
      %4969 = vmatprep.subr.bf16.mxu0 0
      %4970 = vmatpush1.bf16.msra.mxu0 %v4845
      %4971 = vmatprep.subr.bf16.mxu0 0
      %4972 = vmatpush1.bf16.msra.mxu0 %v4846
      %4973 = vmatprep.subr.bf16.mxu0 0
      %4974 = vmatpush1.bf16.msra.mxu0 %v4847
      %4975 = vmatprep.subr.bf16.mxu0 0
      %4976 = vmatpush1.bf16.msra.mxu0 %v4848
      %4977 = vmatprep.subr.bf16.mxu0 0
      %4978 = vmatpush1.bf16.msra.mxu0 %v4849
      %4979 = vmatprep.mubr.bf16.mxu0 %v4612
      %4980 = vmatmul.mubr.bf16.gmra.mrb[0].mxu0 %v4596
      %v4981 = vpop.f32.mrb[0].mxu0
      %v4982 = vadd.f32 %v4917, %v4981
      %v4983 = vpop.f32.mrb[0].mxu0
      %v4984 = vpop.f32.mrb[0].mxu0
      %v4985 = vadd.f32 %v4920, %v4984
      %v4986 = vpop.f32.mrb[0].mxu0
      %4987 = vmatprep.mubr.bf16.mxu0 %v4616
      %4988 = vmatmul.mubr.bf16.gmra.mrb[0].mxu0 %v4600
      %v4989 = vpop.f32.mrb[0].mxu0
      %v4990 = vadd.f32 %v4925, %v4989
      %v4991 = vpop.f32.mrb[0].mxu0
      %v4992 = vpop.f32.mrb[0].mxu0
      %v4993 = vadd.f32 %v4928, %v4992
      %v4994 = vpop.f32.mrb[0].mxu0
      %4995 = vmatprep.mubr.bf16.mxu0 %v4620
      %4996 = vmatmul.mubr.bf16.gmra.mrb[0].mxu0 %v4604
      %v4997 = vpop.f32.mrb[0].mxu0
      %v4998 = vadd.f32 %v4933, %v4997
      %v4999 = vpop.f32.mrb[0].mxu0
      %v5000 = vpop.f32.mrb[0].mxu0
      %v5001 = vadd.f32 %v4936, %v5000
      %v5002 = vpop.f32.mrb[0].mxu0
      %5003 = vmatprep.mubr.bf16.mxu0 %v4624
      %5004 = vmatmul.mubr.bf16.gmra.mrb[0].mxu0 %v4608
      %v5005 = vpop.f32.mrb[0].mxu0
      %v5006 = vadd.f32 %v4941, %v5005
      %v5007 = vpop.f32.mrb[0].mxu0
      %v5008 = vpop.f32.mrb[0].mxu0
      %v5009 = vadd.f32 %v4944, %v5008
      %v5010 = vpop.f32.mrb[0].mxu0
      %5011 = vdwg.mxu0
      %v5012 = vadd.f32 %v1097, %v4982
      %v5013 = vadd.f32 %v1098, %v4985
      %v5014 = vadd.f32 %v1099, %v4990
      %v5015 = vadd.f32 %v1100, %v4993
      %v5016 = vadd.f32 %v1101, %v4998
      %v5017 = vadd.f32 %v1102, %v5001
      %v5018 = vadd.f32 %v1103, %v5006
      %v5019 = vadd.f32 %v1104, %v5009
      %v5020 = vld [vmem:[%s873] sm:$0x1]
      %v5022 = vlaneseq
      %v5023 = vshrl.u32 %v5022, 7
      %v5024 = vsub.s32 0, %v5023
      %v5025 = vrot.slane %v5020, %v5024
      %v5027 = vadd.f32 %v5012, %v5025
      %v5028 = vadd.f32 %v5013, %v5025
      %v5029 = vadd.f32 %v5014, %v5025
      %v5030 = vadd.f32 %v5015, %v5025
      %v5031 = vadd.f32 %v5016, %v5025
      %v5032 = vadd.f32 %v5017, %v5025
      %v5033 = vadd.f32 %v5018, %v5025
      %v5034 = vadd.f32 %v5019, %v5025
      %v5035 = vld [vmem:[%s876] sm:$0x1]
      %v5036 = vld [vmem:[%s879] sm:$0x1]
      %v5037 = vsel %vm1107, %v5027, 0.0
      %5038 = vadd.xlane.f32.xlu0 %v5037
      %v5039 = vpop.xlane.xlu0 %5038
      %v5040 = vsel %vm1107, %v5028, 0.0
      %5041 = vadd.xlane.f32.xlu0 %v5040
      %v5042 = vpop.xlane.xlu0 %5041
      %v5043 = vsel %vm1107, %v5029, 0.0
      %5044 = vadd.xlane.f32.xlu0 %v5043
      %v5045 = vpop.xlane.xlu0 %5044
      %v5046 = vsel %vm1107, %v5030, 0.0
      %5047 = vadd.xlane.f32.xlu0 %v5046
      %v5048 = vpop.xlane.xlu0 %5047
      %v5049 = vsel %vm1107, %v5031, 0.0
      %5050 = vadd.xlane.f32.xlu0 %v5049
      %v5051 = vpop.xlane.xlu0 %5050
      %v5052 = vsel %vm1107, %v5032, 0.0
      %5053 = vadd.xlane.f32.xlu0 %v5052
      %v5054 = vpop.xlane.xlu0 %5053
      %v5055 = vsel %vm1107, %v5033, 0.0
      %5056 = vadd.xlane.f32.xlu0 %v5055
      %v5057 = vpop.xlane.xlu0 %5056
      %v5058 = vsel %vm1107, %v5034, 0.0
      %5059 = vadd.xlane.f32.xlu0 %v5058
      %v5060 = vpop.xlane.xlu0 %5059
      %v5061 = vmul.f32 %v5039, %v1132
      %v5062 = vmul.f32 %v5042, %v1132
      %v5063 = vmul.f32 %v5045, %v1132
      %v5064 = vmul.f32 %v5048, %v1132
      %v5065 = vmul.f32 %v5051, %v1132
      %v5066 = vmul.f32 %v5054, %v1132
      %v5067 = vmul.f32 %v5057, %v1132
      %v5068 = vmul.f32 %v5060, %v1132
      %v5069 = vsub.f32 %v5027, %v5061
      %v5070 = vsub.f32 %v5028, %v5062
      %v5071 = vsub.f32 %v5029, %v5063
      %v5072 = vsub.f32 %v5030, %v5064
      %v5073 = vsub.f32 %v5031, %v5065
      %v5074 = vsub.f32 %v5032, %v5066
      %v5075 = vsub.f32 %v5033, %v5067
      %v5076 = vsub.f32 %v5034, %v5068
      %v5077 = vmul.f32 %v5069, %v5069
      %v5078 = vmul.f32 %v5070, %v5070
      %v5079 = vmul.f32 %v5071, %v5071
      %v5080 = vmul.f32 %v5072, %v5072
      %v5081 = vmul.f32 %v5073, %v5073
      %v5082 = vmul.f32 %v5074, %v5074
      %v5083 = vmul.f32 %v5075, %v5075
      %v5084 = vmul.f32 %v5076, %v5076
      %v5085 = vsel %vm1107, %v5077, 0.0
      %5086 = vadd.xlane.f32.xlu0 %v5085
      %v5087 = vpop.xlane.xlu0 %5086
      %v5088 = vsel %vm1107, %v5078, 0.0
      %5089 = vadd.xlane.f32.xlu0 %v5088
      %v5090 = vpop.xlane.xlu0 %5089
      %v5091 = vsel %vm1107, %v5079, 0.0
      %5092 = vadd.xlane.f32.xlu0 %v5091
      %v5093 = vpop.xlane.xlu0 %5092
      %v5094 = vsel %vm1107, %v5080, 0.0
      %5095 = vadd.xlane.f32.xlu0 %v5094
      %v5096 = vpop.xlane.xlu0 %5095
      %v5097 = vsel %vm1107, %v5081, 0.0
      %5098 = vadd.xlane.f32.xlu0 %v5097
      %v5099 = vpop.xlane.xlu0 %5098
      %v5100 = vsel %vm1107, %v5082, 0.0
      %5101 = vadd.xlane.f32.xlu0 %v5100
      %v5102 = vpop.xlane.xlu0 %5101
      %v5103 = vsel %vm1107, %v5083, 0.0
      %5104 = vadd.xlane.f32.xlu0 %v5103
      %v5105 = vpop.xlane.xlu0 %5104
      %v5106 = vsel %vm1107, %v5084, 0.0
      %5107 = vadd.xlane.f32.xlu0 %v5106
      %v5108 = vpop.xlane.xlu0 %5107
      %v5109 = vmul.f32 %v5087, %v1132
      %v5110 = vmul.f32 %v5090, %v1132
      %v5111 = vmul.f32 %v5093, %v1132
      %v5112 = vmul.f32 %v5096, %v1132
      %v5113 = vmul.f32 %v5099, %v1132
      %v5114 = vmul.f32 %v5102, %v1132
      %v5115 = vmul.f32 %v5105, %v1132
      %v5116 = vmul.f32 %v5108, %v1132
      %v5117 = vadd.f32 %v5109, 1e-05
      %v5118 = vadd.f32 %v5110, 1e-05
      %v5119 = vadd.f32 %v5111, 1e-05
      %v5120 = vadd.f32 %v5112, 1e-05
      %v5121 = vadd.f32 %v5113, 1e-05
      %v5122 = vadd.f32 %v5114, 1e-05
      %v5123 = vadd.f32 %v5115, 1e-05
      %v5124 = vadd.f32 %v5116, 1e-05
      %v5125 = vrsqrt.pop %v5117
      %v5126 = vrsqrt.pop %v5118
      %v5127 = vrsqrt.pop %v5119
      %v5128 = vrsqrt.pop %v5120
      %v5129 = vrsqrt.pop %v5121
      %v5130 = vrsqrt.pop %v5122
      %v5131 = vrsqrt.pop %v5123
      %v5132 = vrsqrt.pop %v5124
      %v5133 = vmul.f32 %v5069, %v5125
      %v5134 = vmul.f32 %v5070, %v5126
      %v5135 = vmul.f32 %v5071, %v5127
      %v5136 = vmul.f32 %v5072, %v5128
      %v5137 = vmul.f32 %v5073, %v5129
      %v5138 = vmul.f32 %v5074, %v5130
      %v5139 = vmul.f32 %v5075, %v5131
      %v5140 = vmul.f32 %v5076, %v5132
      %v5142 = vlaneseq
      %v5143 = vshrl.u32 %v5142, 7
      %v5144 = vsub.s32 0, %v5143
      %v5145 = vrot.slane %v5035, %v5144
      %v5147 = vmul.f32 %v5133, %v5145
      %v5148 = vmul.f32 %v5134, %v5145
      %v5149 = vmul.f32 %v5135, %v5145
      %v5150 = vmul.f32 %v5136, %v5145
      %v5151 = vmul.f32 %v5137, %v5145
      %v5152 = vmul.f32 %v5138, %v5145
      %v5153 = vmul.f32 %v5139, %v5145
      %v5154 = vmul.f32 %v5140, %v5145
      %v5156 = vlaneseq
      %v5157 = vshrl.u32 %v5156, 7
      %v5158 = vsub.s32 0, %v5157
      %v5159 = vrot.slane %v5036, %v5158
      %v5161 = vadd.f32 %v5147, %v5159
      %v5162 = vadd.f32 %v5148, %v5159
      %v5163 = vadd.f32 %v5149, %v5159
      %v5164 = vadd.f32 %v5150, %v5159
      %v5165 = vadd.f32 %v5151, %v5159
      %v5166 = vadd.f32 %v5152, %v5159
      %v5167 = vadd.f32 %v5153, %v5159
      %v5168 = vadd.f32 %v5154, %v5159
      %v5169 = vpack.c.bf16 %v5162, %v5161
      %v5170 = vpack.c.bf16 %v5164, %v5163
      %v5171 = vpack.c.bf16 %v5166, %v5165
      %v5172 = vpack.c.bf16 %v5168, %v5167
      %v5173 = vld [vmem:[%s884] sm:$0xf]
      %v5174 = vld [vmem:[%s884 + $0x4] sm:$0xf]
      %v5175 = vld [vmem:[%s884 + $0x8] sm:$0xf]
      %v5176 = vld [vmem:[%s884 + $0xc] sm:$0xf]
      %v5177 = vld [vmem:[%s884 + $0x10] sm:$0xf]
      %v5178 = vld [vmem:[%s884 + $0x14] sm:$0xf]
      %v5179 = vld [vmem:[%s884 + $0x18] sm:$0xf]
      %v5180 = vld [vmem:[%s884 + $0x1c] sm:$0xf]
      %v5181 = vld [vmem:[%s887] sm:$0x1]
      %v5183 = vlaneseq
      %v5184 = vshrl.u32 %v5183, 7
      %v5185 = vsub.s32 0, %v5184
      %v5186 = vrot.slane %v5181, %v5185
      %v5196 = vunpack.c.l.b16 %v5173
      %v5197 = vunpack.c.l.b16 %v5174
      %v5198 = vunpack.c.l.b16 %v5175
      %v5199 = vunpack.c.l.b16 %v5176
      %v5200 = vunpack.c.l.b16 %v5177
      %v5201 = vunpack.c.l.b16 %v5178
      %v5202 = vunpack.c.l.b16 %v5179
      %v5203 = vunpack.c.l.b16 %v5180
      %v5204 = vpack.c.b16 %v5197, %v5196
      %v5205 = vpack.c.b16 %v5199, %v5198
      %v5206 = vpack.c.b16 %v5201, %v5200
      %v5207 = vpack.c.b16 %v5203, %v5202
      %v5213 = vsel %vm1107, %v5169, 0
      %v5216 = vsel %vm1107, %v5170, 0
      %v5219 = vsel %vm1107, %v5171, 0
      %v5222 = vsel %vm1107, %v5172, 0
      %5224 = vmatprep.subr.bf16.mxu0 0
      %5225 = vmatpush1.bf16.msra.mxu0 %v5204
      %5226 = vmatprep.subr.bf16.mxu0 0
      %5227 = vmatpush1.bf16.msra.mxu0 %v5205
      %5228 = vmatprep.subr.bf16.mxu0 0
      %5229 = vmatpush1.bf16.msra.mxu0 %v5206
      %5230 = vmatprep.subr.bf16.mxu0 0
      %5231 = vmatpush1.bf16.msra.mxu0 %v5207
      %5232 = vmatprep.subr.bf16.mxu0 0
      %5233 = vmatpush1.bf16.msra.mxu0 0
      %5234 = vmatprep.subr.bf16.mxu0 0
      %5235 = vmatpush1.bf16.msra.mxu0 0
      %5236 = vmatprep.subr.bf16.mxu0 0
      %5237 = vmatpush1.bf16.msra.mxu0 0
      %5238 = vmatprep.subr.bf16.mxu0 0
      %5239 = vmatpush1.bf16.msra.mxu0 0
      %5240 = vmatprep.subr.bf16.mxu0 0
      %5241 = vmatpush1.bf16.msra.mxu0 0
      %5242 = vmatprep.subr.bf16.mxu0 0
      %5243 = vmatpush1.bf16.msra.mxu0 0
      %5244 = vmatprep.subr.bf16.mxu0 0
      %5245 = vmatpush1.bf16.msra.mxu0 0
      %5246 = vmatprep.subr.bf16.mxu0 0
      %5247 = vmatpush1.bf16.msra.mxu0 0
      %5248 = vmatprep.subr.bf16.mxu0 0
      %5249 = vmatpush1.bf16.msra.mxu0 0
      %5250 = vmatprep.subr.bf16.mxu0 0
      %5251 = vmatpush1.bf16.msra.mxu0 0
      %5252 = vmatprep.subr.bf16.mxu0 0
      %5253 = vmatpush1.bf16.msra.mxu0 0
      %5254 = vmatprep.subr.bf16.mxu0 0
      %5255 = vmatpush1.bf16.msra.mxu0 0
      %5256 = vmatprep.mubr.bf16.mxu0 0
      %5257 = vmatmul.mubr.bf16.gmra.mrb[0].mxu0 %v5213
      %v5258 = vpop.f32.mrb[0].mxu0
      %v5259 = vadd.f32 %v5186, %v5258
      %v5260 = vpop.f32.mrb[0].mxu0
      %v5261 = vpop.f32.mrb[0].mxu0
      %v5262 = vadd.f32 %v5186, %v5261
      %v5263 = vpop.f32.mrb[0].mxu0
      %5264 = vmatprep.mubr.bf16.mxu0 0
      %5265 = vmatmul.mubr.bf16.gmra.mrb[0].mxu0 %v5216
      %v5266 = vpop.f32.mrb[0].mxu0
      %v5267 = vadd.f32 %v5186, %v5266
      %v5268 = vpop.f32.mrb[0].mxu0
      %v5269 = vpop.f32.mrb[0].mxu0
      %v5270 = vadd.f32 %v5186, %v5269
      %v5271 = vpop.f32.mrb[0].mxu0
      %5272 = vmatprep.mubr.bf16.mxu0 0
      %5273 = vmatmul.mubr.bf16.gmra.mrb[0].mxu0 %v5219
      %v5274 = vpop.f32.mrb[0].mxu0
      %v5275 = vadd.f32 %v5186, %v5274
      %v5276 = vpop.f32.mrb[0].mxu0
      %v5277 = vpop.f32.mrb[0].mxu0
      %v5278 = vadd.f32 %v5186, %v5277
      %v5279 = vpop.f32.mrb[0].mxu0
      %5280 = vmatprep.mubr.bf16.mxu0 0
      %5281 = vmatmul.mubr.bf16.gmra.mrb[0].mxu0 %v5222
      %v5282 = vpop.f32.mrb[0].mxu0
      %v5283 = vadd.f32 %v5186, %v5282
      %v5284 = vpop.f32.mrb[0].mxu0
      %v5285 = vpop.f32.mrb[0].mxu0
      %v5286 = vadd.f32 %v5186, %v5285
      %v5287 = vpop.f32.mrb[0].mxu0
      %5288 = vdwg.mxu0
      %v5289 = vmul.f32 %v5259, 0.5
      %v5290 = vmul.f32 %v5262, 0.5
      %v5291 = vmul.f32 %v5267, 0.5
      %v5292 = vmul.f32 %v5270, 0.5
      %v5293 = vmul.f32 %v5275, 0.5
      %v5294 = vmul.f32 %v5278, 0.5
      %v5295 = vmul.f32 %v5283, 0.5
      %v5296 = vmul.f32 %v5286, 0.5
      %v5297 = vmul.f32 %v5259, 0.044715
      %v5298 = vmul.f32 %v5262, 0.044715
      %v5299 = vmul.f32 %v5267, 0.044715
      %v5300 = vmul.f32 %v5270, 0.044715
      %v5301 = vmul.f32 %v5275, 0.044715
      %v5302 = vmul.f32 %v5278, 0.044715
      %v5303 = vmul.f32 %v5283, 0.044715
      %v5304 = vmul.f32 %v5286, 0.044715
      %v5305 = vmul.f32 %v5297, %v5259
      %v5306 = vmul.f32 %v5298, %v5262
      %v5307 = vmul.f32 %v5299, %v5267
      %v5308 = vmul.f32 %v5300, %v5270
      %v5309 = vmul.f32 %v5301, %v5275
      %v5310 = vmul.f32 %v5302, %v5278
      %v5311 = vmul.f32 %v5303, %v5283
      %v5312 = vmul.f32 %v5304, %v5286
      %v5313 = vmul.f32 %v5305, %v5259
      %v5314 = vmul.f32 %v5306, %v5262
      %v5315 = vmul.f32 %v5307, %v5267
      %v5316 = vmul.f32 %v5308, %v5270
      %v5317 = vmul.f32 %v5309, %v5275
      %v5318 = vmul.f32 %v5310, %v5278
      %v5319 = vmul.f32 %v5311, %v5283
      %v5320 = vmul.f32 %v5312, %v5286
      %v5321 = vadd.f32 %v5259, %v5313
      %v5322 = vadd.f32 %v5262, %v5314
      %v5323 = vadd.f32 %v5267, %v5315
      %v5324 = vadd.f32 %v5270, %v5316
      %v5325 = vadd.f32 %v5275, %v5317
      %v5326 = vadd.f32 %v5278, %v5318
      %v5327 = vadd.f32 %v5283, %v5319
      %v5328 = vadd.f32 %v5286, %v5320
      %v5329 = vmul.f32 %v5321, 0.7978846
      %v5330 = vmul.f32 %v5322, 0.7978846
      %v5331 = vmul.f32 %v5323, 0.7978846
      %v5332 = vmul.f32 %v5324, 0.7978846
      %v5333 = vmul.f32 %v5325, 0.7978846
      %v5334 = vmul.f32 %v5326, 0.7978846
      %v5335 = vmul.f32 %v5327, 0.7978846
      %v5336 = vmul.f32 %v5328, 0.7978846
      %v5337 = vtanh.pop %v5329
      %v5338 = vtanh.pop %v5330
      %v5339 = vtanh.pop %v5331
      %v5340 = vtanh.pop %v5332
      %v5341 = vtanh.pop %v5333
      %v5342 = vtanh.pop %v5334
      %v5343 = vtanh.pop %v5335
      %v5344 = vtanh.pop %v5336
      %v5345 = vadd.f32 %v5337, 1.0
      %v5346 = vadd.f32 %v5338, 1.0
      %v5347 = vadd.f32 %v5339, 1.0
      %v5348 = vadd.f32 %v5340, 1.0
      %v5349 = vadd.f32 %v5341, 1.0
      %v5350 = vadd.f32 %v5342, 1.0
      %v5351 = vadd.f32 %v5343, 1.0
      %v5352 = vadd.f32 %v5344, 1.0
      %v5353 = vmul.f32 %v5289, %v5345
      %v5354 = vmul.f32 %v5290, %v5346
      %v5355 = vmul.f32 %v5291, %v5347
      %v5356 = vmul.f32 %v5292, %v5348
      %v5357 = vmul.f32 %v5293, %v5349
      %v5358 = vmul.f32 %v5294, %v5350
      %v5359 = vmul.f32 %v5295, %v5351
      %v5360 = vmul.f32 %v5296, %v5352
      %v5361 = vpack.c.bf16 %v5354, %v5353
      %v5362 = vpack.c.bf16 %v5356, %v5355
      %v5363 = vpack.c.bf16 %v5358, %v5357
      %v5364 = vpack.c.bf16 %v5360, %v5359
      %v5365 = vld [vmem:[%s892] sm:$0xf]
      %v5366 = vld [vmem:[%s892 + $0x4] sm:$0xf]
      %v5367 = vld [vmem:[%s892 + $0x8] sm:$0xf]
      %v5368 = vld [vmem:[%s892 + $0xc] sm:$0xf]
      %v5369 = vld [vmem:[%s892 + $0x10] sm:$0xf]
      %v5370 = vld [vmem:[%s892 + $0x14] sm:$0xf]
      %v5371 = vld [vmem:[%s892 + $0x18] sm:$0xf]
      %v5372 = vld [vmem:[%s892 + $0x1c] sm:$0xf]
      %v5373 = vld [vmem:[%s892 + $0x20] sm:$0xf]
      %v5374 = vld [vmem:[%s892 + $0x24] sm:$0xf]
      %v5375 = vld [vmem:[%s892 + $0x28] sm:$0xf]
      %v5376 = vld [vmem:[%s892 + $0x2c] sm:$0xf]
      %v5377 = vld [vmem:[%s892 + $0x30] sm:$0xf]
      %v5378 = vld [vmem:[%s892 + $0x34] sm:$0xf]
      %v5379 = vld [vmem:[%s892 + $0x38] sm:$0xf]
      %v5380 = vld [vmem:[%s892 + $0x3c] sm:$0xf]
      %v5397 = vunpack.c.l.b16 %v5365
      %v5398 = vunpack.c.l.b16 %v5366
      %v5399 = vunpack.c.l.b16 %v5367
      %v5400 = vunpack.c.l.b16 %v5368
      %v5401 = vunpack.c.l.b16 %v5369
      %v5402 = vunpack.c.l.b16 %v5370
      %v5403 = vunpack.c.l.b16 %v5371
      %v5404 = vunpack.c.l.b16 %v5372
      %v5405 = vunpack.c.l.b16 %v5373
      %v5406 = vunpack.c.l.b16 %v5374
      %v5407 = vunpack.c.l.b16 %v5375
      %v5408 = vunpack.c.l.b16 %v5376
      %v5409 = vunpack.c.l.b16 %v5377
      %v5410 = vunpack.c.l.b16 %v5378
      %v5411 = vunpack.c.l.b16 %v5379
      %v5412 = vunpack.c.l.b16 %v5380
      %v5413 = vpack.c.b16 %v5398, %v5397
      %v5414 = vpack.c.b16 %v5400, %v5399
      %v5415 = vpack.c.b16 %v5402, %v5401
      %v5416 = vpack.c.b16 %v5404, %v5403
      %v5417 = vpack.c.b16 %v5406, %v5405
      %v5418 = vpack.c.b16 %v5408, %v5407
      %v5419 = vpack.c.b16 %v5410, %v5409
      %v5420 = vpack.c.b16 %v5412, %v5411
      %5429 = vmatprep.subr.bf16.mxu0 0
      %5430 = vmatpush1.bf16.msra.mxu0 %v5413
      %5431 = vmatprep.subr.bf16.mxu0 0
      %5432 = vmatpush1.bf16.msra.mxu0 %v5414
      %5433 = vmatprep.subr.bf16.mxu0 0
      %5434 = vmatpush1.bf16.msra.mxu0 %v5415
      %5435 = vmatprep.subr.bf16.mxu0 0
      %5436 = vmatpush1.bf16.msra.mxu0 %v5416
      %5437 = vmatprep.subr.bf16.mxu0 0
      %5438 = vmatpush1.bf16.msra.mxu0 %v5417
      %5439 = vmatprep.subr.bf16.mxu0 0
      %5440 = vmatpush1.bf16.msra.mxu0 %v5418
      %5441 = vmatprep.subr.bf16.mxu0 0
      %5442 = vmatpush1.bf16.msra.mxu0 %v5419
      %5443 = vmatprep.subr.bf16.mxu0 0
      %5444 = vmatpush1.bf16.msra.mxu0 %v5420
      %5445 = vmatprep.subr.bf16.mxu0 0
      %5446 = vmatpush1.bf16.msra.mxu0 0
      %5447 = vmatprep.subr.bf16.mxu0 0
      %5448 = vmatpush1.bf16.msra.mxu0 0
      %5449 = vmatprep.subr.bf16.mxu0 0
      %5450 = vmatpush1.bf16.msra.mxu0 0
      %5451 = vmatprep.subr.bf16.mxu0 0
      %5452 = vmatpush1.bf16.msra.mxu0 0
      %5453 = vmatprep.subr.bf16.mxu0 0
      %5454 = vmatpush1.bf16.msra.mxu0 0
      %5455 = vmatprep.subr.bf16.mxu0 0
      %5456 = vmatpush1.bf16.msra.mxu0 0
      %5457 = vmatprep.subr.bf16.mxu0 0
      %5458 = vmatpush1.bf16.msra.mxu0 0
      %5459 = vmatprep.subr.bf16.mxu0 0
      %5460 = vmatpush1.bf16.msra.mxu0 0
      %5461 = vmatprep.mubr.bf16.mxu0 0
      %5462 = vmatmul.mubr.bf16.gmra.mrb[0].mxu0 %v5361
      %v5463 = vpop.f32.mrb[0].mxu0
      %v5464 = vadd.f32 0.0, %v5463
      %v5465 = vpop.f32.mrb[0].mxu0
      %v5466 = vpop.f32.mrb[0].mxu0
      %v5467 = vadd.f32 0.0, %v5466
      %v5468 = vpop.f32.mrb[0].mxu0
      %5469 = vmatprep.mubr.bf16.mxu0 0
      %5470 = vmatmul.mubr.bf16.gmra.mrb[0].mxu0 %v5362
      %v5471 = vpop.f32.mrb[0].mxu0
      %v5472 = vadd.f32 0.0, %v5471
      %v5473 = vpop.f32.mrb[0].mxu0
      %v5474 = vpop.f32.mrb[0].mxu0
      %v5475 = vadd.f32 0.0, %v5474
      %v5476 = vpop.f32.mrb[0].mxu0
      %5477 = vmatprep.mubr.bf16.mxu0 0
      %5478 = vmatmul.mubr.bf16.gmra.mrb[0].mxu0 %v5363
      %v5479 = vpop.f32.mrb[0].mxu0
      %v5480 = vadd.f32 0.0, %v5479
      %v5481 = vpop.f32.mrb[0].mxu0
      %v5482 = vpop.f32.mrb[0].mxu0
      %v5483 = vadd.f32 0.0, %v5482
      %v5484 = vpop.f32.mrb[0].mxu0
      %5485 = vmatprep.mubr.bf16.mxu0 0
      %5486 = vmatmul.mubr.bf16.gmra.mrb[0].mxu0 %v5364
      %v5487 = vpop.f32.mrb[0].mxu0
      %v5488 = vadd.f32 0.0, %v5487
      %v5489 = vpop.f32.mrb[0].mxu0
      %v5490 = vpop.f32.mrb[0].mxu0
      %v5491 = vadd.f32 0.0, %v5490
      %v5492 = vpop.f32.mrb[0].mxu0
      %5493 = vdwg.mxu0
      %v5494 = vadd.f32 %v5027, %v5464
      %v5495 = vadd.f32 %v5028, %v5467
      %v5496 = vadd.f32 %v5029, %v5472
      %v5497 = vadd.f32 %v5030, %v5475
      %v5498 = vadd.f32 %v5031, %v5480
      %v5499 = vadd.f32 %v5032, %v5483
      %v5500 = vadd.f32 %v5033, %v5488
      %v5501 = vadd.f32 %v5034, %v5491
      %v5502 = vld [vmem:[%s895] sm:$0x1]
      %v5504 = vlaneseq
      %v5505 = vshrl.u32 %v5504, 7
      %v5506 = vsub.s32 0, %v5505
      %v5507 = vrot.slane %v5502, %v5506
      %v5509 = vadd.f32 %v5494, %v5507
      %v5510 = vadd.f32 %v5495, %v5507
      %v5511 = vadd.f32 %v5496, %v5507
      %v5512 = vadd.f32 %v5497, %v5507
      %v5513 = vadd.f32 %v5498, %v5507
      %v5514 = vadd.f32 %v5499, %v5507
      %v5515 = vadd.f32 %v5500, %v5507
      %v5516 = vadd.f32 %v5501, %v5507
      %5517 = vst.msk [vmem:[#allocation2] sm:$0xff] %vm1107, %v5509
      %5518 = vst.msk [vmem:[#allocation2 + $0x8] sm:$0xff] %vm1107, %v5510
      %5519 = vst.msk [vmem:[#allocation2 + $0x10] sm:$0xff] %vm1107, %v5511
      %5520 = vst.msk [vmem:[#allocation2 + $0x18] sm:$0xff] %vm1107, %v5512
      %5521 = vst.msk [vmem:[#allocation2 + $0x20] sm:$0xff] %vm1107, %v5513
      %5522 = vst.msk [vmem:[#allocation2 + $0x28] sm:$0xff] %vm1107, %v5514
      %5523 = vst.msk [vmem:[#allocation2 + $0x30] sm:$0xff] %vm1107, %v5515
      %5524 = vst.msk [vmem:[#allocation2 + $0x38] sm:$0xff] %vm1107, %v5516
      %p5525 = scmp.eq.s32.totalorder %s40, 5
      // Predicated region
      $region105: #{cbvit_forward.1} parent=99 // pred_check
        %p5526 = pneg %p5525
      $region106: #{cbvit_forward.1} parent=99 // pred_check_branch
        %5528 = sbr.rel (%p5526) target = $region108
      $region107: #{cbvit_forward.1} parent=99 // pred_region
        %v5529 = vmul.f32 %v5509, %v938
        %v5530 = vmul.f32 %v5510, %v939
        %v5531 = vmul.f32 %v5511, %v940
        %v5532 = vmul.f32 %v5512, %v941
        %v5533 = vmul.f32 %v5513, %v942
        %v5534 = vmul.f32 %v5514, %v943
        %v5535 = vmul.f32 %v5515, %v944
        %v5536 = vmul.f32 %v5516, %v945
        %v5537 = vsel %vm1107, %v5529, 0.0
        %v5538 = vsel %vm1107, %v5530, 0.0
        %v5539 = vadd.f32 %v5537, %v5538
        %v5540 = vsel %vm1107, %v5531, 0.0
        %v5541 = vadd.f32 %v5539, %v5540
        %v5542 = vsel %vm1107, %v5532, 0.0
        %v5543 = vadd.f32 %v5541, %v5542
        %v5544 = vsel %vm1107, %v5533, 0.0
        %v5545 = vadd.f32 %v5543, %v5544
        %v5546 = vsel %vm1107, %v5534, 0.0
        %v5547 = vadd.f32 %v5545, %v5546
        %v5548 = vsel %vm1107, %v5535, 0.0
        %v5549 = vadd.f32 %v5547, %v5548
        %v5550 = vsel %vm1107, %v5536, 0.0
        %v5551 = vadd.f32 %v5549, %v5550
        %v5552 = vrot.slane %v5551, 4
        %v5553 = vadd.f32 %v5551, %v5552
        %v5554 = vrot.slane %v5553, 2
        %v5555 = vadd.f32 %v5553, %v5554
        %v5556 = vrot.slane %v5555, 1
        %v5557 = vadd.f32 %v5555, %v5556
        %v5558 = vmul.f32 %v5557, 0.02
        %v5559 = vld [vmem:[%s16] sm:$0xff]
        %v5560 = vld [vmem:[%s16 + $0x8] sm:$0xff]
        %v5561 = vld [vmem:[%s16 + $0x10] sm:$0xff]
        %v5562 = vld [vmem:[%s16 + $0x18] sm:$0xff]
        %v5563 = vld [vmem:[%s16 + $0x20] sm:$0xff]
        %v5564 = vld [vmem:[%s16 + $0x28] sm:$0xff]
        %v5565 = vld [vmem:[%s16 + $0x30] sm:$0xff]
        %v5566 = vld [vmem:[%s16 + $0x38] sm:$0xff]
        %v5567 = vld [vmem:[%s17] sm:$0x1]
        %v5569 = vsel %vm1107, %v5558, 0
        %5571 = vmatprep.subr.mxu0 0.0
        %5572 = vmatpush1.msra.mxu0 %v5559
        %5573 = vmatprep.subr.mxu0 0.0
        %5574 = vmatpush1.msra.mxu0 %v5560
        %5575 = vmatprep.subr.mxu0 0.0
        %5576 = vmatpush1.msra.mxu0 %v5561
        %5577 = vmatprep.subr.mxu0 0.0
        %5578 = vmatpush1.msra.mxu0 %v5562
        %5579 = vmatprep.subr.mxu0 0.0
        %5580 = vmatpush1.msra.mxu0 %v5563
        %5581 = vmatprep.subr.mxu0 0.0
        %5582 = vmatpush1.msra.mxu0 %v5564
        %5583 = vmatprep.subr.mxu0 0.0
        %5584 = vmatpush1.msra.mxu0 %v5565
        %5585 = vmatprep.subr.mxu0 0.0
        %5586 = vmatpush1.msra.mxu0 %v5566
        %5587 = vmatprep.subr.mxu0 0.0
        %5588 = vmatpush1.msra.mxu0 0.0
        %5589 = vmatprep.subr.mxu0 0.0
        %5590 = vmatpush1.msra.mxu0 0.0
        %5591 = vmatprep.subr.mxu0 0.0
        %5592 = vmatpush1.msra.mxu0 0.0
        %5593 = vmatprep.subr.mxu0 0.0
        %5594 = vmatpush1.msra.mxu0 0.0
        %5595 = vmatprep.subr.mxu0 0.0
        %5596 = vmatpush1.msra.mxu0 0.0
        %5597 = vmatprep.subr.mxu0 0.0
        %5598 = vmatpush1.msra.mxu0 0.0
        %5599 = vmatprep.subr.mxu0 0.0
        %5600 = vmatpush1.msra.mxu0 0.0
        %5601 = vmatprep.subr.mxu0 0.0
        %5602 = vmatpush1.msra.mxu0 0.0
        %5603 = vmatprep.subr.mxu0 0.0
        %5604 = vmatpush1.msra.mxu0 0.0
        %5605 = vmatprep.subr.mxu0 0.0
        %5606 = vmatpush1.msra.mxu0 0.0
        %5607 = vmatprep.subr.mxu0 0.0
        %5608 = vmatpush1.msra.mxu0 0.0
        %5609 = vmatprep.subr.mxu0 0.0
        %5610 = vmatpush1.msra.mxu0 0.0
        %5611 = vmatprep.subr.mxu0 0.0
        %5612 = vmatpush1.msra.mxu0 0.0
        %5613 = vmatprep.subr.mxu0 0.0
        %5614 = vmatpush1.msra.mxu0 0.0
        %5615 = vmatprep.subr.mxu0 0.0
        %5616 = vmatpush1.msra.mxu0 0.0
        %5617 = vmatprep.subr.mxu0 0.0
        %5618 = vmatpush1.msra.mxu0 0.0
        %5619 = vmatprep.subr.mxu0 0.0
        %5620 = vmatpush1.msra.mxu0 0.0
        %5621 = vmatprep.subr.mxu0 0.0
        %5622 = vmatpush1.msra.mxu0 0.0
        %5623 = vmatprep.subr.mxu0 0.0
        %5624 = vmatpush1.msra.mxu0 0.0
        %5625 = vmatprep.subr.mxu0 0.0
        %5626 = vmatpush1.msra.mxu0 0.0
        %5627 = vmatprep.subr.mxu0 0.0
        %5628 = vmatpush1.msra.mxu0 0.0
        %5629 = vmatprep.subr.mxu0 0.0
        %5630 = vmatpush1.msra.mxu0 0.0
        %5631 = vmatprep.subr.mxu0 0.0
        %5632 = vmatpush1.msra.mxu0 0.0
        %5633 = vmatprep.subr.mxu0 0.0
        %5634 = vmatpush1.msra.mxu0 0.0
        %5635 = vmatprep.mubr.f32.mxu0 0.0
        %5636 = vmatmul.mubr.f32.gmra.mrb[0].mxu0 %v5569
        %v5637 = vpop.f32.mrb[0].mxu0
        %v5638 = vadd.f32 %v5567, %v5637
        %v5639 = vpop.f32.mrb[0].mxu0
        %5640 = vdwg.mxu0
        %v5641 = vmax.f32 %v5638, 0.0
        %v5642 = vld [vmem:[%s18] sm:$0xff]
        %v5643 = vld [vmem:[%s18 + $0x8] sm:$0xff]
        %v5644 = vld [vmem:[#allocation3] sm:$0x1]
        %vm5645 = vcmask 130048
        %v5647 = vsel %vm5645, %v5641, 0
        %5649 = vmatprep.subr.mxu0 0.0
        %5650 = vmatpush1.msra.mxu0 %v5642
        %5651 = vmatprep.subr.mxu0 0.0
        %5652 = vmatpush1.msra.mxu0 %v5643
        %5653 = vmatprep.subr.mxu0 0.0
        %5654 = vmatpush1.msra.mxu0 0.0
        %5655 = vmatprep.subr.mxu0 0.0
        %5656 = vmatpush1.msra.mxu0 0.0
        %5657 = vmatprep.subr.mxu0 0.0
        %5658 = vmatpush1.msra.mxu0 0.0
        %5659 = vmatprep.subr.mxu0 0.0
        %5660 = vmatpush1.msra.mxu0 0.0
        %5661 = vmatprep.subr.mxu0 0.0
        %5662 = vmatpush1.msra.mxu0 0.0
        %5663 = vmatprep.subr.mxu0 0.0
        %5664 = vmatpush1.msra.mxu0 0.0
        %5665 = vmatprep.subr.mxu0 0.0
        %5666 = vmatpush1.msra.mxu0 0.0
        %5667 = vmatprep.subr.mxu0 0.0
        %5668 = vmatpush1.msra.mxu0 0.0
        %5669 = vmatprep.subr.mxu0 0.0
        %5670 = vmatpush1.msra.mxu0 0.0
        %5671 = vmatprep.subr.mxu0 0.0
        %5672 = vmatpush1.msra.mxu0 0.0
        %5673 = vmatprep.subr.mxu0 0.0
        %5674 = vmatpush1.msra.mxu0 0.0
        %5675 = vmatprep.subr.mxu0 0.0
        %5676 = vmatpush1.msra.mxu0 0.0
        %5677 = vmatprep.subr.mxu0 0.0
        %5678 = vmatpush1.msra.mxu0 0.0
        %5679 = vmatprep.subr.mxu0 0.0
        %5680 = vmatpush1.msra.mxu0 0.0
        %5681 = vmatprep.subr.mxu0 0.0
        %5682 = vmatpush1.msra.mxu0 0.0
        %5683 = vmatprep.subr.mxu0 0.0
        %5684 = vmatpush1.msra.mxu0 0.0
        %5685 = vmatprep.subr.mxu0 0.0
        %5686 = vmatpush1.msra.mxu0 0.0
        %5687 = vmatprep.subr.mxu0 0.0
        %5688 = vmatpush1.msra.mxu0 0.0
        %5689 = vmatprep.subr.mxu0 0.0
        %5690 = vmatpush1.msra.mxu0 0.0
        %5691 = vmatprep.subr.mxu0 0.0
        %5692 = vmatpush1.msra.mxu0 0.0
        %5693 = vmatprep.subr.mxu0 0.0
        %5694 = vmatpush1.msra.mxu0 0.0
        %5695 = vmatprep.subr.mxu0 0.0
        %5696 = vmatpush1.msra.mxu0 0.0
        %5697 = vmatprep.subr.mxu0 0.0
        %5698 = vmatpush1.msra.mxu0 0.0
        %5699 = vmatprep.subr.mxu0 0.0
        %5700 = vmatpush1.msra.mxu0 0.0
        %5701 = vmatprep.subr.mxu0 0.0
        %5702 = vmatpush1.msra.mxu0 0.0
        %5703 = vmatprep.subr.mxu0 0.0
        %5704 = vmatpush1.msra.mxu0 0.0
        %5705 = vmatprep.subr.mxu0 0.0
        %5706 = vmatpush1.msra.mxu0 0.0
        %5707 = vmatprep.subr.mxu0 0.0
        %5708 = vmatpush1.msra.mxu0 0.0
        %5709 = vmatprep.subr.mxu0 0.0
        %5710 = vmatpush1.msra.mxu0 0.0
        %5711 = vmatprep.subr.mxu0 0.0
        %5712 = vmatpush1.msra.mxu0 0.0
        %5713 = vmatprep.mubr.f32.mxu0 0.0
        %5714 = vmatmul.mubr.f32.gmra.mrb[0].mxu0 %v5647
        %v5715 = vpop.f32.mrb[0].mxu0
        %v5716 = vadd.f32 %v5644, %v5715
        %v5717 = vpop.f32.mrb[0].mxu0
        %5718 = vdwg.mxu0
        %v5719 = vxor.u32 %v5716, 2147483648
        %v5720 = vmul.f32 %v5719, 1.442695
        %v5721 = vpow.pop %v5720
        %v5722 = vadd.f32 %v5721, 1.0
        %v5723 = vrcp.pop %v5722
        %v5724 = vmul.f32 1.0, %v5723
        %vm5725 = vcmask 0
        %5726 = vst.msk [vmem:[%s898] sm:$0x1] %vm5725, %v5724
      $region108: #{cbvit_forward.1} parent=99 // pred_fallthru
        _
      %p5727 = scmp.lt.s32.totalorder %s39, 1
      %s5728 = scalar_select %p5727, %s39, 1
      %s5729 = scalar_lea.vmem %s20, %s5728
      %p5730 = scmp.lt.s32.totalorder %s39, 1
      %s5731 = scalar_select %p5730, %s39, 1
      %p5732 = scmp.lt.s32.totalorder %s40, 5
      %s5733 = scalar_select %p5732, %s40, 5
      %s5734 = smul.addr %s5733, 32
      %s5735 = smul.addr %s5731, 192
      %s5736 = sadd.s32 %s5734, %s5735
      %s5737 = smul.addr %s5736, 4
      %s5738 = scalar_lea.vmem %s21, %s5737
      // Predicated region
      $region109: #{cbvit_forward.1} parent=99 // pred_check
        %p5739 = pneg %p555
      $region110: #{cbvit_forward.1} parent=99 // pred_check_branch
        %5741 = sbr.rel (%p5739) target = $region112
      $region111: #{cbvit_forward.1} parent=99 // pred_region
        _
      $region112: #{cbvit_forward.1} parent=99 // pred_fallthru
        _
      // Predicated region
      $region113: #{cbvit_forward.1} parent=99 // pred_check
        %p5742 = pneg %p583
      $region114: #{cbvit_forward.1} parent=99 // pred_check_branch
        %5744 = sbr.rel (%p5742) target = $region116
      $region115: #{cbvit_forward.1} parent=99 // pred_region
        _
      $region116: #{cbvit_forward.1} parent=99 // pred_fallthru
        _
    $region100: #{cbvit_forward.1} parent=5 // pred_fallthru
      _
    %p5745 = scmp.le.s32.totalorder 2, %s30
    // Predicated region
    $region117: #{cbvit_forward.1} parent=5 // pred_check
      %p5746 = pneg %p5745
    $region118: #{cbvit_forward.1} parent=5 // pred_check_branch
      %5748 = sbr.rel (%p5746) target = $region120
    $region119: #{cbvit_forward.1} parent=5 // pred_region
      %s5749 = ssub.s32 %s30, 2
      // Predicated region
      $region121: #{cbvit_forward.1} parent=119 // pred_check
        %p5750 = pneg %p561
      $region122: #{cbvit_forward.1} parent=119 // pred_check_branch
        %5752 = sbr.rel (%p5750) target = $region124
      $region123: #{cbvit_forward.1} parent=119 // pred_region
        %p5753 = scmp.lt.s32.totalorder %s41, 1
        %s5754 = scalar_select %p5753, %s41, 1
        %s5755 = scalar_lea.vmem %s20, %s5754
      $region124: #{cbvit_forward.1} parent=119 // pred_fallthru
        _
      // Predicated region
      $region125: #{cbvit_forward.1} parent=119 // pred_check
        %p5756 = pneg %p589
      $region126: #{cbvit_forward.1} parent=119 // pred_check_branch
        %5758 = sbr.rel (%p5756) target = $region128
      $region127: #{cbvit_forward.1} parent=119 // pred_region
        %p5759 = scmp.lt.s32.totalorder %s41, 1
        %s5760 = scalar_select %p5759, %s41, 1
        %p5761 = scmp.lt.s32.totalorder %s42, 5
        %s5762 = scalar_select %p5761, %s42, 5
        %s5763 = smul.addr %s5762, 32
        %s5764 = smul.addr %s5760, 192
        %s5765 = sadd.s32 %s5763, %s5764
        %s5766 = smul.addr %s5765, 4
        %s5767 = scalar_lea.vmem %s21, %s5766
      $region128: #{cbvit_forward.1} parent=119 // pred_fallthru
        _
    $region120: #{cbvit_forward.1} parent=5 // pred_fallthru
      _
  $region6: #{cbvit_forward.1} parent=0 // loop_footer
    %s34 = sadd.s32 1, %s30
  $region7: #{cbvit_forward.1} parent=0 // loop_footer_branch
    %29 = sbr.rel target = $region3
  $region8: #{cbvit_forward.1} parent=0 // loop_exit
    _

</llo_original>
